<compile_context>
chip_gen: v7x
topology: tpu7x:2x2x1
jax: 0.10.0
libtpu: 0.0.40
codegen_flags: <defaults>
</compile_context>

<pallas_src>
import functools
import math

import jax
import jax.numpy as jnp
from jax.experimental import pallas as pl
from jax.experimental.pallas import tpu as pltpu

EPS = 1e-5
G = 2                      # nn.GroupNorm(2, channels)
KH, KW = 3, 3              # kernel_size=(3, 3)

# NetConfig
PLAQ_IN, RECT_IN = 2, 4
PLAQ_OUT, RECT_OUT = 4, 8
HIDDEN = 14
ATT_HIDDEN = max(2, HIDDEN // 4)        # 3

CIN = PLAQ_IN + RECT_IN                 # 6
COUT = PLAQ_OUT + RECT_OUT              # 12
CH = HIDDEN                             # 14
CA = ATT_HIDDEN                         # 3

# sublane-padded channel counts
CIN_P = 8
CH_P = 16
COUT_P = 16
PVEC_W = 18                             # packed bias/gamma/beta slab width

_GELU_C = math.sqrt(2.0 / math.pi)


# ----------------------------------------------------------------------------
# fused LocalStableNet kernel (B images per grid step, lane-concatenated)
# ----------------------------------------------------------------------------
def _local_stable_net_kernel(x_ref, seg_ref, w_in_ref, w_rb_ref, w_sm_ref,
                             pvec_ref, scal_ref, o_ref, *, H, W, B):
    L = H * W
    BL = B * L
    C = CH_P

    # ---- hoisted constants / masks (shared by all 5 convs + 5 GroupNorms) ---
    lane = jax.lax.broadcasted_iota(jnp.int32, (1, BL), 1)
    pos_w = lane % W                     # column within a row
    pos_l = lane % L                     # position within one image
    m_col_p = pos_w < (W - 1)            # wrap-fix mask, dw = +1 (s = W-1)
    m_col_m = pos_w < 1                  # wrap-fix mask, dw = -1 (s = 1)
    m_row_p = pos_l < (L - W)            # wrap-fix mask, dh = +1 (s = L-W)
    m_row_m = pos_l < W                  # wrap-fix mask, dh = -1 (s = W)
    row = jax.lax.broadcasted_iota(jnp.int32, (C, 1), 0)
    g0 = row < (CH // 2)                 # first group = real channels 0..6
    if B > 1:
        img = lane // L
        seg_masks = [img == b for b in range(B)]

    seg_mat = seg_ref[...]               # (BL, B) f32 one-hot segment matrix
    pvec = pvec_ref[...]                 # (16, 18) packed per-channel vectors
    inv_n = 1.0 / float((CH // 2) * L)   # GroupNorm count: 7 real ch * L
    inv_L = 1.0 / float(L)

    def gam(i):
        return pvec[:, i:i + 1]

    def bet(i):
        return pvec[:, 5 + i:6 + i]

    def cbias(i):
        return pvec[:, 10 + i:11 + i]

    def sigmoid(v):                      # EUP tanh, no divide
        return 0.5 * (jnp.tanh(0.5 * v) + 1.0)

    def silu(v):
        return v * sigmoid(v)

    def gelu(v):
        # TODO(synk): PyTorch F.gelu defaults to exact erf; tanh approximation
        # (<=5e-4 abs deviation) keeps everything on guaranteed EUP ops.
        return 0.5 * v * (1.0 + jnp.tanh(_GELU_C * (v + 0.044715 * v * v * v)))

    def expand(m):
        """(C, B) per-image values -> (C, B*L) lane slab (broadcast when B=1)."""
        if B == 1:
            return m
        res = jnp.where(seg_masks[0], m[:, 0:1], 0.0)
        for b in range(1, B):
            res = jnp.where(seg_masks[b], m[:, b:b + 1], res)
        return res

    def roll_seg(v, s, period, mask):
        """Circular roll by s within each `period`-lane segment of the lane axis."""
        total = v.shape[-1]
        main = pltpu.roll(v, s, axis=1)
        if period == total:
            return main
        alt = pltpu.roll(v, (s - period) % total, axis=1)
        return jnp.where(mask, alt, main)

    def conv3x3(v, w, bias, tap_dtype):
        """Circular 'same' 3x3 conv: 9 rolled taps -> one MXU matmul.

        v: (Cin, BL) f32; w: (16, 9*Cin); bias: (16, 1) f32.
        """
        cols = {
            0: v,
            1: roll_seg(v, W - 1, W, m_col_p),     # dw = +1
            -1: roll_seg(v, 1, W, m_col_m),        # dw = -1
        }
        taps = []
        for dh in (-1, 0, 1):                      # kh = dh + 1
            for dw in (-1, 0, 1):                  # kw = dw + 1
                t = cols[dw]
                if dh == 1:
                    t = roll_seg(t, L - W, L, m_row_p)
                elif dh == -1:
                    t = roll_seg(t, W, L, m_row_m)
                taps.append(t.astype(tap_dtype))
        stacked = jnp.concatenate(taps, axis=0)    # (9*Cin, BL), tap-aligned
        return jnp.dot(w, stacked, preferred_element_type=jnp.float32) + bias

    def group_norm(v, gamma, beta):
        """GroupNorm(2, 14): per-image, per-group stats via one segmented matmul."""
        both = jnp.concatenate([v, v * v], axis=0)                       # (32, BL)
        sums = jnp.dot(both, seg_mat, preferred_element_type=jnp.float32)  # (32, B)
        rs, rq = sums[:C], sums[C:]
        s0 = jnp.sum(jnp.where(g0, rs, 0.0), axis=0, keepdims=True)      # (1, B)
        q0 = jnp.sum(jnp.where(g0, rq, 0.0), axis=0, keepdims=True)
        s1 = jnp.sum(rs, axis=0, keepdims=True) - s0   # pad rows are exactly 0
        q1 = jnp.sum(rq, axis=0, keepdims=True) - q0
        m0, m1 = s0 * inv_n, s1 * inv_n
        r0 = jax.lax.rsqrt(jnp.maximum(q0 * inv_n - m0 * m0, 0.0) + EPS)
        r1 = jax.lax.rsqrt(jnp.maximum(q1 * inv_n - m1 * m1, 0.0) + EPS)
        mean = jnp.where(g0, m0, m1)                                     # (C, B)
        rstd = jnp.where(g0, r0, r1)                                     # (C, B)
        a = rstd * gamma                   # (C, B)  (gamma pad rows = 0)
        b = beta - mean * a                # (C, B)
        return v * expand(a) + expand(b)

    def res_inner(v, wi, gi):
        out = group_norm(v, gam(gi), bet(gi))
        out = silu(out)
        out = conv3x3(out, w_rb_ref[wi], cbias(wi + 1), jnp.bfloat16)
        out = group_norm(out, gam(gi + 1), bet(gi + 1))
        out = silu(out)
        out = conv3x3(out, w_rb_ref[wi + 1], cbias(wi + 2), jnp.bfloat16)
        return out

    # ---- stem: circular conv -> GroupNorm -> GELU ---------------------------
    x = conv3x3(x_ref[...], w_in_ref[...], cbias(0), jnp.float32)   # (16, BL)
    x = group_norm(x, gam(0), bet(0))
    x = gelu(x)

    # ---- residual blocks:  x = (x + alpha * inner) * 0.3 + x ---------------
    inner = res_inner(x, 0, 1)
    x = (x + scal_ref[0, 0] * inner) * 0.3 + x
    inner = res_inner(x, 2, 3)
    x = (x + scal_ref[1, 0] * inner) * 0.3 + x

    # ---- channel attention (per image: pool first, tiny FC matmuls) --------
    pooled = jnp.dot(x, seg_mat, preferred_element_type=jnp.float32) * inv_L  # (16, B)
    w_out = w_sm_ref[0]
    w_a1 = w_sm_ref[1]
    w_a2 = w_sm_ref[2]
    h = jnp.maximum(
        jnp.dot(w_a1, pooled, preferred_element_type=jnp.float32) + pvec[:, 16:17],
        0.0)                                                                   # (16, B)
    att = sigmoid(
        jnp.dot(w_a2, h, preferred_element_type=jnp.float32) + pvec[:, 17:18])  # (16, B)
    x = x * expand(att)

    # ---- 1x1 output conv -> tanh * output_scale -----------------------------
    y = jnp.dot(w_out, x, preferred_element_type=jnp.float32) + pvec[:, 15:16]
    o_ref[...] = jnp.tanh(y) * scal_ref[2, 0]


# ----------------------------------------------------------------------------
# host-side wrapper
# ----------------------------------------------------------------------------
def _pick_batch_block(n):
    """Images per grid step: amortize per-step overhead, keep >= 2 grid steps."""
    for b in (8, 4, 2):
        if n % b == 0 and n // b >= 2:
            return b
    return 1


def local_stable_net(plaq, rect, params):
    N, _, H, W = plaq.shape
    L = H * W
    B = _pick_batch_block(N)
    BL = B * L

    f32 = lambda a: jnp.asarray(a, jnp.float32)

    # activations: (N, 6, H, W) -> zero-pad channels to 8 -> (8, N*L), image-major lanes
    x = jnp.concatenate([plaq, rect], axis=1).astype(jnp.float32)
    x = jnp.pad(x, ((0, 0), (0, CIN_P - CIN), (0, 0), (0, 0)))
    x = x.reshape(N, CIN_P, L).transpose(1, 0, 2).reshape(CIN_P, N * L)

    # conv weights: pad (cout, cin) then flatten taps in (kh, kw, ci) order
    def cat_taps(w, cout_p, cin_p):
        w = f32(w)
        co, ci, kh, kw = w.shape
        wp = jnp.zeros((cout_p, cin_p, kh, kw), jnp.float32).at[:co, :ci].set(w)
        return jnp.transpose(wp, (0, 2, 3, 1)).reshape(cout_p, kh * kw * cin_p)

    w_in = cat_taps(params["w_in"], CH_P, CIN_P)                         # (16, 72) f32
    w_rb = jnp.stack([cat_taps(params[k], CH_P, CH_P) for k in
                      ("rb1_w1", "rb1_w2", "rb2_w1", "rb2_w2")]
                     ).astype(jnp.bfloat16)                              # (4, 16, 144)

    def padm(w):
        w = f32(w).reshape(w.shape[0], w.shape[1])
        return jnp.zeros((CH_P, CH_P), jnp.float32).at[:w.shape[0], :w.shape[1]].set(w)

    w_small = jnp.stack([padm(params["w_out"]),
                         padm(params["w_a1"]),
                         padm(params["w_a2"])])                          # (3, 16, 16)

    def padv(v):
        v = f32(v).reshape(-1)
        return jnp.zeros((CH_P,), jnp.float32).at[:v.shape[0]].set(v)

    cols = ([padv(params[k]) for k in
             ("gn_g_in", "rb1_g1", "rb1_g2", "rb2_g1", "rb2_g2")] +      # 0..4  gamma
            [padv(params[k]) for k in
             ("gn_b_in", "rb1_be1", "rb1_be2", "rb2_be1", "rb2_be2")] +  # 5..9  beta
            [padv(params[k]) for k in
             ("b_in", "rb1_b1", "rb1_b2", "rb2_b1", "rb2_b2")] +         # 10..14 conv b
            [padv(params["b_out"]),                                      # 15
             padv(params["b_a1"]),                                       # 16
             padv(params["b_a2"])])                                      # 17
    pvec = jnp.stack(cols, axis=1)                                       # (16, 18)

    scalars = jnp.array([params["alpha1"], params["alpha2"], params["out_scale"]],
                        jnp.float32).reshape(3, 1)

    # (BL, B) one-hot segment matrix for per-image sums / pooling
    seg = (jnp.arange(BL)[:, None] // L == jnp.arange(B)[None, :]).astype(jnp.float32)

    kernel = functools.partial(_local_stable_net_kernel, H=H, W=W, B=B)
    c2 = lambda n: (0, 0)
    c3 = lambda n: (0, 0, 0)

    out = pl.pallas_call(
        kernel,
        out_shape=jax.ShapeDtypeStruct((COUT_P, N * L), jnp.float32),
        grid_spec=pltpu.PrefetchScalarGridSpec(
            num_scalar_prefetch=0,
            grid=(N // B,),
            in_specs=[
                pl.BlockSpec((CIN_P, BL), lambda n: (0, n)),          # activations
                pl.BlockSpec((BL, B), c2),                            # segment matrix
                pl.BlockSpec((CH_P, KH * KW * CIN_P), c2),            # input conv W
                pl.BlockSpec((4, CH_P, KH * KW * CH_P), c3),          # res conv Ws (bf16)
                pl.BlockSpec((3, CH_P, CH_P), c3),                    # w_out/w_a1/w_a2
                pl.BlockSpec((CH_P, PVEC_W), c2),                     # gamma/beta/bias slab
                pl.BlockSpec(memory_space=pltpu.MemorySpace.SMEM),    # [a1, a2, out_scale]
            ],
            out_specs=pl.BlockSpec((COUT_P, BL), lambda n: (0, n)),
        ),
        compiler_params=pltpu.CompilerParams(
            dimension_semantics=("parallel",)),
    )(x, seg, w_in, w_rb, w_small, pvec, scalars)

    out = out.reshape(COUT_P, N, H, W).transpose(1, 0, 2, 3)
    return out[:, :PLAQ_OUT], out[:, PLAQ_OUT:COUT]


# ----------------------------------------------------------------------------
# parameters + pure-JAX reference
# ----------------------------------------------------------------------------
def init_params(key):
    Cin = PLAQ_IN + RECT_IN
    Ch = HIDDEN
    Ca = ATT_HIDDEN
    Cout = PLAQ_OUT + RECT_OUT
    keys = iter(jax.random.split(key, 32))

    def xavier(k, shape, gain=0.8):
        rf = shape[2] * shape[3]
        fan_in, fan_out = shape[1] * rf, shape[0] * rf
        std = gain * math.sqrt(2.0 / (fan_in + fan_out))
        return std * jax.random.normal(k, shape, jnp.float32)

    def small(k, shape, std=0.05):
        return std * jax.random.normal(k, shape, jnp.float32)

    p = dict(
        w_in=xavier(next(keys), (Ch, Cin, KH, KW)),
        b_in=small(next(keys), (Ch,)),
        gn_g_in=1.0 + small(next(keys), (Ch,)),
        gn_b_in=small(next(keys), (Ch,)),
        w_a1=xavier(next(keys), (Ca, Ch, 1, 1)),
        b_a1=small(next(keys), (Ca,)),
        w_a2=xavier(next(keys), (Ch, Ca, 1, 1)),
        b_a2=small(next(keys), (Ch,)),
        w_out=0.01 * jax.random.normal(next(keys), (Cout, Ch, 1, 1), jnp.float32),
        b_out=small(next(keys), (Cout,), std=0.01),
        alpha1=jnp.float32(0.3),
        alpha2=jnp.float32(0.3),
        out_scale=jnp.float32(0.05),
    )
    for rb in ("rb1", "rb2"):
        p[f"{rb}_g1"] = 1.0 + small(next(keys), (Ch,))
        p[f"{rb}_be1"] = small(next(keys), (Ch,))
        p[f"{rb}_w1"] = xavier(next(keys), (Ch, Ch, KH, KW))
        p[f"{rb}_b1"] = small(next(keys), (Ch,))
        p[f"{rb}_g2"] = 1.0 + small(next(keys), (Ch,))
        p[f"{rb}_be2"] = small(next(keys), (Ch,))
        p[f"{rb}_w2"] = xavier(next(keys), (Ch, Ch, KH, KW))
        p[f"{rb}_b2"] = small(next(keys), (Ch,))
    return p


def local_stable_net_reference(plaq, rect, p):
    """Pure-JAX reference mirroring the PyTorch LocalStableNet forward."""
    x = jnp.concatenate([plaq, rect], axis=1)

    def conv3(v, w, b):
        vp = jnp.pad(v, ((0, 0), (0, 0), (1, 1), (1, 1)), mode="wrap")
        y = jax.lax.conv_general_dilated(
            vp, w, (1, 1), "VALID",
            dimension_numbers=("NCHW", "OIHW", "NCHW"),
            precision=jax.lax.Precision.HIGHEST)
        return y + b.reshape(1, -1, 1, 1)

    def gn(v, gamma, beta):
        n, c, h, w = v.shape
        vg = v.reshape(n, G, c // G, h, w)
        m = vg.mean(axis=(2, 3, 4), keepdims=True)
        var = ((vg - m) ** 2).mean(axis=(2, 3, 4), keepdims=True)
        vn = ((vg - m) * jax.lax.rsqrt(var + EPS)).reshape(n, c, h, w)
        return vn * gamma.reshape(1, c, 1, 1) + beta.reshape(1, c, 1, 1)

    def silu(v):
        return v * jax.nn.sigmoid(v)

    def gelu(v):  # exact erf form (torch F.gelu default)
        return 0.5 * v * (1.0 + jax.lax.erf(v / math.sqrt(2.0)))

    def conv1x1(v, w, b):
        w2 = w.reshape(w.shape[0], w.shape[1])
        return jnp.einsum("oc,nchw->nohw", w2, v) + b.reshape(1, -1, 1, 1)

    def res_block(v, pre, alpha):
        out = gn(v, p[f"{pre}_g1"], p[f"{pre}_be1"])
        out = silu(out)
        out = conv3(out, p[f"{pre}_w1"], p[f"{pre}_b1"])
        out = gn(out, p[f"{pre}_g2"], p[f"{pre}_be2"])
        out = silu(out)
        out = conv3(out, p[f"{pre}_w2"], p[f"{pre}_b2"])
        return v + alpha * out

    x = conv3(x, p["w_in"], p["b_in"])
    x = gn(x, p["gn_g_in"], p["gn_b_in"])
    x = gelu(x)
    x = res_block(x, "rb1", p["alpha1"]) * 0.3 + x
    x = res_block(x, "rb2", p["alpha2"]) * 0.3 + x
    pooled = x.mean(axis=(2, 3), keepdims=True)
    h = jnp.maximum(conv1x1(pooled, p["w_a1"], p["b_a1"]), 0.0)
    att = jax.nn.sigmoid(conv1x1(h, p["w_a2"], p["b_a2"]))
    x = x * att
    y = conv1x1(x, p["w_out"], p["b_out"])
    y = jnp.tanh(y) * p["out_scale"]
    return y[:, :PLAQ_OUT], y[:, PLAQ_OUT:]


if __name__ == "__main__":
    key = jax.random.PRNGKey(0)
    kp, kd = jax.random.split(key)
    params = init_params(kp)

    H, W = 16, 16
    # N=2 exercises the B=1 path (grid of 2 for both TCs);
    # N=8 exercises the batched path (B=4 images per grid step).
    for N in (2, 8):
        k1, k2 = jax.random.split(jax.random.fold_in(kd, N))
        plaq = jax.random.normal(k1, (N, PLAQ_IN, H, W), jnp.float32)
        rect = jax.random.normal(k2, (N, RECT_IN, H, W), jnp.float32)

        plaq_out, rect_out = jax.block_until_ready(
            local_stable_net(plaq, rect, params))
        plaq_ref, rect_ref = jax.block_until_ready(
            local_stable_net_reference(plaq, rect, params))

        dp = float(jnp.max(jnp.abs(plaq_out - plaq_ref)))
        dr = float(jnp.max(jnp.abs(rect_out - rect_ref)))
        assert dp < 1e-2 and dr < 1e-2, f"N={N}: max diff plaq={dp} rect={dr}"

    print("KERNEL_OK")
</pallas_src>

<mosaic_0001>
module attributes {stable_mosaic.version = 11 : i64} {
  func.func @_local_stable_net_kernel(%arg0: i32, %arg1: memref<8x256xf32, #tpu.memory_space<vmem>>, %arg2: memref<256x1xf32, #tpu.memory_space<vmem>>, %arg3: memref<16x72xf32, #tpu.memory_space<vmem>>, %arg4: memref<4x16x144xbf16, #tpu.memory_space<vmem>>, %arg5: memref<3x16x16xf32, #tpu.memory_space<vmem>>, %arg6: memref<16x18xf32, #tpu.memory_space<vmem>>, %arg7: memref<3x1xf32, #tpu.memory_space<smem>>, %arg8: memref<16x256xf32, #tpu.memory_space<vmem>>) attributes {dimension_semantics = [#tpu.dimension_semantics<parallel>], iteration_bounds = array<i64: 2>, scalar_prefetch = 0 : i64, scratch_operands = 0 : i64, tpu.core_type = #tpu.core_type<tc>, window_params = [{transform_indices = @transform_0, window_bounds = array<i64: 8, 256>}, {pipeline_mode = #tpu.pipeline_mode<synchronous>, transform_indices = @transform_1, window_bounds = array<i64: 256, 1>}, {pipeline_mode = #tpu.pipeline_mode<synchronous>, transform_indices = @transform_2, window_bounds = array<i64: 16, 72>}, {pipeline_mode = #tpu.pipeline_mode<synchronous>, transform_indices = @transform_3, window_bounds = array<i64: 4, 16, 144>}, {pipeline_mode = #tpu.pipeline_mode<synchronous>, transform_indices = @transform_4, window_bounds = array<i64: 3, 16, 16>}, {pipeline_mode = #tpu.pipeline_mode<synchronous>, transform_indices = @transform_5, window_bounds = array<i64: 16, 18>}, {transform_indices = @transform_6, window_bounds = array<i64: 3, 1>}, {transform_indices = @transform_7, window_bounds = array<i64: 16, 256>}]} {
    %0 = tpu.iota {dimensions = array<i32: 1>} : vector<1x256xi32>
    %c16_i32 = arith.constant 16 : i32
    %c0_i32 = arith.constant 0 : i32
    %1 = arith.cmpi eq, %c16_i32, %c0_i32 : i32
    %c1_i32 = arith.constant 1 : i32
    %2 = arith.select %1, %c1_i32, %c16_i32 : i32
    %3 = vector.broadcast %2 : i32 to vector<1x256xi32>
    %4 = arith.remsi %0, %3 : vector<1x256xi32>
    %c0_i32_0 = arith.constant 0 : i32
    %5 = vector.broadcast %c0_i32_0 : i32 to vector<1x256xi32>
    %6 = arith.cmpi ne, %4, %5 : vector<1x256xi32>
    %c0_i32_1 = arith.constant 0 : i32
    %7 = vector.broadcast %c0_i32_1 : i32 to vector<1x256xi32>
    %8 = arith.cmpi slt, %4, %7 : vector<1x256xi32>
    %c0_i32_2 = arith.constant 0 : i32
    %9 = arith.cmpi slt, %2, %c0_i32_2 : i32
    %10 = vector.broadcast %9 : i1 to vector<1x256xi1>
    %11 = vector.broadcast %10 : vector<1x256xi1> to vector<1x256xi1>
    %12 = arith.xori %8, %11 : vector<1x256xi1>
    %13 = arith.andi %12, %6 : vector<1x256xi1>
    %14 = vector.broadcast %2 : i32 to vector<1x256xi32>
    %15 = arith.addi %4, %14 : vector<1x256xi32>
    %16 = arith.select %13, %15, %4 : vector<1x256xi1>, vector<1x256xi32>
    %c15_i32 = arith.constant 15 : i32
    %17 = vector.broadcast %c15_i32 : i32 to vector<1x256xi32>
    %18 = arith.cmpi slt, %16, %17 : vector<1x256xi32>
    %c1_i32_3 = arith.constant 1 : i32
    %19 = vector.broadcast %c1_i32_3 : i32 to vector<1x256xi32>
    %20 = arith.cmpi slt, %16, %19 : vector<1x256xi32>
    %21 = tpu.iota {dimensions = array<i32: 0>} : vector<16x1xi32>
    %c7_i32 = arith.constant 7 : i32
    %22 = vector.broadcast %c7_i32 : i32 to vector<16x1xi32>
    %23 = arith.cmpi slt, %21, %22 : vector<16x1xi32>
    %c0 = arith.constant 0 : index
    %c0_4 = arith.constant 0 : index
    %24 = vector.load %arg2[%c0, %c0_4] : memref<256x1xf32, #tpu.memory_space<vmem>>, vector<256x1xf32>
    %c0_5 = arith.constant 0 : index
    %c0_6 = arith.constant 0 : index
    %25 = vector.load %arg6[%c0_5, %c0_6] : memref<16x18xf32, #tpu.memory_space<vmem>>, vector<16x18xf32>
    %c0_7 = arith.constant 0 : index
    %c0_8 = arith.constant 0 : index
    %26 = vector.load %arg1[%c0_7, %c0_8] : memref<8x256xf32, #tpu.memory_space<vmem>>, vector<8x256xf32>
    %c0_9 = arith.constant 0 : index
    %c0_10 = arith.constant 0 : index
    %27 = vector.load %arg3[%c0_9, %c0_10] : memref<16x72xf32, #tpu.memory_space<vmem>>, vector<16x72xf32>
    %28 = vector.extract_strided_slice %25 {offsets = [0, 10], sizes = [16, 1], strides = [1, 1]} : vector<16x18xf32> to vector<16x1xf32>
    %c15_i32_11 = arith.constant 15 : i32
    %29 = tpu.dynamic_rotate %26 by %c15_i32_11 dim 1 : vector<8x256xf32>, i32 -> vector<8x256xf32>
    %c255_i32 = arith.constant 255 : i32
    %30 = tpu.dynamic_rotate %26 by %c255_i32 dim 1 : vector<8x256xf32>, i32 -> vector<8x256xf32>
    %31 = vector.shape_cast %18 : vector<1x256xi1> to vector<1x256xi1>
    %32 = vector.broadcast %31 : vector<1x256xi1> to vector<8x256xi1>
    %33 = arith.select %32, %30, %29 : vector<8x256xi1>, vector<8x256xf32>
    %c1_i32_12 = arith.constant 1 : i32
    %34 = tpu.dynamic_rotate %26 by %c1_i32_12 dim 1 : vector<8x256xf32>, i32 -> vector<8x256xf32>
    %c241_i32 = arith.constant 241 : i32
    %35 = tpu.dynamic_rotate %26 by %c241_i32 dim 1 : vector<8x256xf32>, i32 -> vector<8x256xf32>
    %36 = vector.shape_cast %20 : vector<1x256xi1> to vector<1x256xi1>
    %37 = vector.broadcast %36 : vector<1x256xi1> to vector<8x256xi1>
    %38 = arith.select %37, %35, %34 : vector<8x256xi1>, vector<8x256xf32>
    %c16_i32_13 = arith.constant 16 : i32
    %39 = tpu.dynamic_rotate %38 by %c16_i32_13 dim 1 : vector<8x256xf32>, i32 -> vector<8x256xf32>
    %c16_i32_14 = arith.constant 16 : i32
    %40 = tpu.dynamic_rotate %26 by %c16_i32_14 dim 1 : vector<8x256xf32>, i32 -> vector<8x256xf32>
    %c16_i32_15 = arith.constant 16 : i32
    %41 = tpu.dynamic_rotate %33 by %c16_i32_15 dim 1 : vector<8x256xf32>, i32 -> vector<8x256xf32>
    %c240_i32 = arith.constant 240 : i32
    %42 = tpu.dynamic_rotate %38 by %c240_i32 dim 1 : vector<8x256xf32>, i32 -> vector<8x256xf32>
    %c240_i32_16 = arith.constant 240 : i32
    %43 = tpu.dynamic_rotate %26 by %c240_i32_16 dim 1 : vector<8x256xf32>, i32 -> vector<8x256xf32>
    %c240_i32_17 = arith.constant 240 : i32
    %44 = tpu.dynamic_rotate %33 by %c240_i32_17 dim 1 : vector<8x256xf32>, i32 -> vector<8x256xf32>
    %45 = tpu.concatenate %39, %40, %41, %38, %26, %33, %42, %43, %44 in 0 : vector<8x256xf32>, vector<8x256xf32>, vector<8x256xf32>, vector<8x256xf32>, vector<8x256xf32>, vector<8x256xf32>, vector<8x256xf32>, vector<8x256xf32>, vector<8x256xf32> -> vector<72x256xf32>
    %cst = arith.constant dense<0.000000e+00> : vector<16x256xf32>
    %46 = tpu.matmul %27, %45, %cst {dimension_numbers = #tpu.dot_dimension_numbers<[1], [0], [0], [1], [0, 0, 1, 1], [], []>} : vector<16x72xf32>, vector<72x256xf32>, vector<16x256xf32> -> vector<16x256xf32>
    %47 = vector.broadcast %28 : vector<16x1xf32> to vector<16x256xf32>
    %48 = arith.addf %46, %47 : vector<16x256xf32>
    %49 = vector.extract_strided_slice %25 {offsets = [0, 0], sizes = [16, 1], strides = [1, 1]} : vector<16x18xf32> to vector<16x1xf32>
    %50 = vector.extract_strided_slice %25 {offsets = [0, 5], sizes = [16, 1], strides = [1, 1]} : vector<16x18xf32> to vector<16x1xf32>
    %51 = arith.mulf %48, %48 : vector<16x256xf32>
    %52 = tpu.concatenate %48, %51 in 0 : vector<16x256xf32>, vector<16x256xf32> -> vector<32x256xf32>
    %cst_18 = arith.constant dense<0.000000e+00> : vector<32x1xf32>
    %53 = tpu.matmul %52, %24, %cst_18 {dimension_numbers = #tpu.dot_dimension_numbers<[1], [0], [0], [1], [0, 0, 1, 1], [], []>} : vector<32x256xf32>, vector<256x1xf32>, vector<32x1xf32> -> vector<32x1xf32>
    %54 = vector.extract_strided_slice %53 {offsets = [0, 0], sizes = [16, 1], strides = [1, 1]} : vector<32x1xf32> to vector<16x1xf32>
    %55 = vector.extract_strided_slice %53 {offsets = [16, 0], sizes = [16, 1], strides = [1, 1]} : vector<32x1xf32> to vector<16x1xf32>
    %cst_19 = arith.constant 0.000000e+00 : f32
    %56 = vector.broadcast %cst_19 : f32 to vector<16x1xf32>
    %57 = arith.select %23, %54, %56 : vector<16x1xi1>, vector<16x1xf32>
    %cst_20 = arith.constant dense<0.000000e+00> : vector<1xf32>
    %58 = vector.multi_reduction <add>, %57, %cst_20 [0] : vector<16x1xf32> to vector<1xf32>
    %59 = vector.shape_cast %58 : vector<1xf32> to vector<1x1xf32>
    %cst_21 = arith.constant 0.000000e+00 : f32
    %60 = vector.broadcast %cst_21 : f32 to vector<16x1xf32>
    %61 = arith.select %23, %55, %60 : vector<16x1xi1>, vector<16x1xf32>
    %cst_22 = arith.constant dense<0.000000e+00> : vector<1xf32>
    %62 = vector.multi_reduction <add>, %61, %cst_22 [0] : vector<16x1xf32> to vector<1xf32>
    %63 = vector.shape_cast %62 : vector<1xf32> to vector<1x1xf32>
    %cst_23 = arith.constant dense<0.000000e+00> : vector<1xf32>
    %64 = vector.multi_reduction <add>, %54, %cst_23 [0] : vector<16x1xf32> to vector<1xf32>
    %65 = vector.shape_cast %64 : vector<1xf32> to vector<1x1xf32>
    %66 = arith.subf %65, %59 : vector<1x1xf32>
    %cst_24 = arith.constant dense<0.000000e+00> : vector<1xf32>
    %67 = vector.multi_reduction <add>, %55, %cst_24 [0] : vector<16x1xf32> to vector<1xf32>
    %68 = vector.shape_cast %67 : vector<1xf32> to vector<1x1xf32>
    %69 = arith.subf %68, %63 : vector<1x1xf32>
    %cst_25 = arith.constant 5.58035739E-4 : f32
    %70 = vector.broadcast %cst_25 : f32 to vector<1x1xf32>
    %71 = arith.mulf %59, %70 : vector<1x1xf32>
    %cst_26 = arith.constant 5.58035739E-4 : f32
    %72 = vector.broadcast %cst_26 : f32 to vector<1x1xf32>
    %73 = arith.mulf %66, %72 : vector<1x1xf32>
    %cst_27 = arith.constant 5.58035739E-4 : f32
    %74 = vector.broadcast %cst_27 : f32 to vector<1x1xf32>
    %75 = arith.mulf %63, %74 : vector<1x1xf32>
    %76 = arith.mulf %71, %71 : vector<1x1xf32>
    %77 = arith.subf %75, %76 : vector<1x1xf32>
    %cst_28 = arith.constant 0.000000e+00 : f32
    %78 = vector.broadcast %cst_28 : f32 to vector<1x1xf32>
    %79 = arith.maximumf %77, %78 : vector<1x1xf32>
    %cst_29 = arith.constant 9.99999974E-6 : f32
    %80 = vector.broadcast %cst_29 : f32 to vector<1x1xf32>
    %81 = arith.addf %79, %80 : vector<1x1xf32>
    %82 = math.rsqrt %81 : vector<1x1xf32>
    %cst_30 = arith.constant 5.58035739E-4 : f32
    %83 = vector.broadcast %cst_30 : f32 to vector<1x1xf32>
    %84 = arith.mulf %69, %83 : vector<1x1xf32>
    %85 = arith.mulf %73, %73 : vector<1x1xf32>
    %86 = arith.subf %84, %85 : vector<1x1xf32>
    %cst_31 = arith.constant 0.000000e+00 : f32
    %87 = vector.broadcast %cst_31 : f32 to vector<1x1xf32>
    %88 = arith.maximumf %86, %87 : vector<1x1xf32>
    %cst_32 = arith.constant 9.99999974E-6 : f32
    %89 = vector.broadcast %cst_32 : f32 to vector<1x1xf32>
    %90 = arith.addf %88, %89 : vector<1x1xf32>
    %91 = math.rsqrt %90 : vector<1x1xf32>
    %92 = vector.shape_cast %71 : vector<1x1xf32> to vector<1x1xf32>
    %93 = vector.broadcast %92 : vector<1x1xf32> to vector<16x1xf32>
    %94 = vector.shape_cast %73 : vector<1x1xf32> to vector<1x1xf32>
    %95 = vector.broadcast %94 : vector<1x1xf32> to vector<16x1xf32>
    %96 = arith.select %23, %93, %95 : vector<16x1xi1>, vector<16x1xf32>
    %97 = vector.shape_cast %82 : vector<1x1xf32> to vector<1x1xf32>
    %98 = vector.broadcast %97 : vector<1x1xf32> to vector<16x1xf32>
    %99 = vector.shape_cast %91 : vector<1x1xf32> to vector<1x1xf32>
    %100 = vector.broadcast %99 : vector<1x1xf32> to vector<16x1xf32>
    %101 = arith.select %23, %98, %100 : vector<16x1xi1>, vector<16x1xf32>
    %102 = arith.mulf %101, %49 : vector<16x1xf32>
    %103 = arith.mulf %96, %102 : vector<16x1xf32>
    %104 = arith.subf %50, %103 : vector<16x1xf32>
    %105 = vector.broadcast %102 : vector<16x1xf32> to vector<16x256xf32>
    %106 = arith.mulf %48, %105 : vector<16x256xf32>
    %107 = vector.broadcast %104 : vector<16x1xf32> to vector<16x256xf32>
    %108 = arith.addf %106, %107 : vector<16x256xf32>
    %cst_33 = arith.constant 5.000000e-01 : f32
    %109 = vector.broadcast %cst_33 : f32 to vector<16x256xf32>
    %110 = arith.mulf %109, %108 : vector<16x256xf32>
    %cst_34 = arith.constant 4.471500e-02 : f32
    %111 = vector.broadcast %cst_34 : f32 to vector<16x256xf32>
    %112 = arith.mulf %111, %108 : vector<16x256xf32>
    %113 = arith.mulf %112, %108 : vector<16x256xf32>
    %114 = arith.mulf %113, %108 : vector<16x256xf32>
    %115 = arith.addf %108, %114 : vector<16x256xf32>
    %cst_35 = arith.constant 0.797884583 : f32
    %116 = vector.broadcast %cst_35 : f32 to vector<16x256xf32>
    %117 = arith.mulf %116, %115 : vector<16x256xf32>
    %118 = math.tanh %117 : vector<16x256xf32>
    %cst_36 = arith.constant 1.000000e+00 : f32
    %119 = vector.broadcast %cst_36 : f32 to vector<16x256xf32>
    %120 = arith.addf %119, %118 : vector<16x256xf32>
    %121 = arith.mulf %110, %120 : vector<16x256xf32>
    %122 = vector.extract_strided_slice %25 {offsets = [0, 1], sizes = [16, 1], strides = [1, 1]} : vector<16x18xf32> to vector<16x1xf32>
    %123 = vector.extract_strided_slice %25 {offsets = [0, 6], sizes = [16, 1], strides = [1, 1]} : vector<16x18xf32> to vector<16x1xf32>
    %124 = arith.mulf %121, %121 : vector<16x256xf32>
    %125 = tpu.concatenate %121, %124 in 0 : vector<16x256xf32>, vector<16x256xf32> -> vector<32x256xf32>
    %cst_37 = arith.constant dense<0.000000e+00> : vector<32x1xf32>
    %126 = tpu.matmul %125, %24, %cst_37 {dimension_numbers = #tpu.dot_dimension_numbers<[1], [0], [0], [1], [0, 0, 1, 1], [], []>} : vector<32x256xf32>, vector<256x1xf32>, vector<32x1xf32> -> vector<32x1xf32>
    %127 = vector.extract_strided_slice %126 {offsets = [0, 0], sizes = [16, 1], strides = [1, 1]} : vector<32x1xf32> to vector<16x1xf32>
    %128 = vector.extract_strided_slice %126 {offsets = [16, 0], sizes = [16, 1], strides = [1, 1]} : vector<32x1xf32> to vector<16x1xf32>
    %cst_38 = arith.constant 0.000000e+00 : f32
    %129 = vector.broadcast %cst_38 : f32 to vector<16x1xf32>
    %130 = arith.select %23, %127, %129 : vector<16x1xi1>, vector<16x1xf32>
    %cst_39 = arith.constant dense<0.000000e+00> : vector<1xf32>
    %131 = vector.multi_reduction <add>, %130, %cst_39 [0] : vector<16x1xf32> to vector<1xf32>
    %132 = vector.shape_cast %131 : vector<1xf32> to vector<1x1xf32>
    %cst_40 = arith.constant 0.000000e+00 : f32
    %133 = vector.broadcast %cst_40 : f32 to vector<16x1xf32>
    %134 = arith.select %23, %128, %133 : vector<16x1xi1>, vector<16x1xf32>
    %cst_41 = arith.constant dense<0.000000e+00> : vector<1xf32>
    %135 = vector.multi_reduction <add>, %134, %cst_41 [0] : vector<16x1xf32> to vector<1xf32>
    %136 = vector.shape_cast %135 : vector<1xf32> to vector<1x1xf32>
    %cst_42 = arith.constant dense<0.000000e+00> : vector<1xf32>
    %137 = vector.multi_reduction <add>, %127, %cst_42 [0] : vector<16x1xf32> to vector<1xf32>
    %138 = vector.shape_cast %137 : vector<1xf32> to vector<1x1xf32>
    %139 = arith.subf %138, %132 : vector<1x1xf32>
    %cst_43 = arith.constant dense<0.000000e+00> : vector<1xf32>
    %140 = vector.multi_reduction <add>, %128, %cst_43 [0] : vector<16x1xf32> to vector<1xf32>
    %141 = vector.shape_cast %140 : vector<1xf32> to vector<1x1xf32>
    %142 = arith.subf %141, %136 : vector<1x1xf32>
    %cst_44 = arith.constant 5.58035739E-4 : f32
    %143 = vector.broadcast %cst_44 : f32 to vector<1x1xf32>
    %144 = arith.mulf %132, %143 : vector<1x1xf32>
    %cst_45 = arith.constant 5.58035739E-4 : f32
    %145 = vector.broadcast %cst_45 : f32 to vector<1x1xf32>
    %146 = arith.mulf %139, %145 : vector<1x1xf32>
    %cst_46 = arith.constant 5.58035739E-4 : f32
    %147 = vector.broadcast %cst_46 : f32 to vector<1x1xf32>
    %148 = arith.mulf %136, %147 : vector<1x1xf32>
    %149 = arith.mulf %144, %144 : vector<1x1xf32>
    %150 = arith.subf %148, %149 : vector<1x1xf32>
    %cst_47 = arith.constant 0.000000e+00 : f32
    %151 = vector.broadcast %cst_47 : f32 to vector<1x1xf32>
    %152 = arith.maximumf %150, %151 : vector<1x1xf32>
    %cst_48 = arith.constant 9.99999974E-6 : f32
    %153 = vector.broadcast %cst_48 : f32 to vector<1x1xf32>
    %154 = arith.addf %152, %153 : vector<1x1xf32>
    %155 = math.rsqrt %154 : vector<1x1xf32>
    %cst_49 = arith.constant 5.58035739E-4 : f32
    %156 = vector.broadcast %cst_49 : f32 to vector<1x1xf32>
    %157 = arith.mulf %142, %156 : vector<1x1xf32>
    %158 = arith.mulf %146, %146 : vector<1x1xf32>
    %159 = arith.subf %157, %158 : vector<1x1xf32>
    %cst_50 = arith.constant 0.000000e+00 : f32
    %160 = vector.broadcast %cst_50 : f32 to vector<1x1xf32>
    %161 = arith.maximumf %159, %160 : vector<1x1xf32>
    %cst_51 = arith.constant 9.99999974E-6 : f32
    %162 = vector.broadcast %cst_51 : f32 to vector<1x1xf32>
    %163 = arith.addf %161, %162 : vector<1x1xf32>
    %164 = math.rsqrt %163 : vector<1x1xf32>
    %165 = vector.shape_cast %144 : vector<1x1xf32> to vector<1x1xf32>
    %166 = vector.broadcast %165 : vector<1x1xf32> to vector<16x1xf32>
    %167 = vector.shape_cast %146 : vector<1x1xf32> to vector<1x1xf32>
    %168 = vector.broadcast %167 : vector<1x1xf32> to vector<16x1xf32>
    %169 = arith.select %23, %166, %168 : vector<16x1xi1>, vector<16x1xf32>
    %170 = vector.shape_cast %155 : vector<1x1xf32> to vector<1x1xf32>
    %171 = vector.broadcast %170 : vector<1x1xf32> to vector<16x1xf32>
    %172 = vector.shape_cast %164 : vector<1x1xf32> to vector<1x1xf32>
    %173 = vector.broadcast %172 : vector<1x1xf32> to vector<16x1xf32>
    %174 = arith.select %23, %171, %173 : vector<16x1xi1>, vector<16x1xf32>
    %175 = arith.mulf %174, %122 : vector<16x1xf32>
    %176 = arith.mulf %169, %175 : vector<16x1xf32>
    %177 = arith.subf %123, %176 : vector<16x1xf32>
    %178 = vector.broadcast %175 : vector<16x1xf32> to vector<16x256xf32>
    %179 = arith.mulf %121, %178 : vector<16x256xf32>
    %180 = vector.broadcast %177 : vector<16x1xf32> to vector<16x256xf32>
    %181 = arith.addf %179, %180 : vector<16x256xf32>
    %cst_52 = arith.constant 5.000000e-01 : f32
    %182 = vector.broadcast %cst_52 : f32 to vector<16x256xf32>
    %183 = arith.mulf %182, %181 : vector<16x256xf32>
    %184 = math.tanh %183 : vector<16x256xf32>
    %cst_53 = arith.constant 1.000000e+00 : f32
    %185 = vector.broadcast %cst_53 : f32 to vector<16x256xf32>
    %186 = arith.addf %184, %185 : vector<16x256xf32>
    %cst_54 = arith.constant 5.000000e-01 : f32
    %187 = vector.broadcast %cst_54 : f32 to vector<16x256xf32>
    %188 = arith.mulf %187, %186 : vector<16x256xf32>
    %189 = arith.mulf %181, %188 : vector<16x256xf32>
    %c0_55 = arith.constant 0 : index
    %c0_56 = arith.constant 0 : index
    %c0_57 = arith.constant 0 : index
    %190 = vector.load %arg4[%c0_55, %c0_56, %c0_57] : memref<4x16x144xbf16, #tpu.memory_space<vmem>>, vector<1x16x144xbf16>
    %191 = vector.shape_cast %190 : vector<1x16x144xbf16> to vector<16x144xbf16>
    %192 = vector.extract_strided_slice %25 {offsets = [0, 11], sizes = [16, 1], strides = [1, 1]} : vector<16x18xf32> to vector<16x1xf32>
    %c15_i32_58 = arith.constant 15 : i32
    %193 = tpu.dynamic_rotate %189 by %c15_i32_58 dim 1 : vector<16x256xf32>, i32 -> vector<16x256xf32>
    %c255_i32_59 = arith.constant 255 : i32
    %194 = tpu.dynamic_rotate %189 by %c255_i32_59 dim 1 : vector<16x256xf32>, i32 -> vector<16x256xf32>
    %195 = vector.shape_cast %18 : vector<1x256xi1> to vector<1x256xi1>
    %196 = vector.broadcast %195 : vector<1x256xi1> to vector<16x256xi1>
    %197 = arith.select %196, %194, %193 : vector<16x256xi1>, vector<16x256xf32>
    %c1_i32_60 = arith.constant 1 : i32
    %198 = tpu.dynamic_rotate %189 by %c1_i32_60 dim 1 : vector<16x256xf32>, i32 -> vector<16x256xf32>
    %c241_i32_61 = arith.constant 241 : i32
    %199 = tpu.dynamic_rotate %189 by %c241_i32_61 dim 1 : vector<16x256xf32>, i32 -> vector<16x256xf32>
    %200 = vector.shape_cast %20 : vector<1x256xi1> to vector<1x256xi1>
    %201 = vector.broadcast %200 : vector<1x256xi1> to vector<16x256xi1>
    %202 = arith.select %201, %199, %198 : vector<16x256xi1>, vector<16x256xf32>
    %c16_i32_62 = arith.constant 16 : i32
    %203 = tpu.dynamic_rotate %202 by %c16_i32_62 dim 1 : vector<16x256xf32>, i32 -> vector<16x256xf32>
    %204 = arith.truncf %203 : vector<16x256xf32> to vector<16x256xbf16>
    %c16_i32_63 = arith.constant 16 : i32
    %205 = tpu.dynamic_rotate %189 by %c16_i32_63 dim 1 : vector<16x256xf32>, i32 -> vector<16x256xf32>
    %206 = arith.truncf %205 : vector<16x256xf32> to vector<16x256xbf16>
    %c16_i32_64 = arith.constant 16 : i32
    %207 = tpu.dynamic_rotate %197 by %c16_i32_64 dim 1 : vector<16x256xf32>, i32 -> vector<16x256xf32>
    %208 = arith.truncf %207 : vector<16x256xf32> to vector<16x256xbf16>
    %209 = arith.truncf %202 : vector<16x256xf32> to vector<16x256xbf16>
    %210 = arith.truncf %189 : vector<16x256xf32> to vector<16x256xbf16>
    %211 = arith.truncf %197 : vector<16x256xf32> to vector<16x256xbf16>
    %c240_i32_65 = arith.constant 240 : i32
    %212 = tpu.dynamic_rotate %202 by %c240_i32_65 dim 1 : vector<16x256xf32>, i32 -> vector<16x256xf32>
    %213 = arith.truncf %212 : vector<16x256xf32> to vector<16x256xbf16>
    %c240_i32_66 = arith.constant 240 : i32
    %214 = tpu.dynamic_rotate %189 by %c240_i32_66 dim 1 : vector<16x256xf32>, i32 -> vector<16x256xf32>
    %215 = arith.truncf %214 : vector<16x256xf32> to vector<16x256xbf16>
    %c240_i32_67 = arith.constant 240 : i32
    %216 = tpu.dynamic_rotate %197 by %c240_i32_67 dim 1 : vector<16x256xf32>, i32 -> vector<16x256xf32>
    %217 = arith.truncf %216 : vector<16x256xf32> to vector<16x256xbf16>
    %218 = tpu.concatenate %204, %206, %208, %209, %210, %211, %213, %215, %217 in 0 : vector<16x256xbf16>, vector<16x256xbf16>, vector<16x256xbf16>, vector<16x256xbf16>, vector<16x256xbf16>, vector<16x256xbf16>, vector<16x256xbf16>, vector<16x256xbf16>, vector<16x256xbf16> -> vector<144x256xbf16>
    %cst_68 = arith.constant dense<0.000000e+00> : vector<16x256xf32>
    %219 = tpu.matmul %191, %218, %cst_68 {dimension_numbers = #tpu.dot_dimension_numbers<[1], [0], [0], [1], [0, 0, 1, 1], [], []>} : vector<16x144xbf16>, vector<144x256xbf16>, vector<16x256xf32> -> vector<16x256xf32>
    %220 = vector.broadcast %192 : vector<16x1xf32> to vector<16x256xf32>
    %221 = arith.addf %219, %220 : vector<16x256xf32>
    %222 = vector.extract_strided_slice %25 {offsets = [0, 2], sizes = [16, 1], strides = [1, 1]} : vector<16x18xf32> to vector<16x1xf32>
    %223 = vector.extract_strided_slice %25 {offsets = [0, 7], sizes = [16, 1], strides = [1, 1]} : vector<16x18xf32> to vector<16x1xf32>
    %224 = arith.mulf %221, %221 : vector<16x256xf32>
    %225 = tpu.concatenate %221, %224 in 0 : vector<16x256xf32>, vector<16x256xf32> -> vector<32x256xf32>
    %cst_69 = arith.constant dense<0.000000e+00> : vector<32x1xf32>
    %226 = tpu.matmul %225, %24, %cst_69 {dimension_numbers = #tpu.dot_dimension_numbers<[1], [0], [0], [1], [0, 0, 1, 1], [], []>} : vector<32x256xf32>, vector<256x1xf32>, vector<32x1xf32> -> vector<32x1xf32>
    %227 = vector.extract_strided_slice %226 {offsets = [0, 0], sizes = [16, 1], strides = [1, 1]} : vector<32x1xf32> to vector<16x1xf32>
    %228 = vector.extract_strided_slice %226 {offsets = [16, 0], sizes = [16, 1], strides = [1, 1]} : vector<32x1xf32> to vector<16x1xf32>
    %cst_70 = arith.constant 0.000000e+00 : f32
    %229 = vector.broadcast %cst_70 : f32 to vector<16x1xf32>
    %230 = arith.select %23, %227, %229 : vector<16x1xi1>, vector<16x1xf32>
    %cst_71 = arith.constant dense<0.000000e+00> : vector<1xf32>
    %231 = vector.multi_reduction <add>, %230, %cst_71 [0] : vector<16x1xf32> to vector<1xf32>
    %232 = vector.shape_cast %231 : vector<1xf32> to vector<1x1xf32>
    %cst_72 = arith.constant 0.000000e+00 : f32
    %233 = vector.broadcast %cst_72 : f32 to vector<16x1xf32>
    %234 = arith.select %23, %228, %233 : vector<16x1xi1>, vector<16x1xf32>
    %cst_73 = arith.constant dense<0.000000e+00> : vector<1xf32>
    %235 = vector.multi_reduction <add>, %234, %cst_73 [0] : vector<16x1xf32> to vector<1xf32>
    %236 = vector.shape_cast %235 : vector<1xf32> to vector<1x1xf32>
    %cst_74 = arith.constant dense<0.000000e+00> : vector<1xf32>
    %237 = vector.multi_reduction <add>, %227, %cst_74 [0] : vector<16x1xf32> to vector<1xf32>
    %238 = vector.shape_cast %237 : vector<1xf32> to vector<1x1xf32>
    %239 = arith.subf %238, %232 : vector<1x1xf32>
    %cst_75 = arith.constant dense<0.000000e+00> : vector<1xf32>
    %240 = vector.multi_reduction <add>, %228, %cst_75 [0] : vector<16x1xf32> to vector<1xf32>
    %241 = vector.shape_cast %240 : vector<1xf32> to vector<1x1xf32>
    %242 = arith.subf %241, %236 : vector<1x1xf32>
    %cst_76 = arith.constant 5.58035739E-4 : f32
    %243 = vector.broadcast %cst_76 : f32 to vector<1x1xf32>
    %244 = arith.mulf %232, %243 : vector<1x1xf32>
    %cst_77 = arith.constant 5.58035739E-4 : f32
    %245 = vector.broadcast %cst_77 : f32 to vector<1x1xf32>
    %246 = arith.mulf %239, %245 : vector<1x1xf32>
    %cst_78 = arith.constant 5.58035739E-4 : f32
    %247 = vector.broadcast %cst_78 : f32 to vector<1x1xf32>
    %248 = arith.mulf %236, %247 : vector<1x1xf32>
    %249 = arith.mulf %244, %244 : vector<1x1xf32>
    %250 = arith.subf %248, %249 : vector<1x1xf32>
    %cst_79 = arith.constant 0.000000e+00 : f32
    %251 = vector.broadcast %cst_79 : f32 to vector<1x1xf32>
    %252 = arith.maximumf %250, %251 : vector<1x1xf32>
    %cst_80 = arith.constant 9.99999974E-6 : f32
    %253 = vector.broadcast %cst_80 : f32 to vector<1x1xf32>
    %254 = arith.addf %252, %253 : vector<1x1xf32>
    %255 = math.rsqrt %254 : vector<1x1xf32>
    %cst_81 = arith.constant 5.58035739E-4 : f32
    %256 = vector.broadcast %cst_81 : f32 to vector<1x1xf32>
    %257 = arith.mulf %242, %256 : vector<1x1xf32>
    %258 = arith.mulf %246, %246 : vector<1x1xf32>
    %259 = arith.subf %257, %258 : vector<1x1xf32>
    %cst_82 = arith.constant 0.000000e+00 : f32
    %260 = vector.broadcast %cst_82 : f32 to vector<1x1xf32>
    %261 = arith.maximumf %259, %260 : vector<1x1xf32>
    %cst_83 = arith.constant 9.99999974E-6 : f32
    %262 = vector.broadcast %cst_83 : f32 to vector<1x1xf32>
    %263 = arith.addf %261, %262 : vector<1x1xf32>
    %264 = math.rsqrt %263 : vector<1x1xf32>
    %265 = vector.shape_cast %244 : vector<1x1xf32> to vector<1x1xf32>
    %266 = vector.broadcast %265 : vector<1x1xf32> to vector<16x1xf32>
    %267 = vector.shape_cast %246 : vector<1x1xf32> to vector<1x1xf32>
    %268 = vector.broadcast %267 : vector<1x1xf32> to vector<16x1xf32>
    %269 = arith.select %23, %266, %268 : vector<16x1xi1>, vector<16x1xf32>
    %270 = vector.shape_cast %255 : vector<1x1xf32> to vector<1x1xf32>
    %271 = vector.broadcast %270 : vector<1x1xf32> to vector<16x1xf32>
    %272 = vector.shape_cast %264 : vector<1x1xf32> to vector<1x1xf32>
    %273 = vector.broadcast %272 : vector<1x1xf32> to vector<16x1xf32>
    %274 = arith.select %23, %271, %273 : vector<16x1xi1>, vector<16x1xf32>
    %275 = arith.mulf %274, %222 : vector<16x1xf32>
    %276 = arith.mulf %269, %275 : vector<16x1xf32>
    %277 = arith.subf %223, %276 : vector<16x1xf32>
    %278 = vector.broadcast %275 : vector<16x1xf32> to vector<16x256xf32>
    %279 = arith.mulf %221, %278 : vector<16x256xf32>
    %280 = vector.broadcast %277 : vector<16x1xf32> to vector<16x256xf32>
    %281 = arith.addf %279, %280 : vector<16x256xf32>
    %cst_84 = arith.constant 5.000000e-01 : f32
    %282 = vector.broadcast %cst_84 : f32 to vector<16x256xf32>
    %283 = arith.mulf %282, %281 : vector<16x256xf32>
    %284 = math.tanh %283 : vector<16x256xf32>
    %cst_85 = arith.constant 1.000000e+00 : f32
    %285 = vector.broadcast %cst_85 : f32 to vector<16x256xf32>
    %286 = arith.addf %284, %285 : vector<16x256xf32>
    %cst_86 = arith.constant 5.000000e-01 : f32
    %287 = vector.broadcast %cst_86 : f32 to vector<16x256xf32>
    %288 = arith.mulf %287, %286 : vector<16x256xf32>
    %289 = arith.mulf %281, %288 : vector<16x256xf32>
    %c1 = arith.constant 1 : index
    %c0_87 = arith.constant 0 : index
    %c0_88 = arith.constant 0 : index
    %290 = vector.load %arg4[%c1, %c0_87, %c0_88] : memref<4x16x144xbf16, #tpu.memory_space<vmem>>, vector<1x16x144xbf16>
    %291 = vector.shape_cast %290 : vector<1x16x144xbf16> to vector<16x144xbf16>
    %292 = vector.extract_strided_slice %25 {offsets = [0, 12], sizes = [16, 1], strides = [1, 1]} : vector<16x18xf32> to vector<16x1xf32>
    %c15_i32_89 = arith.constant 15 : i32
    %293 = tpu.dynamic_rotate %289 by %c15_i32_89 dim 1 : vector<16x256xf32>, i32 -> vector<16x256xf32>
    %c255_i32_90 = arith.constant 255 : i32
    %294 = tpu.dynamic_rotate %289 by %c255_i32_90 dim 1 : vector<16x256xf32>, i32 -> vector<16x256xf32>
    %295 = vector.shape_cast %18 : vector<1x256xi1> to vector<1x256xi1>
    %296 = vector.broadcast %295 : vector<1x256xi1> to vector<16x256xi1>
    %297 = arith.select %296, %294, %293 : vector<16x256xi1>, vector<16x256xf32>
    %c1_i32_91 = arith.constant 1 : i32
    %298 = tpu.dynamic_rotate %289 by %c1_i32_91 dim 1 : vector<16x256xf32>, i32 -> vector<16x256xf32>
    %c241_i32_92 = arith.constant 241 : i32
    %299 = tpu.dynamic_rotate %289 by %c241_i32_92 dim 1 : vector<16x256xf32>, i32 -> vector<16x256xf32>
    %300 = vector.shape_cast %20 : vector<1x256xi1> to vector<1x256xi1>
    %301 = vector.broadcast %300 : vector<1x256xi1> to vector<16x256xi1>
    %302 = arith.select %301, %299, %298 : vector<16x256xi1>, vector<16x256xf32>
    %c16_i32_93 = arith.constant 16 : i32
    %303 = tpu.dynamic_rotate %302 by %c16_i32_93 dim 1 : vector<16x256xf32>, i32 -> vector<16x256xf32>
    %304 = arith.truncf %303 : vector<16x256xf32> to vector<16x256xbf16>
    %c16_i32_94 = arith.constant 16 : i32
    %305 = tpu.dynamic_rotate %289 by %c16_i32_94 dim 1 : vector<16x256xf32>, i32 -> vector<16x256xf32>
    %306 = arith.truncf %305 : vector<16x256xf32> to vector<16x256xbf16>
    %c16_i32_95 = arith.constant 16 : i32
    %307 = tpu.dynamic_rotate %297 by %c16_i32_95 dim 1 : vector<16x256xf32>, i32 -> vector<16x256xf32>
    %308 = arith.truncf %307 : vector<16x256xf32> to vector<16x256xbf16>
    %309 = arith.truncf %302 : vector<16x256xf32> to vector<16x256xbf16>
    %310 = arith.truncf %289 : vector<16x256xf32> to vector<16x256xbf16>
    %311 = arith.truncf %297 : vector<16x256xf32> to vector<16x256xbf16>
    %c240_i32_96 = arith.constant 240 : i32
    %312 = tpu.dynamic_rotate %302 by %c240_i32_96 dim 1 : vector<16x256xf32>, i32 -> vector<16x256xf32>
    %313 = arith.truncf %312 : vector<16x256xf32> to vector<16x256xbf16>
    %c240_i32_97 = arith.constant 240 : i32
    %314 = tpu.dynamic_rotate %289 by %c240_i32_97 dim 1 : vector<16x256xf32>, i32 -> vector<16x256xf32>
    %315 = arith.truncf %314 : vector<16x256xf32> to vector<16x256xbf16>
    %c240_i32_98 = arith.constant 240 : i32
    %316 = tpu.dynamic_rotate %297 by %c240_i32_98 dim 1 : vector<16x256xf32>, i32 -> vector<16x256xf32>
    %317 = arith.truncf %316 : vector<16x256xf32> to vector<16x256xbf16>
    %318 = tpu.concatenate %304, %306, %308, %309, %310, %311, %313, %315, %317 in 0 : vector<16x256xbf16>, vector<16x256xbf16>, vector<16x256xbf16>, vector<16x256xbf16>, vector<16x256xbf16>, vector<16x256xbf16>, vector<16x256xbf16>, vector<16x256xbf16>, vector<16x256xbf16> -> vector<144x256xbf16>
    %cst_99 = arith.constant dense<0.000000e+00> : vector<16x256xf32>
    %319 = tpu.matmul %291, %318, %cst_99 {dimension_numbers = #tpu.dot_dimension_numbers<[1], [0], [0], [1], [0, 0, 1, 1], [], []>} : vector<16x144xbf16>, vector<144x256xbf16>, vector<16x256xf32> -> vector<16x256xf32>
    %320 = vector.broadcast %292 : vector<16x1xf32> to vector<16x256xf32>
    %321 = arith.addf %319, %320 : vector<16x256xf32>
    %c0_100 = arith.constant 0 : index
    %c0_101 = arith.constant 0 : index
    %322 = memref.load %arg7[%c0_100, %c0_101] : memref<3x1xf32, #tpu.memory_space<smem>>
    %323 = vector.broadcast %322 : f32 to vector<16x256xf32>
    %324 = arith.mulf %323, %321 : vector<16x256xf32>
    %325 = arith.addf %121, %324 : vector<16x256xf32>
    %cst_102 = arith.constant 3.000000e-01 : f32
    %326 = vector.broadcast %cst_102 : f32 to vector<16x256xf32>
    %327 = arith.mulf %325, %326 : vector<16x256xf32>
    %328 = arith.addf %327, %121 : vector<16x256xf32>
    %329 = vector.extract_strided_slice %25 {offsets = [0, 3], sizes = [16, 1], strides = [1, 1]} : vector<16x18xf32> to vector<16x1xf32>
    %330 = vector.extract_strided_slice %25 {offsets = [0, 8], sizes = [16, 1], strides = [1, 1]} : vector<16x18xf32> to vector<16x1xf32>
    %331 = arith.mulf %328, %328 : vector<16x256xf32>
    %332 = tpu.concatenate %328, %331 in 0 : vector<16x256xf32>, vector<16x256xf32> -> vector<32x256xf32>
    %cst_103 = arith.constant dense<0.000000e+00> : vector<32x1xf32>
    %333 = tpu.matmul %332, %24, %cst_103 {dimension_numbers = #tpu.dot_dimension_numbers<[1], [0], [0], [1], [0, 0, 1, 1], [], []>} : vector<32x256xf32>, vector<256x1xf32>, vector<32x1xf32> -> vector<32x1xf32>
    %334 = vector.extract_strided_slice %333 {offsets = [0, 0], sizes = [16, 1], strides = [1, 1]} : vector<32x1xf32> to vector<16x1xf32>
    %335 = vector.extract_strided_slice %333 {offsets = [16, 0], sizes = [16, 1], strides = [1, 1]} : vector<32x1xf32> to vector<16x1xf32>
    %cst_104 = arith.constant 0.000000e+00 : f32
    %336 = vector.broadcast %cst_104 : f32 to vector<16x1xf32>
    %337 = arith.select %23, %334, %336 : vector<16x1xi1>, vector<16x1xf32>
    %cst_105 = arith.constant dense<0.000000e+00> : vector<1xf32>
    %338 = vector.multi_reduction <add>, %337, %cst_105 [0] : vector<16x1xf32> to vector<1xf32>
    %339 = vector.shape_cast %338 : vector<1xf32> to vector<1x1xf32>
    %cst_106 = arith.constant 0.000000e+00 : f32
    %340 = vector.broadcast %cst_106 : f32 to vector<16x1xf32>
    %341 = arith.select %23, %335, %340 : vector<16x1xi1>, vector<16x1xf32>
    %cst_107 = arith.constant dense<0.000000e+00> : vector<1xf32>
    %342 = vector.multi_reduction <add>, %341, %cst_107 [0] : vector<16x1xf32> to vector<1xf32>
    %343 = vector.shape_cast %342 : vector<1xf32> to vector<1x1xf32>
    %cst_108 = arith.constant dense<0.000000e+00> : vector<1xf32>
    %344 = vector.multi_reduction <add>, %334, %cst_108 [0] : vector<16x1xf32> to vector<1xf32>
    %345 = vector.shape_cast %344 : vector<1xf32> to vector<1x1xf32>
    %346 = arith.subf %345, %339 : vector<1x1xf32>
    %cst_109 = arith.constant dense<0.000000e+00> : vector<1xf32>
    %347 = vector.multi_reduction <add>, %335, %cst_109 [0] : vector<16x1xf32> to vector<1xf32>
    %348 = vector.shape_cast %347 : vector<1xf32> to vector<1x1xf32>
    %349 = arith.subf %348, %343 : vector<1x1xf32>
    %cst_110 = arith.constant 5.58035739E-4 : f32
    %350 = vector.broadcast %cst_110 : f32 to vector<1x1xf32>
    %351 = arith.mulf %339, %350 : vector<1x1xf32>
    %cst_111 = arith.constant 5.58035739E-4 : f32
    %352 = vector.broadcast %cst_111 : f32 to vector<1x1xf32>
    %353 = arith.mulf %346, %352 : vector<1x1xf32>
    %cst_112 = arith.constant 5.58035739E-4 : f32
    %354 = vector.broadcast %cst_112 : f32 to vector<1x1xf32>
    %355 = arith.mulf %343, %354 : vector<1x1xf32>
    %356 = arith.mulf %351, %351 : vector<1x1xf32>
    %357 = arith.subf %355, %356 : vector<1x1xf32>
    %cst_113 = arith.constant 0.000000e+00 : f32
    %358 = vector.broadcast %cst_113 : f32 to vector<1x1xf32>
    %359 = arith.maximumf %357, %358 : vector<1x1xf32>
    %cst_114 = arith.constant 9.99999974E-6 : f32
    %360 = vector.broadcast %cst_114 : f32 to vector<1x1xf32>
    %361 = arith.addf %359, %360 : vector<1x1xf32>
    %362 = math.rsqrt %361 : vector<1x1xf32>
    %cst_115 = arith.constant 5.58035739E-4 : f32
    %363 = vector.broadcast %cst_115 : f32 to vector<1x1xf32>
    %364 = arith.mulf %349, %363 : vector<1x1xf32>
    %365 = arith.mulf %353, %353 : vector<1x1xf32>
    %366 = arith.subf %364, %365 : vector<1x1xf32>
    %cst_116 = arith.constant 0.000000e+00 : f32
    %367 = vector.broadcast %cst_116 : f32 to vector<1x1xf32>
    %368 = arith.maximumf %366, %367 : vector<1x1xf32>
    %cst_117 = arith.constant 9.99999974E-6 : f32
    %369 = vector.broadcast %cst_117 : f32 to vector<1x1xf32>
    %370 = arith.addf %368, %369 : vector<1x1xf32>
    %371 = math.rsqrt %370 : vector<1x1xf32>
    %372 = vector.shape_cast %351 : vector<1x1xf32> to vector<1x1xf32>
    %373 = vector.broadcast %372 : vector<1x1xf32> to vector<16x1xf32>
    %374 = vector.shape_cast %353 : vector<1x1xf32> to vector<1x1xf32>
    %375 = vector.broadcast %374 : vector<1x1xf32> to vector<16x1xf32>
    %376 = arith.select %23, %373, %375 : vector<16x1xi1>, vector<16x1xf32>
    %377 = vector.shape_cast %362 : vector<1x1xf32> to vector<1x1xf32>
    %378 = vector.broadcast %377 : vector<1x1xf32> to vector<16x1xf32>
    %379 = vector.shape_cast %371 : vector<1x1xf32> to vector<1x1xf32>
    %380 = vector.broadcast %379 : vector<1x1xf32> to vector<16x1xf32>
    %381 = arith.select %23, %378, %380 : vector<16x1xi1>, vector<16x1xf32>
    %382 = arith.mulf %381, %329 : vector<16x1xf32>
    %383 = arith.mulf %376, %382 : vector<16x1xf32>
    %384 = arith.subf %330, %383 : vector<16x1xf32>
    %385 = vector.broadcast %382 : vector<16x1xf32> to vector<16x256xf32>
    %386 = arith.mulf %328, %385 : vector<16x256xf32>
    %387 = vector.broadcast %384 : vector<16x1xf32> to vector<16x256xf32>
    %388 = arith.addf %386, %387 : vector<16x256xf32>
    %cst_118 = arith.constant 5.000000e-01 : f32
    %389 = vector.broadcast %cst_118 : f32 to vector<16x256xf32>
    %390 = arith.mulf %389, %388 : vector<16x256xf32>
    %391 = math.tanh %390 : vector<16x256xf32>
    %cst_119 = arith.constant 1.000000e+00 : f32
    %392 = vector.broadcast %cst_119 : f32 to vector<16x256xf32>
    %393 = arith.addf %391, %392 : vector<16x256xf32>
    %cst_120 = arith.constant 5.000000e-01 : f32
    %394 = vector.broadcast %cst_120 : f32 to vector<16x256xf32>
    %395 = arith.mulf %394, %393 : vector<16x256xf32>
    %396 = arith.mulf %388, %395 : vector<16x256xf32>
    %c2 = arith.constant 2 : index
    %c0_121 = arith.constant 0 : index
    %c0_122 = arith.constant 0 : index
    %397 = vector.load %arg4[%c2, %c0_121, %c0_122] : memref<4x16x144xbf16, #tpu.memory_space<vmem>>, vector<1x16x144xbf16>
    %398 = vector.shape_cast %397 : vector<1x16x144xbf16> to vector<16x144xbf16>
    %399 = vector.extract_strided_slice %25 {offsets = [0, 13], sizes = [16, 1], strides = [1, 1]} : vector<16x18xf32> to vector<16x1xf32>
    %c15_i32_123 = arith.constant 15 : i32
    %400 = tpu.dynamic_rotate %396 by %c15_i32_123 dim 1 : vector<16x256xf32>, i32 -> vector<16x256xf32>
    %c255_i32_124 = arith.constant 255 : i32
    %401 = tpu.dynamic_rotate %396 by %c255_i32_124 dim 1 : vector<16x256xf32>, i32 -> vector<16x256xf32>
    %402 = vector.shape_cast %18 : vector<1x256xi1> to vector<1x256xi1>
    %403 = vector.broadcast %402 : vector<1x256xi1> to vector<16x256xi1>
    %404 = arith.select %403, %401, %400 : vector<16x256xi1>, vector<16x256xf32>
    %c1_i32_125 = arith.constant 1 : i32
    %405 = tpu.dynamic_rotate %396 by %c1_i32_125 dim 1 : vector<16x256xf32>, i32 -> vector<16x256xf32>
    %c241_i32_126 = arith.constant 241 : i32
    %406 = tpu.dynamic_rotate %396 by %c241_i32_126 dim 1 : vector<16x256xf32>, i32 -> vector<16x256xf32>
    %407 = vector.shape_cast %20 : vector<1x256xi1> to vector<1x256xi1>
    %408 = vector.broadcast %407 : vector<1x256xi1> to vector<16x256xi1>
    %409 = arith.select %408, %406, %405 : vector<16x256xi1>, vector<16x256xf32>
    %c16_i32_127 = arith.constant 16 : i32
    %410 = tpu.dynamic_rotate %409 by %c16_i32_127 dim 1 : vector<16x256xf32>, i32 -> vector<16x256xf32>
    %411 = arith.truncf %410 : vector<16x256xf32> to vector<16x256xbf16>
    %c16_i32_128 = arith.constant 16 : i32
    %412 = tpu.dynamic_rotate %396 by %c16_i32_128 dim 1 : vector<16x256xf32>, i32 -> vector<16x256xf32>
    %413 = arith.truncf %412 : vector<16x256xf32> to vector<16x256xbf16>
    %c16_i32_129 = arith.constant 16 : i32
    %414 = tpu.dynamic_rotate %404 by %c16_i32_129 dim 1 : vector<16x256xf32>, i32 -> vector<16x256xf32>
    %415 = arith.truncf %414 : vector<16x256xf32> to vector<16x256xbf16>
    %416 = arith.truncf %409 : vector<16x256xf32> to vector<16x256xbf16>
    %417 = arith.truncf %396 : vector<16x256xf32> to vector<16x256xbf16>
    %418 = arith.truncf %404 : vector<16x256xf32> to vector<16x256xbf16>
    %c240_i32_130 = arith.constant 240 : i32
    %419 = tpu.dynamic_rotate %409 by %c240_i32_130 dim 1 : vector<16x256xf32>, i32 -> vector<16x256xf32>
    %420 = arith.truncf %419 : vector<16x256xf32> to vector<16x256xbf16>
    %c240_i32_131 = arith.constant 240 : i32
    %421 = tpu.dynamic_rotate %396 by %c240_i32_131 dim 1 : vector<16x256xf32>, i32 -> vector<16x256xf32>
    %422 = arith.truncf %421 : vector<16x256xf32> to vector<16x256xbf16>
    %c240_i32_132 = arith.constant 240 : i32
    %423 = tpu.dynamic_rotate %404 by %c240_i32_132 dim 1 : vector<16x256xf32>, i32 -> vector<16x256xf32>
    %424 = arith.truncf %423 : vector<16x256xf32> to vector<16x256xbf16>
    %425 = tpu.concatenate %411, %413, %415, %416, %417, %418, %420, %422, %424 in 0 : vector<16x256xbf16>, vector<16x256xbf16>, vector<16x256xbf16>, vector<16x256xbf16>, vector<16x256xbf16>, vector<16x256xbf16>, vector<16x256xbf16>, vector<16x256xbf16>, vector<16x256xbf16> -> vector<144x256xbf16>
    %cst_133 = arith.constant dense<0.000000e+00> : vector<16x256xf32>
    %426 = tpu.matmul %398, %425, %cst_133 {dimension_numbers = #tpu.dot_dimension_numbers<[1], [0], [0], [1], [0, 0, 1, 1], [], []>} : vector<16x144xbf16>, vector<144x256xbf16>, vector<16x256xf32> -> vector<16x256xf32>
    %427 = vector.broadcast %399 : vector<16x1xf32> to vector<16x256xf32>
    %428 = arith.addf %426, %427 : vector<16x256xf32>
    %429 = vector.extract_strided_slice %25 {offsets = [0, 4], sizes = [16, 1], strides = [1, 1]} : vector<16x18xf32> to vector<16x1xf32>
    %430 = vector.extract_strided_slice %25 {offsets = [0, 9], sizes = [16, 1], strides = [1, 1]} : vector<16x18xf32> to vector<16x1xf32>
    %431 = arith.mulf %428, %428 : vector<16x256xf32>
    %432 = tpu.concatenate %428, %431 in 0 : vector<16x256xf32>, vector<16x256xf32> -> vector<32x256xf32>
    %cst_134 = arith.constant dense<0.000000e+00> : vector<32x1xf32>
    %433 = tpu.matmul %432, %24, %cst_134 {dimension_numbers = #tpu.dot_dimension_numbers<[1], [0], [0], [1], [0, 0, 1, 1], [], []>} : vector<32x256xf32>, vector<256x1xf32>, vector<32x1xf32> -> vector<32x1xf32>
    %434 = vector.extract_strided_slice %433 {offsets = [0, 0], sizes = [16, 1], strides = [1, 1]} : vector<32x1xf32> to vector<16x1xf32>
    %435 = vector.extract_strided_slice %433 {offsets = [16, 0], sizes = [16, 1], strides = [1, 1]} : vector<32x1xf32> to vector<16x1xf32>
    %cst_135 = arith.constant 0.000000e+00 : f32
    %436 = vector.broadcast %cst_135 : f32 to vector<16x1xf32>
    %437 = arith.select %23, %434, %436 : vector<16x1xi1>, vector<16x1xf32>
    %cst_136 = arith.constant dense<0.000000e+00> : vector<1xf32>
    %438 = vector.multi_reduction <add>, %437, %cst_136 [0] : vector<16x1xf32> to vector<1xf32>
    %439 = vector.shape_cast %438 : vector<1xf32> to vector<1x1xf32>
    %cst_137 = arith.constant 0.000000e+00 : f32
    %440 = vector.broadcast %cst_137 : f32 to vector<16x1xf32>
    %441 = arith.select %23, %435, %440 : vector<16x1xi1>, vector<16x1xf32>
    %cst_138 = arith.constant dense<0.000000e+00> : vector<1xf32>
    %442 = vector.multi_reduction <add>, %441, %cst_138 [0] : vector<16x1xf32> to vector<1xf32>
    %443 = vector.shape_cast %442 : vector<1xf32> to vector<1x1xf32>
    %cst_139 = arith.constant dense<0.000000e+00> : vector<1xf32>
    %444 = vector.multi_reduction <add>, %434, %cst_139 [0] : vector<16x1xf32> to vector<1xf32>
    %445 = vector.shape_cast %444 : vector<1xf32> to vector<1x1xf32>
    %446 = arith.subf %445, %439 : vector<1x1xf32>
    %cst_140 = arith.constant dense<0.000000e+00> : vector<1xf32>
    %447 = vector.multi_reduction <add>, %435, %cst_140 [0] : vector<16x1xf32> to vector<1xf32>
    %448 = vector.shape_cast %447 : vector<1xf32> to vector<1x1xf32>
    %449 = arith.subf %448, %443 : vector<1x1xf32>
    %cst_141 = arith.constant 5.58035739E-4 : f32
    %450 = vector.broadcast %cst_141 : f32 to vector<1x1xf32>
    %451 = arith.mulf %439, %450 : vector<1x1xf32>
    %cst_142 = arith.constant 5.58035739E-4 : f32
    %452 = vector.broadcast %cst_142 : f32 to vector<1x1xf32>
    %453 = arith.mulf %446, %452 : vector<1x1xf32>
    %cst_143 = arith.constant 5.58035739E-4 : f32
    %454 = vector.broadcast %cst_143 : f32 to vector<1x1xf32>
    %455 = arith.mulf %443, %454 : vector<1x1xf32>
    %456 = arith.mulf %451, %451 : vector<1x1xf32>
    %457 = arith.subf %455, %456 : vector<1x1xf32>
    %cst_144 = arith.constant 0.000000e+00 : f32
    %458 = vector.broadcast %cst_144 : f32 to vector<1x1xf32>
    %459 = arith.maximumf %457, %458 : vector<1x1xf32>
    %cst_145 = arith.constant 9.99999974E-6 : f32
    %460 = vector.broadcast %cst_145 : f32 to vector<1x1xf32>
    %461 = arith.addf %459, %460 : vector<1x1xf32>
    %462 = math.rsqrt %461 : vector<1x1xf32>
    %cst_146 = arith.constant 5.58035739E-4 : f32
    %463 = vector.broadcast %cst_146 : f32 to vector<1x1xf32>
    %464 = arith.mulf %449, %463 : vector<1x1xf32>
    %465 = arith.mulf %453, %453 : vector<1x1xf32>
    %466 = arith.subf %464, %465 : vector<1x1xf32>
    %cst_147 = arith.constant 0.000000e+00 : f32
    %467 = vector.broadcast %cst_147 : f32 to vector<1x1xf32>
    %468 = arith.maximumf %466, %467 : vector<1x1xf32>
    %cst_148 = arith.constant 9.99999974E-6 : f32
    %469 = vector.broadcast %cst_148 : f32 to vector<1x1xf32>
    %470 = arith.addf %468, %469 : vector<1x1xf32>
    %471 = math.rsqrt %470 : vector<1x1xf32>
    %472 = vector.shape_cast %451 : vector<1x1xf32> to vector<1x1xf32>
    %473 = vector.broadcast %472 : vector<1x1xf32> to vector<16x1xf32>
    %474 = vector.shape_cast %453 : vector<1x1xf32> to vector<1x1xf32>
    %475 = vector.broadcast %474 : vector<1x1xf32> to vector<16x1xf32>
    %476 = arith.select %23, %473, %475 : vector<16x1xi1>, vector<16x1xf32>
    %477 = vector.shape_cast %462 : vector<1x1xf32> to vector<1x1xf32>
    %478 = vector.broadcast %477 : vector<1x1xf32> to vector<16x1xf32>
    %479 = vector.shape_cast %471 : vector<1x1xf32> to vector<1x1xf32>
    %480 = vector.broadcast %479 : vector<1x1xf32> to vector<16x1xf32>
    %481 = arith.select %23, %478, %480 : vector<16x1xi1>, vector<16x1xf32>
    %482 = arith.mulf %481, %429 : vector<16x1xf32>
    %483 = arith.mulf %476, %482 : vector<16x1xf32>
    %484 = arith.subf %430, %483 : vector<16x1xf32>
    %485 = vector.broadcast %482 : vector<16x1xf32> to vector<16x256xf32>
    %486 = arith.mulf %428, %485 : vector<16x256xf32>
    %487 = vector.broadcast %484 : vector<16x1xf32> to vector<16x256xf32>
    %488 = arith.addf %486, %487 : vector<16x256xf32>
    %cst_149 = arith.constant 5.000000e-01 : f32
    %489 = vector.broadcast %cst_149 : f32 to vector<16x256xf32>
    %490 = arith.mulf %489, %488 : vector<16x256xf32>
    %491 = math.tanh %490 : vector<16x256xf32>
    %cst_150 = arith.constant 1.000000e+00 : f32
    %492 = vector.broadcast %cst_150 : f32 to vector<16x256xf32>
    %493 = arith.addf %491, %492 : vector<16x256xf32>
    %cst_151 = arith.constant 5.000000e-01 : f32
    %494 = vector.broadcast %cst_151 : f32 to vector<16x256xf32>
    %495 = arith.mulf %494, %493 : vector<16x256xf32>
    %496 = arith.mulf %488, %495 : vector<16x256xf32>
    %c3 = arith.constant 3 : index
    %c0_152 = arith.constant 0 : index
    %c0_153 = arith.constant 0 : index
    %497 = vector.load %arg4[%c3, %c0_152, %c0_153] : memref<4x16x144xbf16, #tpu.memory_space<vmem>>, vector<1x16x144xbf16>
    %498 = vector.shape_cast %497 : vector<1x16x144xbf16> to vector<16x144xbf16>
    %499 = vector.extract_strided_slice %25 {offsets = [0, 14], sizes = [16, 1], strides = [1, 1]} : vector<16x18xf32> to vector<16x1xf32>
    %c15_i32_154 = arith.constant 15 : i32
    %500 = tpu.dynamic_rotate %496 by %c15_i32_154 dim 1 : vector<16x256xf32>, i32 -> vector<16x256xf32>
    %c255_i32_155 = arith.constant 255 : i32
    %501 = tpu.dynamic_rotate %496 by %c255_i32_155 dim 1 : vector<16x256xf32>, i32 -> vector<16x256xf32>
    %502 = vector.shape_cast %18 : vector<1x256xi1> to vector<1x256xi1>
    %503 = vector.broadcast %502 : vector<1x256xi1> to vector<16x256xi1>
    %504 = arith.select %503, %501, %500 : vector<16x256xi1>, vector<16x256xf32>
    %c1_i32_156 = arith.constant 1 : i32
    %505 = tpu.dynamic_rotate %496 by %c1_i32_156 dim 1 : vector<16x256xf32>, i32 -> vector<16x256xf32>
    %c241_i32_157 = arith.constant 241 : i32
    %506 = tpu.dynamic_rotate %496 by %c241_i32_157 dim 1 : vector<16x256xf32>, i32 -> vector<16x256xf32>
    %507 = vector.shape_cast %20 : vector<1x256xi1> to vector<1x256xi1>
    %508 = vector.broadcast %507 : vector<1x256xi1> to vector<16x256xi1>
    %509 = arith.select %508, %506, %505 : vector<16x256xi1>, vector<16x256xf32>
    %c16_i32_158 = arith.constant 16 : i32
    %510 = tpu.dynamic_rotate %509 by %c16_i32_158 dim 1 : vector<16x256xf32>, i32 -> vector<16x256xf32>
    %511 = arith.truncf %510 : vector<16x256xf32> to vector<16x256xbf16>
    %c16_i32_159 = arith.constant 16 : i32
    %512 = tpu.dynamic_rotate %496 by %c16_i32_159 dim 1 : vector<16x256xf32>, i32 -> vector<16x256xf32>
    %513 = arith.truncf %512 : vector<16x256xf32> to vector<16x256xbf16>
    %c16_i32_160 = arith.constant 16 : i32
    %514 = tpu.dynamic_rotate %504 by %c16_i32_160 dim 1 : vector<16x256xf32>, i32 -> vector<16x256xf32>
    %515 = arith.truncf %514 : vector<16x256xf32> to vector<16x256xbf16>
    %516 = arith.truncf %509 : vector<16x256xf32> to vector<16x256xbf16>
    %517 = arith.truncf %496 : vector<16x256xf32> to vector<16x256xbf16>
    %518 = arith.truncf %504 : vector<16x256xf32> to vector<16x256xbf16>
    %c240_i32_161 = arith.constant 240 : i32
    %519 = tpu.dynamic_rotate %509 by %c240_i32_161 dim 1 : vector<16x256xf32>, i32 -> vector<16x256xf32>
    %520 = arith.truncf %519 : vector<16x256xf32> to vector<16x256xbf16>
    %c240_i32_162 = arith.constant 240 : i32
    %521 = tpu.dynamic_rotate %496 by %c240_i32_162 dim 1 : vector<16x256xf32>, i32 -> vector<16x256xf32>
    %522 = arith.truncf %521 : vector<16x256xf32> to vector<16x256xbf16>
    %c240_i32_163 = arith.constant 240 : i32
    %523 = tpu.dynamic_rotate %504 by %c240_i32_163 dim 1 : vector<16x256xf32>, i32 -> vector<16x256xf32>
    %524 = arith.truncf %523 : vector<16x256xf32> to vector<16x256xbf16>
    %525 = tpu.concatenate %511, %513, %515, %516, %517, %518, %520, %522, %524 in 0 : vector<16x256xbf16>, vector<16x256xbf16>, vector<16x256xbf16>, vector<16x256xbf16>, vector<16x256xbf16>, vector<16x256xbf16>, vector<16x256xbf16>, vector<16x256xbf16>, vector<16x256xbf16> -> vector<144x256xbf16>
    %cst_164 = arith.constant dense<0.000000e+00> : vector<16x256xf32>
    %526 = tpu.matmul %498, %525, %cst_164 {dimension_numbers = #tpu.dot_dimension_numbers<[1], [0], [0], [1], [0, 0, 1, 1], [], []>} : vector<16x144xbf16>, vector<144x256xbf16>, vector<16x256xf32> -> vector<16x256xf32>
    %527 = vector.broadcast %499 : vector<16x1xf32> to vector<16x256xf32>
    %528 = arith.addf %526, %527 : vector<16x256xf32>
    %c1_165 = arith.constant 1 : index
    %c0_166 = arith.constant 0 : index
    %529 = memref.load %arg7[%c1_165, %c0_166] : memref<3x1xf32, #tpu.memory_space<smem>>
    %530 = vector.broadcast %529 : f32 to vector<16x256xf32>
    %531 = arith.mulf %530, %528 : vector<16x256xf32>
    %532 = arith.addf %328, %531 : vector<16x256xf32>
    %cst_167 = arith.constant 3.000000e-01 : f32
    %533 = vector.broadcast %cst_167 : f32 to vector<16x256xf32>
    %534 = arith.mulf %532, %533 : vector<16x256xf32>
    %535 = arith.addf %534, %328 : vector<16x256xf32>
    %cst_168 = arith.constant dense<0.000000e+00> : vector<16x1xf32>
    %536 = tpu.matmul %535, %24, %cst_168 {dimension_numbers = #tpu.dot_dimension_numbers<[1], [0], [0], [1], [0, 0, 1, 1], [], []>} : vector<16x256xf32>, vector<256x1xf32>, vector<16x1xf32> -> vector<16x1xf32>
    %cst_169 = arith.constant 3.906250e-03 : f32
    %537 = vector.broadcast %cst_169 : f32 to vector<16x1xf32>
    %538 = arith.mulf %536, %537 : vector<16x1xf32>
    %c0_170 = arith.constant 0 : index
    %c0_171 = arith.constant 0 : index
    %c0_172 = arith.constant 0 : index
    %539 = vector.load %arg5[%c0_170, %c0_171, %c0_172] : memref<3x16x16xf32, #tpu.memory_space<vmem>>, vector<1x16x16xf32>
    %540 = vector.shape_cast %539 : vector<1x16x16xf32> to vector<16x16xf32>
    %c1_173 = arith.constant 1 : index
    %c0_174 = arith.constant 0 : index
    %c0_175 = arith.constant 0 : index
    %541 = vector.load %arg5[%c1_173, %c0_174, %c0_175] : memref<3x16x16xf32, #tpu.memory_space<vmem>>, vector<1x16x16xf32>
    %542 = vector.shape_cast %541 : vector<1x16x16xf32> to vector<16x16xf32>
    %c2_176 = arith.constant 2 : index
    %c0_177 = arith.constant 0 : index
    %c0_178 = arith.constant 0 : index
    %543 = vector.load %arg5[%c2_176, %c0_177, %c0_178] : memref<3x16x16xf32, #tpu.memory_space<vmem>>, vector<1x16x16xf32>
    %544 = vector.shape_cast %543 : vector<1x16x16xf32> to vector<16x16xf32>
    %cst_179 = arith.constant dense<0.000000e+00> : vector<16x1xf32>
    %545 = tpu.matmul %542, %538, %cst_179 {dimension_numbers = #tpu.dot_dimension_numbers<[1], [0], [0], [1], [0, 0, 1, 1], [], []>} : vector<16x16xf32>, vector<16x1xf32>, vector<16x1xf32> -> vector<16x1xf32>
    %546 = vector.extract_strided_slice %25 {offsets = [0, 16], sizes = [16, 1], strides = [1, 1]} : vector<16x18xf32> to vector<16x1xf32>
    %547 = arith.addf %545, %546 : vector<16x1xf32>
    %cst_180 = arith.constant 0.000000e+00 : f32
    %548 = vector.broadcast %cst_180 : f32 to vector<16x1xf32>
    %549 = arith.maximumf %547, %548 : vector<16x1xf32>
    %cst_181 = arith.constant dense<0.000000e+00> : vector<16x1xf32>
    %550 = tpu.matmul %544, %549, %cst_181 {dimension_numbers = #tpu.dot_dimension_numbers<[1], [0], [0], [1], [0, 0, 1, 1], [], []>} : vector<16x16xf32>, vector<16x1xf32>, vector<16x1xf32> -> vector<16x1xf32>
    %551 = vector.extract_strided_slice %25 {offsets = [0, 17], sizes = [16, 1], strides = [1, 1]} : vector<16x18xf32> to vector<16x1xf32>
    %552 = arith.addf %550, %551 : vector<16x1xf32>
    %cst_182 = arith.constant 5.000000e-01 : f32
    %553 = vector.broadcast %cst_182 : f32 to vector<16x1xf32>
    %554 = arith.mulf %553, %552 : vector<16x1xf32>
    %555 = math.tanh %554 : vector<16x1xf32>
    %cst_183 = arith.constant 1.000000e+00 : f32
    %556 = vector.broadcast %cst_183 : f32 to vector<16x1xf32>
    %557 = arith.addf %555, %556 : vector<16x1xf32>
    %cst_184 = arith.constant 5.000000e-01 : f32
    %558 = vector.broadcast %cst_184 : f32 to vector<16x1xf32>
    %559 = arith.mulf %558, %557 : vector<16x1xf32>
    %560 = vector.broadcast %559 : vector<16x1xf32> to vector<16x256xf32>
    %561 = arith.mulf %535, %560 : vector<16x256xf32>
    %cst_185 = arith.constant dense<0.000000e+00> : vector<16x256xf32>
    %562 = tpu.matmul %540, %561, %cst_185 {dimension_numbers = #tpu.dot_dimension_numbers<[1], [0], [0], [1], [0, 0, 1, 1], [], []>} : vector<16x16xf32>, vector<16x256xf32>, vector<16x256xf32> -> vector<16x256xf32>
    %563 = vector.extract_strided_slice %25 {offsets = [0, 15], sizes = [16, 1], strides = [1, 1]} : vector<16x18xf32> to vector<16x1xf32>
    %564 = vector.broadcast %563 : vector<16x1xf32> to vector<16x256xf32>
    %565 = arith.addf %562, %564 : vector<16x256xf32>
    %566 = math.tanh %565 : vector<16x256xf32>
    %c2_186 = arith.constant 2 : index
    %c0_187 = arith.constant 0 : index
    %567 = memref.load %arg7[%c2_186, %c0_187] : memref<3x1xf32, #tpu.memory_space<smem>>
    %568 = vector.broadcast %567 : f32 to vector<16x256xf32>
    %569 = arith.mulf %566, %568 : vector<16x256xf32>
    %c0_188 = arith.constant 0 : index
    %c0_189 = arith.constant 0 : index
    %570 = vector.load %arg8[%c0_188, %c0_189] : memref<16x256xf32, #tpu.memory_space<vmem>>, vector<16x256xf32>
    tpu.vector_store %arg8[%c0_188, %c0_189], %569 {strides = array<i32>} : memref<16x256xf32, #tpu.memory_space<vmem>>, vector<16x256xf32>,
    return
  }
  func.func @transform_0(%arg0: i32) -> (i32, i32) {
    %c0_i32 = arith.constant 0 : i32
    %c0_i32_0 = arith.constant 0 : i32
    return %c0_i32, %arg0 : i32, i32
  }
  func.func @transform_1(%arg0: i32) -> (i32, i32) {
    %c0_i32 = arith.constant 0 : i32
    %c0_i32_0 = arith.constant 0 : i32
    %c0_i32_1 = arith.constant 0 : i32
    return %c0_i32, %c0_i32_0 : i32, i32
  }
  func.func @transform_2(%arg0: i32) -> (i32, i32) {
    %c0_i32 = arith.constant 0 : i32
    %c0_i32_0 = arith.constant 0 : i32
    %c0_i32_1 = arith.constant 0 : i32
    return %c0_i32, %c0_i32_0 : i32, i32
  }
  func.func @transform_3(%arg0: i32) -> (i32, i32, i32) {
    %c0_i32 = arith.constant 0 : i32
    %c0_i32_0 = arith.constant 0 : i32
    %c0_i32_1 = arith.constant 0 : i32
    %c0_i32_2 = arith.constant 0 : i32
    return %c0_i32, %c0_i32_0, %c0_i32_1 : i32, i32, i32
  }
  func.func @transform_4(%arg0: i32) -> (i32, i32, i32) {
    %c0_i32 = arith.constant 0 : i32
    %c0_i32_0 = arith.constant 0 : i32
    %c0_i32_1 = arith.constant 0 : i32
    %c0_i32_2 = arith.constant 0 : i32
    return %c0_i32, %c0_i32_0, %c0_i32_1 : i32, i32, i32
  }
  func.func @transform_5(%arg0: i32) -> (i32, i32) {
    %c0_i32 = arith.constant 0 : i32
    %c0_i32_0 = arith.constant 0 : i32
    %c0_i32_1 = arith.constant 0 : i32
    return %c0_i32, %c0_i32_0 : i32, i32
  }
  func.func @transform_6(%arg0: i32) -> (i32, i32) {
    %c0_i32 = arith.constant 0 : i32
    %c0_i32_0 = arith.constant 0 : i32
    %c0_i32_1 = arith.constant 0 : i32
    return %c0_i32, %c0_i32_0 : i32, i32
  }
  func.func @transform_7(%arg0: i32) -> (i32, i32) {
    %c0_i32 = arith.constant 0 : i32
    %c0_i32_0 = arith.constant 0 : i32
    return %c0_i32, %arg0 : i32, i32
  }
}

</mosaic_0001>

<llo_original>
// kernel: tpu_custom_call.1
$region0: #{tpu_custom_call.1}
  #allocation0 [shape = 'u32[]', space=smem, size = 0x4, offset = 0x4, fixed_abs, tag = 'smem constant byte address 0x4 - core index']
  #allocation1 [shape = 'u32[144,128]{1,0:T(1,128)}', space=vmem, size = 0x12000, scoped, tag = 'internal scratch']
  %s0 = inlined_call_operand.vmem [shape: f32[8,512], index: 0, kind: input, shape index: {}]
  %s1 = inlined_call_operand.vmem [shape: f32[256,1], index: 1, kind: input, shape index: {}]
  %s2 = inlined_call_operand.vmem [shape: f32[16,72], index: 2, kind: input, shape index: {}]
  %s3 = inlined_call_operand.vmem [shape: bf16[4,16,144], index: 3, kind: input, shape index: {}]
  %s4 = inlined_call_operand.vmem [shape: f32[3,16,16], index: 4, kind: input, shape index: {}]
  %s5 = inlined_call_operand.vmem [shape: f32[16,18], index: 5, kind: input, shape index: {}]
  %s6 = inlined_call_operand.vmem [shape: f32[3,1], index: 6, kind: input, shape index: {}]
  %s7 = inlined_call_operand.hbm [shape: f32[16,512], index: 7, kind: output, shape index: {}]
  %s8 = sld [smem:[#allocation0]]
  $region65: #{tpu_custom_call.1} parent=0
    _
  %s10 = ssub.s32 1, %s8
  %s11 = scalar_select 0, %s10, %s8
  $region1: #{tpu_custom_call.1} parent=0
    #allocation2 [shape = 'u8[2048]{0}', space=smem, size = 0x800, scoped, tag = 'input window, operand 6, single buffered']
    #allocation3 [shape = 's32[2]{0}', space=sflag, size = 0x8, scoped, tag = 'scoped memory for tpu_custom_call.1']
    #allocation4 [shape = 's32[2]{0}', space=sflag, size = 0x8, scoped, tag = 'scoped memory for tpu_custom_call.1']
    #allocation5 [shape = 'u8[32768]{0}', space=vmem, size = 0x8000, scoped, tag = 'output window, operand 0']
    %12 = vsyncpa [#allocation4], 0
    %13 = vsyncpa [#allocation3], 0
    %s14 = scalar_lea.sflag [#allocation3], 1
    %15 = vsyncpa %s14, 0
    loop: start=0, step=1, limit=4
    $region2: #{tpu_custom_call.1} parent=1 // loop_pre_header
      _
    $region3: #{tpu_custom_call.1} parent=1 // loop_header
      %s17 = sphi 0, %s21
      %p18 = scmp.ge.s32.totalorder %s17, 4
      %s27 = sphi 0, %s29
      %s30 = sphi 0, %s27
      %s31 = sphi 0, %s30
      %s47 = sphi 0, %s31
      %s51 = sphi 0, %s51
      %s53 = sphi 0, %s51
      %s54 = sphi 0, %s53
      %s68 = sphi 0, %s54
      %s72 = sphi 0, %s72
      %s74 = sphi 0, %s72
      %s75 = sphi 0, %s74
      %s89 = sphi 0, %s75
      %s93 = sphi 0, %s93
      %s95 = sphi 0, %s93
      %s96 = sphi 0, %s95
      %s110 = sphi 0, %s96
      %s114 = sphi 0, %s114
      %s116 = sphi 0, %s114
      %s117 = sphi 0, %s116
      %s131 = sphi 0, %s117
      %s135 = sphi 0, %s135
      %s137 = sphi 0, %s135
      %s138 = sphi 0, %s137
      %s152 = sphi 0, %s138
      %s156 = sphi 0, %s156
      %s158 = sphi 0, %s156
      %s159 = sphi 0, %s158
      %s173 = sphi 0, %s159
      %s179 = sphi 0, %s181
      %s182 = sphi 0, %s179
      %s183 = sphi 0, %s182
      %s199 = sphi 0, %s183
    $region4: #{tpu_custom_call.1} parent=1 // loop_header_branch
      %20 = sbr.rel (%p18) target = $region8
    $region5: #{tpu_custom_call.1} parent=1 // loop_body
      %s22 = ssub.s32 %s17, 1
      %s23 = ssub.s32 %s17, 2
      %s24 = sadd.s32 %s17, 1
      %s25 = ssub.s32 %s17, %s24
      %p26 = scmp.eq.s32.totalorder %s25, 0
      %s28 = sadd.s32 %s27, 1
      %s29 = scalar_select %p26, %s27, %s28
      %p32 = pneg %p26
      %p33 = scmp.eq.s32.totalorder %s17, 1
      %p34 = por %p32, %p33
      %p35 = scmp.ne.s32.totalorder %s27, %s30
      %p36 = scmp.eq.s32.totalorder %s17, 0
      %p37 = por %p35, %p36
      %p38 = scmp.ne.s32.totalorder %s27, %s30
      %p39 = scmp.eq.s32.totalorder %s22, 1
      %p40 = por %p38, %p39
      %p41 = scmp.ne.s32.totalorder %s30, %s31
      %p42 = scmp.eq.s32.totalorder %s22, 0
      %p43 = por %p41, %p42
      %p44 = scmp.ne.s32.totalorder %s30, %s31
      %p45 = scmp.eq.s32.totalorder %s23, 1
      %p46 = por %p44, %p45
      %p48 = scmp.ne.s32.totalorder %s31, %s47
      %p49 = scmp.eq.s32.totalorder %s23, 0
      %p50 = por %p48, %p49
      %s52 = sadd.s32 %s51, 1
      %p55 = scmp.eq.s32.totalorder %s17, 1
      %p56 = scmp.ne.s32.totalorder %s51, %s53
      %p57 = scmp.eq.s32.totalorder %s17, 0
      %p58 = por %p56, %p57
      %p59 = scmp.ne.s32.totalorder %s51, %s53
      %p60 = scmp.eq.s32.totalorder %s22, 1
      %p61 = por %p59, %p60
      %p62 = scmp.ne.s32.totalorder %s53, %s54
      %p63 = scmp.eq.s32.totalorder %s22, 0
      %p64 = por %p62, %p63
      %p65 = scmp.ne.s32.totalorder %s53, %s54
      %p66 = scmp.eq.s32.totalorder %s23, 1
      %p67 = por %p65, %p66
      %p69 = scmp.ne.s32.totalorder %s54, %s68
      %p70 = scmp.eq.s32.totalorder %s23, 0
      %p71 = por %p69, %p70
      %s73 = sadd.s32 %s72, 1
      %p76 = scmp.eq.s32.totalorder %s17, 1
      %p77 = scmp.ne.s32.totalorder %s72, %s74
      %p78 = scmp.eq.s32.totalorder %s17, 0
      %p79 = por %p77, %p78
      %p80 = scmp.ne.s32.totalorder %s72, %s74
      %p81 = scmp.eq.s32.totalorder %s22, 1
      %p82 = por %p80, %p81
      %p83 = scmp.ne.s32.totalorder %s74, %s75
      %p84 = scmp.eq.s32.totalorder %s22, 0
      %p85 = por %p83, %p84
      %p86 = scmp.ne.s32.totalorder %s74, %s75
      %p87 = scmp.eq.s32.totalorder %s23, 1
      %p88 = por %p86, %p87
      %p90 = scmp.ne.s32.totalorder %s75, %s89
      %p91 = scmp.eq.s32.totalorder %s23, 0
      %p92 = por %p90, %p91
      %s94 = sadd.s32 %s93, 1
      %p97 = scmp.eq.s32.totalorder %s17, 1
      %p98 = scmp.ne.s32.totalorder %s93, %s95
      %p99 = scmp.eq.s32.totalorder %s17, 0
      %p100 = por %p98, %p99
      %p101 = scmp.ne.s32.totalorder %s93, %s95
      %p102 = scmp.eq.s32.totalorder %s22, 1
      %p103 = por %p101, %p102
      %p104 = scmp.ne.s32.totalorder %s95, %s96
      %p105 = scmp.eq.s32.totalorder %s22, 0
      %p106 = por %p104, %p105
      %p107 = scmp.ne.s32.totalorder %s95, %s96
      %p108 = scmp.eq.s32.totalorder %s23, 1
      %p109 = por %p107, %p108
      %p111 = scmp.ne.s32.totalorder %s96, %s110
      %p112 = scmp.eq.s32.totalorder %s23, 0
      %p113 = por %p111, %p112
      %s115 = sadd.s32 %s114, 1
      %p118 = scmp.eq.s32.totalorder %s17, 1
      %p119 = scmp.ne.s32.totalorder %s114, %s116
      %p120 = scmp.eq.s32.totalorder %s17, 0
      %p121 = por %p119, %p120
      %p122 = scmp.ne.s32.totalorder %s114, %s116
      %p123 = scmp.eq.s32.totalorder %s22, 1
      %p124 = por %p122, %p123
      %p125 = scmp.ne.s32.totalorder %s116, %s117
      %p126 = scmp.eq.s32.totalorder %s22, 0
      %p127 = por %p125, %p126
      %p128 = scmp.ne.s32.totalorder %s116, %s117
      %p129 = scmp.eq.s32.totalorder %s23, 1
      %p130 = por %p128, %p129
      %p132 = scmp.ne.s32.totalorder %s117, %s131
      %p133 = scmp.eq.s32.totalorder %s23, 0
      %p134 = por %p132, %p133
      %s136 = sadd.s32 %s135, 1
      %p139 = scmp.eq.s32.totalorder %s17, 1
      %p140 = scmp.ne.s32.totalorder %s135, %s137
      %p141 = scmp.eq.s32.totalorder %s17, 0
      %p142 = por %p140, %p141
      %p143 = scmp.ne.s32.totalorder %s135, %s137
      %p144 = scmp.eq.s32.totalorder %s22, 1
      %p145 = por %p143, %p144
      %p146 = scmp.ne.s32.totalorder %s137, %s138
      %p147 = scmp.eq.s32.totalorder %s22, 0
      %p148 = por %p146, %p147
      %p149 = scmp.ne.s32.totalorder %s137, %s138
      %p150 = scmp.eq.s32.totalorder %s23, 1
      %p151 = por %p149, %p150
      %p153 = scmp.ne.s32.totalorder %s138, %s152
      %p154 = scmp.eq.s32.totalorder %s23, 0
      %p155 = por %p153, %p154
      %s157 = sadd.s32 %s156, 1
      %p160 = scmp.eq.s32.totalorder %s17, 1
      %p161 = scmp.ne.s32.totalorder %s156, %s158
      %p162 = scmp.eq.s32.totalorder %s17, 0
      %p163 = por %p161, %p162
      %p164 = scmp.ne.s32.totalorder %s156, %s158
      %p165 = scmp.eq.s32.totalorder %s22, 1
      %p166 = por %p164, %p165
      %p167 = scmp.ne.s32.totalorder %s158, %s159
      %p168 = scmp.eq.s32.totalorder %s22, 0
      %p169 = por %p167, %p168
      %p170 = scmp.ne.s32.totalorder %s158, %s159
      %p171 = scmp.eq.s32.totalorder %s23, 1
      %p172 = por %p170, %p171
      %p174 = scmp.ne.s32.totalorder %s159, %s173
      %p175 = scmp.eq.s32.totalorder %s23, 0
      %p176 = por %p174, %p175
      %s177 = ssub.s32 %s17, %s24
      %p178 = scmp.eq.s32.totalorder %s177, 0
      %s180 = sadd.s32 %s179, 1
      %s181 = scalar_select %p178, %s179, %s180
      %p184 = pneg %p178
      %p185 = scmp.eq.s32.totalorder %s17, 1
      %p186 = por %p184, %p185
      %p187 = scmp.ne.s32.totalorder %s179, %s182
      %p188 = scmp.eq.s32.totalorder %s17, 0
      %p189 = por %p187, %p188
      %p190 = scmp.ne.s32.totalorder %s179, %s182
      %p191 = scmp.eq.s32.totalorder %s22, 1
      %p192 = por %p190, %p191
      %p193 = scmp.ne.s32.totalorder %s182, %s183
      %p194 = scmp.eq.s32.totalorder %s22, 0
      %p195 = por %p193, %p194
      %p196 = scmp.ne.s32.totalorder %s182, %s183
      %p197 = scmp.eq.s32.totalorder %s23, 1
      %p198 = por %p196, %p197
      %p200 = scmp.ne.s32.totalorder %s183, %s199
      %p201 = scmp.eq.s32.totalorder %s23, 0
      %p202 = por %p200, %p201
      %p203 = scmp.le.s32.totalorder 1, %s17
      %p204 = scmp.lt.s32.totalorder %s17, 3
      %p205 = pnand %p203, %p204
      %p206 = pneg %p205
      // Predicated region
      $region9: #{tpu_custom_call.1} parent=5 // pred_check
        _
      $region10: #{tpu_custom_call.1} parent=5 // pred_check_branch
        %208 = sbr.rel (%p205) target = $region12
      $region11: #{tpu_custom_call.1} parent=5 // pred_region
        %s209 = ssub.s32 %s17, 1
        // Predicated region
        $region13: #{tpu_custom_call.1} parent=11 // pred_check
          %p210 = pneg %p64
        $region14: #{tpu_custom_call.1} parent=11 // pred_check_branch
          %212 = sbr.rel (%p210) target = $region16
        $region15: #{tpu_custom_call.1} parent=11 // pred_region
          _
        $region16: #{tpu_custom_call.1} parent=11 // pred_fallthru
          _
        // Predicated region
        $region17: #{tpu_custom_call.1} parent=11 // pred_check
          %p213 = pneg %p85
        $region18: #{tpu_custom_call.1} parent=11 // pred_check_branch
          %215 = sbr.rel (%p213) target = $region20
        $region19: #{tpu_custom_call.1} parent=11 // pred_region
          _
        $region20: #{tpu_custom_call.1} parent=11 // pred_fallthru
          _
        // Predicated region
        $region21: #{tpu_custom_call.1} parent=11 // pred_check
          %p216 = pneg %p106
        $region22: #{tpu_custom_call.1} parent=11 // pred_check_branch
          %218 = sbr.rel (%p216) target = $region24
        $region23: #{tpu_custom_call.1} parent=11 // pred_region
          _
        $region24: #{tpu_custom_call.1} parent=11 // pred_fallthru
          _
        // Predicated region
        $region25: #{tpu_custom_call.1} parent=11 // pred_check
          %p219 = pneg %p127
        $region26: #{tpu_custom_call.1} parent=11 // pred_check_branch
          %221 = sbr.rel (%p219) target = $region28
        $region27: #{tpu_custom_call.1} parent=11 // pred_region
          _
        $region28: #{tpu_custom_call.1} parent=11 // pred_fallthru
          _
        // Predicated region
        $region29: #{tpu_custom_call.1} parent=11 // pred_check
          %p222 = pneg %p148
        $region30: #{tpu_custom_call.1} parent=11 // pred_check_branch
          %224 = sbr.rel (%p222) target = $region32
        $region31: #{tpu_custom_call.1} parent=11 // pred_region
          _
        $region32: #{tpu_custom_call.1} parent=11 // pred_fallthru
          _
        // Predicated region
        $region33: #{tpu_custom_call.1} parent=11 // pred_check
          %p225 = pneg %p169
        $region34: #{tpu_custom_call.1} parent=11 // pred_check_branch
          %227 = sbr.rel (%p225) target = $region36
        $region35: #{tpu_custom_call.1} parent=11 // pred_region
          %s229 = ssub.s32 64, 64
          %230 = vsyncadd [#allocation4], %s229
          %s232 = sshll.u32 %s6, 4
          %s233 = int_to_ptr.vmem [resolvable:$true] %s232
          %235 = dma.vmem_to_smem %s233, 64, [#allocation2], [#allocation4]
        $region36: #{tpu_custom_call.1} parent=11 // pred_fallthru
          _
      $region12: #{tpu_custom_call.1} parent=5 // pred_fallthru
        _
      %p236 = scmp.lt.s32.totalorder %s17, 2
      // Predicated region
      $region37: #{tpu_custom_call.1} parent=5 // pred_check
        %p237 = pneg %p236
      $region38: #{tpu_custom_call.1} parent=5 // pred_check_branch
        %239 = sbr.rel (%p237) target = $region40
      $region39: #{tpu_custom_call.1} parent=5 // pred_region
        // Predicated region
        $region41: #{tpu_custom_call.1} parent=39 // pred_check
          %p240 = pneg %p37
        $region42: #{tpu_custom_call.1} parent=39 // pred_check_branch
          %242 = sbr.rel (%p240) target = $region44
        $region43: #{tpu_custom_call.1} parent=39 // pred_region
          %s243 = smul.u32 2, %s17
          %p244 = scmp.lt.s32.totalorder %s243, 3
          %s245 = scalar_select %p244, %s243, 3
          %s246 = smul.addr %s245, 8
          %s247 = scalar_lea.vmem %s0, %s246
          %s248 = smul.u32 2, %s17
        $region44: #{tpu_custom_call.1} parent=39 // pred_fallthru
          _
      $region40: #{tpu_custom_call.1} parent=5 // pred_fallthru
        _
      %p249 = scmp.le.s32.totalorder 1, %s17
      %p250 = scmp.lt.s32.totalorder %s17, 3
      %p251 = pnand %p249, %p250
      %p252 = pneg %p251
      // Predicated region
      $region45: #{tpu_custom_call.1} parent=5 // pred_check
        _
      $region46: #{tpu_custom_call.1} parent=5 // pred_check_branch
        %254 = sbr.rel (%p251) target = $region48
      $region47: #{tpu_custom_call.1} parent=5 // pred_region
        %s255 = ssub.s32 %s17, 1
        // Predicated region
        $region49: #{tpu_custom_call.1} parent=47 // pred_check
          %p256 = pneg %p169
        $region50: #{tpu_custom_call.1} parent=47 // pred_check_branch
          %258 = sbr.rel (%p256) target = $region52
        $region51: #{tpu_custom_call.1} parent=47 // pred_region
          %259 = dma.done [#allocation4], 64
        $region52: #{tpu_custom_call.1} parent=47 // pred_fallthru
          _
        %260 = sfence
        %s261 = smul.u32 2, %s22
        %p262 = scmp.lt.s32.totalorder %s261, 3
        %s263 = scalar_select %p262, %s261, 3
        %s264 = smul.addr %s263, 8
        %s265 = scalar_lea.vmem %s0, %s264
        %p266 = pneg %p43
        %p267 = pneg %p40
        %p268 = pneg %p64
        %p269 = pneg %p61
        %p270 = pneg %p85
        %p271 = pneg %p82
        %p272 = pneg %p106
        %p273 = pneg %p103
        %p274 = pneg %p127
        %p275 = pneg %p124
        %p276 = pneg %p148
        %p277 = pneg %p145
        %p278 = pneg %p169
        %p279 = pneg %p166
        %p280 = pneg %p195
        %p281 = pneg %p192
        %s282 = sand.u32 %s182, 1
        %s283 = scalar_lea.sflag [#allocation3], %s282
        %s284 = sand.u32 %s182, 1
        %s285 = smul.addr %s284, 32
        %s286 = scalar_lea.vmem [#allocation5], %s285
        %s287 = smul.u32 2, %s22
        %p288 = scmp.lt.s32.totalorder %s287, 3
        %s289 = scalar_select %p288, %s287, 3
        %s290 = smul.addr %s289, 8
        %s291 = scalar_lea.vmem %s0, %s290
        %s292 = smul.u32 2, %s22
        %s293 = smul.u32 2, %s22
        %v295 = vlaneseq
        %v296 = vand.u32 %v295, 127
        %v297 = vadd.s32 %v296, 128
        %vm298 = vcmp.lt.s32.totalorder %v296, 0
        %v299 = vsub.s32 0, %v296
        %v300 = vsel %vm298, %v299, %v296
        %v301 = vshrl.u32 %v300, 4
        %v302 = vand.u32 %v300, 15
        %v303 = vsub.s32 0, %v302
        %v304 = vsel %vm298, %v303, %v302
        %vm305 = vcmp.lt.s32.totalorder %v297, 0
        %v306 = vsub.s32 0, %v297
        %v307 = vsel %vm305, %v306, %v297
        %v308 = vshrl.u32 %v307, 4
        %v309 = vand.u32 %v307, 15
        %v310 = vsub.s32 0, %v309
        %v311 = vsel %vm305, %v310, %v309
        %vm312 = vcmp.ne.s32.totalorder %v304, 0
        %vm313 = vcmp.ne.s32.totalorder %v311, 0
        %vm314 = vcmp.lt.s32.totalorder %v304, 0
        %vm315 = vcmp.lt.s32.totalorder %v311, 0
        %vm316 = vmand %vm314, %vm312
        %vm317 = vmand %vm315, %vm313
        %v318 = vadd.s32 %v304, 16
        %v319 = vadd.s32 %v311, 16
        %v320 = vsel %vm316, %v318, %v304
        %v321 = vsel %vm317, %v319, %v311
        %vm322 = vcmp.lt.s32.totalorder %v320, 15
        %vm323 = vcmp.lt.s32.totalorder %v321, 15
        %vm324 = vcmp.lt.s32.totalorder %v320, 1
        %vm325 = vcmp.lt.s32.totalorder %v321, 1
        %v326 = vlaneseq
        %v327 = vshrl.u32 %v326, 7
        %v328 = vadd.s32 %v327, 8
        %vm329 = vcmp.lt.s32.totalorder %v327, 7
        %vm330 = vcmp.lt.s32.totalorder %v328, 7
        %v331 = vld [vmem:[%s1] sm:$0xff]
        %v332 = vld [vmem:[%s1 + $0x8] sm:$0xff]
        %v333 = vld [vmem:[%s1 + $0x10] sm:$0xff]
        %v334 = vld [vmem:[%s1 + $0x18] sm:$0xff]
        %v335 = vld [vmem:[%s1 + $0x20] sm:$0xff]
        %v336 = vld [vmem:[%s1 + $0x28] sm:$0xff]
        %v337 = vld [vmem:[%s1 + $0x30] sm:$0xff]
        %v338 = vld [vmem:[%s1 + $0x38] sm:$0xff]
        %v339 = vld [vmem:[%s1 + $0x40] sm:$0xff]
        %v340 = vld [vmem:[%s1 + $0x48] sm:$0xff]
        %v341 = vld [vmem:[%s1 + $0x50] sm:$0xff]
        %v342 = vld [vmem:[%s1 + $0x58] sm:$0xff]
        %v343 = vld [vmem:[%s1 + $0x60] sm:$0xff]
        %v344 = vld [vmem:[%s1 + $0x68] sm:$0xff]
        %v345 = vld [vmem:[%s1 + $0x70] sm:$0xff]
        %v346 = vld [vmem:[%s1 + $0x78] sm:$0xff]
        %v347 = vld [vmem:[%s1 + $0x80] sm:$0xff]
        %v348 = vld [vmem:[%s1 + $0x88] sm:$0xff]
        %v349 = vld [vmem:[%s1 + $0x90] sm:$0xff]
        %v350 = vld [vmem:[%s1 + $0x98] sm:$0xff]
        %v351 = vld [vmem:[%s1 + $0xa0] sm:$0xff]
        %v352 = vld [vmem:[%s1 + $0xa8] sm:$0xff]
        %v353 = vld [vmem:[%s1 + $0xb0] sm:$0xff]
        %v354 = vld [vmem:[%s1 + $0xb8] sm:$0xff]
        %v355 = vld [vmem:[%s1 + $0xc0] sm:$0xff]
        %v356 = vld [vmem:[%s1 + $0xc8] sm:$0xff]
        %v357 = vld [vmem:[%s1 + $0xd0] sm:$0xff]
        %v358 = vld [vmem:[%s1 + $0xd8] sm:$0xff]
        %v359 = vld [vmem:[%s1 + $0xe0] sm:$0xff]
        %v360 = vld [vmem:[%s1 + $0xe8] sm:$0xff]
        %v361 = vld [vmem:[%s1 + $0xf0] sm:$0xff]
        %v362 = vld [vmem:[%s1 + $0xf8] sm:$0xff]
        %v363 = vld [vmem:[%s5] sm:$0xff]
        %v364 = vld [vmem:[%s5 + $0x8] sm:$0xff]
        %v365 = vld [vmem:[%s291] sm:$0xff]
        %v366 = vld [vmem:[%s291 + $0x8] sm:$0xff]
        %v367 = vld [vmem:[%s2] sm:$0xff]
        %v368 = vld [vmem:[%s2 + $0x8] sm:$0xff]
        %369 = vrot.lane.b32.xlu0 %v365, 15
        %v370 = vpop.permute.xlu0 %369
        %371 = vrot.lane.b32.xlu0 %v366, 15
        %v372 = vpop.permute.xlu0 %371
        %vm373 = vcmp.lt.s32.totalorder %v296, 15
        %v374 = vsel %vm373, %v370, %v372
        %v375 = vsel %vm373, %v372, %v370
        %376 = vrot.lane.b32.xlu0 %v365, 127
        %v377 = vpop.permute.xlu0 %376
        %378 = vrot.lane.b32.xlu0 %v366, 127
        %v379 = vpop.permute.xlu0 %378
        %vm380 = vcmp.lt.s32.totalorder %v296, 127
        %v381 = vsel %vm380, %v377, %v379
        %v382 = vsel %vm380, %v379, %v377
        %v383 = vsel %vm322, 1, 0
        %v384 = vsel %vm323, 1, 0
        %vm385 = vcmp.eq.s32.totalorder %v383, 1
        %vm386 = vcmp.eq.s32.totalorder %v384, 1
        %v387 = vsel %vm385, %v381, %v375
        %v388 = vsel %vm386, %v382, %v374
        %389 = vrot.lane.b32.xlu0 %v365, 1
        %v390 = vpop.permute.xlu0 %389
        %391 = vrot.lane.b32.xlu0 %v366, 1
        %v392 = vpop.permute.xlu0 %391
        %vm393 = vcmp.lt.s32.totalorder %v296, 1
        %v394 = vsel %vm393, %v390, %v392
        %v395 = vsel %vm393, %v392, %v390
        %396 = vrot.lane.b32.xlu0 %v365, 113
        %v397 = vpop.permute.xlu0 %396
        %398 = vrot.lane.b32.xlu0 %v366, 113
        %v399 = vpop.permute.xlu0 %398
        %vm400 = vcmp.lt.s32.totalorder %v296, 113
        %v401 = vsel %vm400, %v397, %v399
        %v402 = vsel %vm400, %v399, %v397
        %v403 = vsel %vm324, 1, 0
        %v404 = vsel %vm325, 1, 0
        %vm405 = vcmp.eq.s32.totalorder %v403, 1
        %vm406 = vcmp.eq.s32.totalorder %v404, 1
        %v407 = vsel %vm405, %v401, %v395
        %v408 = vsel %vm406, %v402, %v394
        %409 = vrot.lane.b32.xlu0 %v407, 16
        %v410 = vpop.permute.xlu0 %409
        %411 = vrot.lane.b32.xlu0 %v408, 16
        %v412 = vpop.permute.xlu0 %411
        %vm413 = vcmp.lt.s32.totalorder %v296, 16
        %v414 = vsel %vm413, %v410, %v412
        %v415 = vsel %vm413, %v412, %v410
        %416 = vrot.lane.b32.xlu0 %v365, 16
        %v417 = vpop.permute.xlu0 %416
        %418 = vrot.lane.b32.xlu0 %v366, 16
        %v419 = vpop.permute.xlu0 %418
        %v420 = vsel %vm413, %v417, %v419
        %v421 = vsel %vm413, %v419, %v417
        %422 = vrot.lane.b32.xlu0 %v387, 16
        %v423 = vpop.permute.xlu0 %422
        %424 = vrot.lane.b32.xlu0 %v388, 16
        %v425 = vpop.permute.xlu0 %424
        %v426 = vsel %vm413, %v423, %v425
        %v427 = vsel %vm413, %v425, %v423
        %428 = vrot.lane.b32.xlu0 %v407, 112
        %v429 = vpop.permute.xlu0 %428
        %430 = vrot.lane.b32.xlu0 %v408, 112
        %v431 = vpop.permute.xlu0 %430
        %vm432 = vcmp.lt.s32.totalorder %v296, 112
        %v433 = vsel %vm432, %v429, %v431
        %v434 = vsel %vm432, %v431, %v429
        %435 = vrot.lane.b32.xlu0 %v365, 112
        %v436 = vpop.permute.xlu0 %435
        %437 = vrot.lane.b32.xlu0 %v366, 112
        %v438 = vpop.permute.xlu0 %437
        %v439 = vsel %vm432, %v436, %v438
        %v440 = vsel %vm432, %v438, %v436
        %441 = vrot.lane.b32.xlu0 %v387, 112
        %v442 = vpop.permute.xlu0 %441
        %443 = vrot.lane.b32.xlu0 %v388, 112
        %v444 = vpop.permute.xlu0 %443
        %v445 = vsel %vm432, %v442, %v444
        %v446 = vsel %vm432, %v444, %v442
        %448 = vset.pattern.permute.xlu0 10
        %449 = vperm.xlu0 %448, %v363
        %v450 = vpop.permute.xlu0 %449
        %453 = vset.pattern.permute.xlu0 10
        %454 = vperm.xlu0 %453, %v364
        %v455 = vpop.permute.xlu0 %454
        %vm457 = vcmask 588800
        %v459 = vsel %vm457, %v367, 0
        %v462 = vsel %vm457, %v368, 0
        %464 = vmatprep.subr.mxu0 %v414
        %465 = vmatpush1.msra.mxu0 %v415
        %466 = vmatprep.subr.mxu0 %v420
        %467 = vmatpush1.msra.mxu0 %v421
        %468 = vmatprep.subr.mxu0 %v426
        %469 = vmatpush1.msra.mxu0 %v427
        %470 = vmatprep.subr.mxu0 %v408
        %471 = vmatpush1.msra.mxu0 %v407
        %472 = vmatprep.subr.mxu0 %v366
        %473 = vmatpush1.msra.mxu0 %v365
        %474 = vmatprep.subr.mxu0 %v388
        %475 = vmatpush1.msra.mxu0 %v387
        %476 = vmatprep.subr.mxu0 %v434
        %477 = vmatpush1.msra.mxu0 %v433
        %478 = vmatprep.subr.mxu0 %v440
        %479 = vmatpush1.msra.mxu0 %v439
        %480 = vmatprep.subr.mxu0 %v446
        %481 = vmatpush1.msra.mxu0 %v445
        %482 = vmatprep.subr.mxu0 0.0
        %483 = vmatpush1.msra.mxu0 0.0
        %484 = vmatprep.subr.mxu0 0.0
        %485 = vmatpush1.msra.mxu0 0.0
        %486 = vmatprep.subr.mxu0 0.0
        %487 = vmatpush1.msra.mxu0 0.0
        %488 = vmatprep.subr.mxu0 0.0
        %489 = vmatpush1.msra.mxu0 0.0
        %490 = vmatprep.subr.mxu0 0.0
        %491 = vmatpush1.msra.mxu0 0.0
        %492 = vmatprep.subr.mxu0 0.0
        %493 = vmatpush1.msra.mxu0 0.0
        %494 = vmatprep.subr.mxu0 0.0
        %495 = vmatpush1.msra.mxu0 0.0
        %496 = vmatprep.subr.mxu0 0.0
        %497 = vmatpush1.msra.mxu0 0.0
        %498 = vmatprep.subr.mxu0 0.0
        %499 = vmatpush1.msra.mxu0 0.0
        %500 = vmatprep.subr.mxu0 0.0
        %501 = vmatpush1.msra.mxu0 0.0
        %502 = vmatprep.subr.mxu0 0.0
        %503 = vmatpush1.msra.mxu0 0.0
        %504 = vmatprep.subr.mxu0 0.0
        %505 = vmatpush1.msra.mxu0 0.0
        %506 = vmatprep.subr.mxu0 0.0
        %507 = vmatpush1.msra.mxu0 0.0
        %508 = vmatprep.subr.mxu0 0.0
        %509 = vmatpush1.msra.mxu0 0.0
        %510 = vmatprep.subr.mxu0 0.0
        %511 = vmatpush1.msra.mxu0 0.0
        %512 = vmatprep.subr.mxu0 0.0
        %513 = vmatpush1.msra.mxu0 0.0
        %514 = vmatprep.subr.mxu0 0.0
        %515 = vmatpush1.msra.mxu0 0.0
        %516 = vmatprep.subr.mxu0 0.0
        %517 = vmatpush1.msra.mxu0 0.0
        %518 = vmatprep.subr.mxu0 0.0
        %519 = vmatpush1.msra.mxu0 0.0
        %520 = vmatprep.subr.mxu0 0.0
        %521 = vmatpush1.msra.mxu0 0.0
        %522 = vmatprep.subr.mxu0 0.0
        %523 = vmatpush1.msra.mxu0 0.0
        %524 = vmatprep.subr.mxu0 0.0
        %525 = vmatpush1.msra.mxu0 0.0
        %526 = vmatprep.subr.mxu0 0.0
        %527 = vmatpush1.msra.mxu0 0.0
        %528 = vmatprep.mubr.f32.mxu0 0.0
        %529 = vmatmul.mubr.f32.gmra.mrb[0].mxu0 %v459
        %v530 = vpop.f32.mrb[0].mxu0
        %v531 = vadd.f32 %v450, %v530
        %v532 = vpop.f32.mrb[0].mxu0
        %v533 = vadd.f32 %v450, %v532
        %534 = vmatprep.mubr.f32.mxu0 0.0
        %535 = vmatmul.mubr.f32.gmra.mrb[0].mxu0 %v462
        %v536 = vpop.f32.mrb[0].mxu0
        %v537 = vadd.f32 %v455, %v536
        %v538 = vpop.f32.mrb[0].mxu0
        %v539 = vadd.f32 %v455, %v538
        %540 = vdwg.mxu0
        %v541 = vmul.f32 %v531, %v531
        %v542 = vmul.f32 %v533, %v533
        %v543 = vmul.f32 %v537, %v537
        %v544 = vmul.f32 %v539, %v539
        %545 = vmatprep.subr.mxu0 0.0
        %546 = vmatpush1.msra.mxu0 %v331
        %547 = vmatprep.subr.mxu0 0.0
        %548 = vmatpush1.msra.mxu0 %v332
        %549 = vmatprep.subr.mxu0 0.0
        %550 = vmatpush1.msra.mxu0 %v333
        %551 = vmatprep.subr.mxu0 0.0
        %552 = vmatpush1.msra.mxu0 %v334
        %553 = vmatprep.subr.mxu0 0.0
        %554 = vmatpush1.msra.mxu0 %v335
        %555 = vmatprep.subr.mxu0 0.0
        %556 = vmatpush1.msra.mxu0 %v336
        %557 = vmatprep.subr.mxu0 0.0
        %558 = vmatpush1.msra.mxu0 %v337
        %559 = vmatprep.subr.mxu0 0.0
        %560 = vmatpush1.msra.mxu0 %v338
        %561 = vmatprep.subr.mxu0 0.0
        %562 = vmatpush1.msra.mxu0 %v339
        %563 = vmatprep.subr.mxu0 0.0
        %564 = vmatpush1.msra.mxu0 %v340
        %565 = vmatprep.subr.mxu0 0.0
        %566 = vmatpush1.msra.mxu0 %v341
        %567 = vmatprep.subr.mxu0 0.0
        %568 = vmatpush1.msra.mxu0 %v342
        %569 = vmatprep.subr.mxu0 0.0
        %570 = vmatpush1.msra.mxu0 %v343
        %571 = vmatprep.subr.mxu0 0.0
        %572 = vmatpush1.msra.mxu0 %v344
        %573 = vmatprep.subr.mxu0 0.0
        %574 = vmatpush1.msra.mxu0 %v345
        %575 = vmatprep.subr.mxu0 0.0
        %576 = vmatpush1.msra.mxu0 %v346
        %577 = vmatprep.subr.mxu0 0.0
        %578 = vmatpush1.msra.mxu0 %v347
        %579 = vmatprep.subr.mxu0 0.0
        %580 = vmatpush1.msra.mxu0 %v348
        %581 = vmatprep.subr.mxu0 0.0
        %582 = vmatpush1.msra.mxu0 %v349
        %583 = vmatprep.subr.mxu0 0.0
        %584 = vmatpush1.msra.mxu0 %v350
        %585 = vmatprep.subr.mxu0 0.0
        %586 = vmatpush1.msra.mxu0 %v351
        %587 = vmatprep.subr.mxu0 0.0
        %588 = vmatpush1.msra.mxu0 %v352
        %589 = vmatprep.subr.mxu0 0.0
        %590 = vmatpush1.msra.mxu0 %v353
        %591 = vmatprep.subr.mxu0 0.0
        %592 = vmatpush1.msra.mxu0 %v354
        %593 = vmatprep.subr.mxu0 0.0
        %594 = vmatpush1.msra.mxu0 %v355
        %595 = vmatprep.subr.mxu0 0.0
        %596 = vmatpush1.msra.mxu0 %v356
        %597 = vmatprep.subr.mxu0 0.0
        %598 = vmatpush1.msra.mxu0 %v357
        %599 = vmatprep.subr.mxu0 0.0
        %600 = vmatpush1.msra.mxu0 %v358
        %601 = vmatprep.subr.mxu0 0.0
        %602 = vmatpush1.msra.mxu0 %v359
        %603 = vmatprep.subr.mxu0 0.0
        %604 = vmatpush1.msra.mxu0 %v360
        %605 = vmatprep.subr.mxu0 0.0
        %606 = vmatpush1.msra.mxu0 %v361
        %607 = vmatprep.subr.mxu0 0.0
        %608 = vmatpush1.msra.mxu0 %v362
        %609 = vmatprep.mubr.f32.mxu0 %v533
        %610 = vmatmul.mubr.f32.gmra.mrb[0].mxu0 %v531
        %v611 = vpop.f32.mrb[0].mxu0
        %v612 = vadd.f32 0.0, %v611
        %v613 = vpop.f32.mrb[0].mxu0
        %614 = vmatprep.mubr.f32.mxu0 %v539
        %615 = vmatmul.mubr.f32.gmra.mrb[0].mxu0 %v537
        %v616 = vpop.f32.mrb[0].mxu0
        %v617 = vadd.f32 0.0, %v616
        %v618 = vpop.f32.mrb[0].mxu0
        %619 = vmatprep.mubr.f32.mxu0 %v542
        %620 = vmatmul.mubr.f32.gmra.mrb[0].mxu0 %v541
        %v621 = vpop.f32.mrb[0].mxu0
        %v622 = vadd.f32 0.0, %v621
        %v623 = vpop.f32.mrb[0].mxu0
        %624 = vmatprep.mubr.f32.mxu0 %v544
        %625 = vmatmul.mubr.f32.gmra.mrb[0].mxu0 %v543
        %v626 = vpop.f32.mrb[0].mxu0
        %v627 = vadd.f32 0.0, %v626
        %v628 = vpop.f32.mrb[0].mxu0
        %629 = vdwg.mxu0
        %v630 = vsel %vm329, %v612, 0.0
        %v631 = vsel %vm330, %v617, 0.0
        %vm632 = vcmask 7168
        %v633 = vsel %vm632, %v630, 0.0
        %v634 = vsel %vm632, %v631, 0.0
        %v635 = vadd.f32 %v633, %v634
        %v636 = vrot.slane %v635, 4
        %v637 = vadd.f32 %v635, %v636
        %v638 = vrot.slane %v637, 2
        %v639 = vadd.f32 %v637, %v638
        %v640 = vrot.slane %v639, 1
        %v641 = vadd.f32 %v639, %v640
        %v642 = vsel %vm329, %v622, 0.0
        %v643 = vsel %vm330, %v627, 0.0
        %v644 = vsel %vm632, %v642, 0.0
        %v645 = vsel %vm632, %v643, 0.0
        %v646 = vadd.f32 %v644, %v645
        %v647 = vrot.slane %v646, 4
        %v648 = vadd.f32 %v646, %v647
        %v649 = vrot.slane %v648, 2
        %v650 = vadd.f32 %v648, %v649
        %v651 = vrot.slane %v650, 1
        %v652 = vadd.f32 %v650, %v651
        %v653 = vsel %vm632, %v612, 0.0
        %v654 = vsel %vm632, %v617, 0.0
        %v655 = vadd.f32 %v653, %v654
        %v656 = vrot.slane %v655, 4
        %v657 = vadd.f32 %v655, %v656
        %v658 = vrot.slane %v657, 2
        %v659 = vadd.f32 %v657, %v658
        %v660 = vrot.slane %v659, 1
        %v661 = vadd.f32 %v659, %v660
        %v662 = vsub.f32 %v661, %v641
        %v663 = vsel %vm632, %v622, 0.0
        %v664 = vsel %vm632, %v627, 0.0
        %v665 = vadd.f32 %v663, %v664
        %v666 = vrot.slane %v665, 4
        %v667 = vadd.f32 %v665, %v666
        %v668 = vrot.slane %v667, 2
        %v669 = vadd.f32 %v667, %v668
        %v670 = vrot.slane %v669, 1
        %v671 = vadd.f32 %v669, %v670
        %v672 = vsub.f32 %v671, %v652
        %v673 = vmul.f32 %v641, 0.00055803574
        %v674 = vmul.f32 %v662, 0.00055803574
        %v675 = vmul.f32 %v652, 0.00055803574
        %v676 = vmul.f32 %v673, %v673
        %v677 = vsub.f32 %v675, %v676
        %v678 = vmax.f32 %v677, 0.0
        %v679 = vadd.f32 %v678, 1e-05
        %v680 = vrsqrt.pop %v679
        %v681 = vmul.f32 %v672, 0.00055803574
        %v682 = vmul.f32 %v674, %v674
        %v683 = vsub.f32 %v681, %v682
        %v684 = vmax.f32 %v683, 0.0
        %v685 = vadd.f32 %v684, 1e-05
        %v686 = vrsqrt.pop %v685
        %v687 = vsel %vm329, %v673, %v674
        %v688 = vsel %vm330, %v673, %v674
        %v689 = vsel %vm329, %v680, %v686
        %v690 = vsel %vm330, %v680, %v686
        %v691 = vmul.f32 %v689, %v363
        %v692 = vmul.f32 %v690, %v364
        %v693 = vmul.f32 %v687, %v691
        %v694 = vmul.f32 %v688, %v692
        %697 = vrot.lane.b32.xlu0 %v693, 5
        %v698 = vpop.permute.xlu0 %697
        %699 = vrot.lane.b32.xlu0 %v694, 5
        %v700 = vpop.permute.xlu0 %699
        %v703 = vsub.f32 %v363, %v698
        %v704 = vsub.f32 %v364, %v700
        %706 = vset.pattern.permute.xlu0 0
        %707 = vperm.xlu0 %706, %v691
        %v708 = vpop.permute.xlu0 %707
        %711 = vset.pattern.permute.xlu0 0
        %712 = vperm.xlu0 %711, %v692
        %v713 = vpop.permute.xlu0 %712
        %v715 = vmul.f32 %v531, %v708
        %v716 = vmul.f32 %v533, %v708
        %v717 = vmul.f32 %v537, %v713
        %v718 = vmul.f32 %v539, %v713
        %720 = vset.pattern.permute.xlu0 5
        %721 = vperm.xlu0 %720, %v703
        %v722 = vpop.permute.xlu0 %721
        %725 = vset.pattern.permute.xlu0 5
        %726 = vperm.xlu0 %725, %v704
        %v727 = vpop.permute.xlu0 %726
        %v729 = vadd.f32 %v715, %v722
        %v730 = vadd.f32 %v716, %v722
        %v731 = vadd.f32 %v717, %v727
        %v732 = vadd.f32 %v718, %v727
        %v733 = vmul.f32 %v729, 0.5
        %v734 = vmul.f32 %v730, 0.5
        %v735 = vmul.f32 %v731, 0.5
        %v736 = vmul.f32 %v732, 0.5
        %v737 = vmul.f32 %v729, 0.044715
        %v738 = vmul.f32 %v730, 0.044715
        %v739 = vmul.f32 %v731, 0.044715
        %v740 = vmul.f32 %v732, 0.044715
        %v741 = vmul.f32 %v737, %v729
        %v742 = vmul.f32 %v738, %v730
        %v743 = vmul.f32 %v739, %v731
        %v744 = vmul.f32 %v740, %v732
        %v745 = vmul.f32 %v741, %v729
        %v746 = vmul.f32 %v742, %v730
        %v747 = vmul.f32 %v743, %v731
        %v748 = vmul.f32 %v744, %v732
        %v749 = vadd.f32 %v729, %v745
        %v750 = vadd.f32 %v730, %v746
        %v751 = vadd.f32 %v731, %v747
        %v752 = vadd.f32 %v732, %v748
        %v753 = vmul.f32 %v749, 0.7978846
        %v754 = vmul.f32 %v750, 0.7978846
        %v755 = vmul.f32 %v751, 0.7978846
        %v756 = vmul.f32 %v752, 0.7978846
        %v757 = vtanh.pop %v753
        %v758 = vtanh.pop %v754
        %v759 = vtanh.pop %v755
        %v760 = vtanh.pop %v756
        %v761 = vadd.f32 %v757, 1.0
        %v762 = vadd.f32 %v758, 1.0
        %v763 = vadd.f32 %v759, 1.0
        %v764 = vadd.f32 %v760, 1.0
        %v765 = vmul.f32 %v733, %v761
        %v766 = vmul.f32 %v734, %v762
        %v767 = vmul.f32 %v735, %v763
        %v768 = vmul.f32 %v736, %v764
        %v769 = vmul.f32 %v765, %v765
        %v770 = vmul.f32 %v766, %v766
        %v771 = vmul.f32 %v767, %v767
        %v772 = vmul.f32 %v768, %v768
        %773 = vmatprep.subr.mxu0 0.0
        %774 = vmatpush1.msra.mxu0 %v331
        %775 = vmatprep.subr.mxu0 0.0
        %776 = vmatpush1.msra.mxu0 %v332
        %777 = vmatprep.subr.mxu0 0.0
        %778 = vmatpush1.msra.mxu0 %v333
        %779 = vmatprep.subr.mxu0 0.0
        %780 = vmatpush1.msra.mxu0 %v334
        %781 = vmatprep.subr.mxu0 0.0
        %782 = vmatpush1.msra.mxu0 %v335
        %783 = vmatprep.subr.mxu0 0.0
        %784 = vmatpush1.msra.mxu0 %v336
        %785 = vmatprep.subr.mxu0 0.0
        %786 = vmatpush1.msra.mxu0 %v337
        %787 = vmatprep.subr.mxu0 0.0
        %788 = vmatpush1.msra.mxu0 %v338
        %789 = vmatprep.subr.mxu0 0.0
        %790 = vmatpush1.msra.mxu0 %v339
        %791 = vmatprep.subr.mxu0 0.0
        %792 = vmatpush1.msra.mxu0 %v340
        %793 = vmatprep.subr.mxu0 0.0
        %794 = vmatpush1.msra.mxu0 %v341
        %795 = vmatprep.subr.mxu0 0.0
        %796 = vmatpush1.msra.mxu0 %v342
        %797 = vmatprep.subr.mxu0 0.0
        %798 = vmatpush1.msra.mxu0 %v343
        %799 = vmatprep.subr.mxu0 0.0
        %800 = vmatpush1.msra.mxu0 %v344
        %801 = vmatprep.subr.mxu0 0.0
        %802 = vmatpush1.msra.mxu0 %v345
        %803 = vmatprep.subr.mxu0 0.0
        %804 = vmatpush1.msra.mxu0 %v346
        %805 = vmatprep.subr.mxu0 0.0
        %806 = vmatpush1.msra.mxu0 %v347
        %807 = vmatprep.subr.mxu0 0.0
        %808 = vmatpush1.msra.mxu0 %v348
        %809 = vmatprep.subr.mxu0 0.0
        %810 = vmatpush1.msra.mxu0 %v349
        %811 = vmatprep.subr.mxu0 0.0
        %812 = vmatpush1.msra.mxu0 %v350
        %813 = vmatprep.subr.mxu0 0.0
        %814 = vmatpush1.msra.mxu0 %v351
        %815 = vmatprep.subr.mxu0 0.0
        %816 = vmatpush1.msra.mxu0 %v352
        %817 = vmatprep.subr.mxu0 0.0
        %818 = vmatpush1.msra.mxu0 %v353
        %819 = vmatprep.subr.mxu0 0.0
        %820 = vmatpush1.msra.mxu0 %v354
        %821 = vmatprep.subr.mxu0 0.0
        %822 = vmatpush1.msra.mxu0 %v355
        %823 = vmatprep.subr.mxu0 0.0
        %824 = vmatpush1.msra.mxu0 %v356
        %825 = vmatprep.subr.mxu0 0.0
        %826 = vmatpush1.msra.mxu0 %v357
        %827 = vmatprep.subr.mxu0 0.0
        %828 = vmatpush1.msra.mxu0 %v358
        %829 = vmatprep.subr.mxu0 0.0
        %830 = vmatpush1.msra.mxu0 %v359
        %831 = vmatprep.subr.mxu0 0.0
        %832 = vmatpush1.msra.mxu0 %v360
        %833 = vmatprep.subr.mxu0 0.0
        %834 = vmatpush1.msra.mxu0 %v361
        %835 = vmatprep.subr.mxu0 0.0
        %836 = vmatpush1.msra.mxu0 %v362
        %837 = vmatprep.mubr.f32.mxu0 %v766
        %838 = vmatmul.mubr.f32.gmra.mrb[0].mxu0 %v765
        %v839 = vpop.f32.mrb[0].mxu0
        %v840 = vadd.f32 0.0, %v839
        %v841 = vpop.f32.mrb[0].mxu0
        %842 = vmatprep.mubr.f32.mxu0 %v768
        %843 = vmatmul.mubr.f32.gmra.mrb[0].mxu0 %v767
        %v844 = vpop.f32.mrb[0].mxu0
        %v845 = vadd.f32 0.0, %v844
        %v846 = vpop.f32.mrb[0].mxu0
        %847 = vmatprep.mubr.f32.mxu0 %v770
        %848 = vmatmul.mubr.f32.gmra.mrb[0].mxu0 %v769
        %v849 = vpop.f32.mrb[0].mxu0
        %v850 = vadd.f32 0.0, %v849
        %v851 = vpop.f32.mrb[0].mxu0
        %852 = vmatprep.mubr.f32.mxu0 %v772
        %853 = vmatmul.mubr.f32.gmra.mrb[0].mxu0 %v771
        %v854 = vpop.f32.mrb[0].mxu0
        %v855 = vadd.f32 0.0, %v854
        %v856 = vpop.f32.mrb[0].mxu0
        %857 = vdwg.mxu0
        %v858 = vsel %vm329, %v840, 0.0
        %v859 = vsel %vm330, %v845, 0.0
        %v860 = vsel %vm632, %v858, 0.0
        %v861 = vsel %vm632, %v859, 0.0
        %v862 = vadd.f32 %v860, %v861
        %v863 = vrot.slane %v862, 4
        %v864 = vadd.f32 %v862, %v863
        %v865 = vrot.slane %v864, 2
        %v866 = vadd.f32 %v864, %v865
        %v867 = vrot.slane %v866, 1
        %v868 = vadd.f32 %v866, %v867
        %v869 = vsel %vm329, %v850, 0.0
        %v870 = vsel %vm330, %v855, 0.0
        %v871 = vsel %vm632, %v869, 0.0
        %v872 = vsel %vm632, %v870, 0.0
        %v873 = vadd.f32 %v871, %v872
        %v874 = vrot.slane %v873, 4
        %v875 = vadd.f32 %v873, %v874
        %v876 = vrot.slane %v875, 2
        %v877 = vadd.f32 %v875, %v876
        %v878 = vrot.slane %v877, 1
        %v879 = vadd.f32 %v877, %v878
        %v880 = vsel %vm632, %v840, 0.0
        %v881 = vsel %vm632, %v845, 0.0
        %v882 = vadd.f32 %v880, %v881
        %v883 = vrot.slane %v882, 4
        %v884 = vadd.f32 %v882, %v883
        %v885 = vrot.slane %v884, 2
        %v886 = vadd.f32 %v884, %v885
        %v887 = vrot.slane %v886, 1
        %v888 = vadd.f32 %v886, %v887
        %v889 = vsub.f32 %v888, %v868
        %v890 = vsel %vm632, %v850, 0.0
        %v891 = vsel %vm632, %v855, 0.0
        %v892 = vadd.f32 %v890, %v891
        %v893 = vrot.slane %v892, 4
        %v894 = vadd.f32 %v892, %v893
        %v895 = vrot.slane %v894, 2
        %v896 = vadd.f32 %v894, %v895
        %v897 = vrot.slane %v896, 1
        %v898 = vadd.f32 %v896, %v897
        %v899 = vsub.f32 %v898, %v879
        %v900 = vmul.f32 %v868, 0.00055803574
        %v901 = vmul.f32 %v889, 0.00055803574
        %v902 = vmul.f32 %v879, 0.00055803574
        %v903 = vmul.f32 %v900, %v900
        %v904 = vsub.f32 %v902, %v903
        %v905 = vmax.f32 %v904, 0.0
        %v906 = vadd.f32 %v905, 1e-05
        %v907 = vrsqrt.pop %v906
        %v908 = vmul.f32 %v899, 0.00055803574
        %v909 = vmul.f32 %v901, %v901
        %v910 = vsub.f32 %v908, %v909
        %v911 = vmax.f32 %v910, 0.0
        %v912 = vadd.f32 %v911, 1e-05
        %v913 = vrsqrt.pop %v912
        %v914 = vsel %vm329, %v900, %v901
        %v915 = vsel %vm330, %v900, %v901
        %v916 = vsel %vm329, %v907, %v913
        %v917 = vsel %vm330, %v907, %v913
        %918 = vrot.lane.b32.xlu0 %v363, 127
        %v919 = vpop.permute.xlu0 %918
        %920 = vrot.lane.b32.xlu0 %v364, 127
        %v921 = vpop.permute.xlu0 %920
        %v924 = vmul.f32 %v916, %v919
        %v925 = vmul.f32 %v917, %v921
        %v926 = vmul.f32 %v914, %v924
        %v927 = vmul.f32 %v915, %v925
        %930 = vrot.lane.b32.xlu0 %v926, 6
        %v931 = vpop.permute.xlu0 %930
        %932 = vrot.lane.b32.xlu0 %v927, 6
        %v933 = vpop.permute.xlu0 %932
        %v936 = vsub.f32 %v363, %v931
        %v937 = vsub.f32 %v364, %v933
        %939 = vset.pattern.permute.xlu0 0
        %940 = vperm.xlu0 %939, %v924
        %v941 = vpop.permute.xlu0 %940
        %944 = vset.pattern.permute.xlu0 0
        %945 = vperm.xlu0 %944, %v925
        %v946 = vpop.permute.xlu0 %945
        %v948 = vmul.f32 %v765, %v941
        %v949 = vmul.f32 %v766, %v941
        %v950 = vmul.f32 %v767, %v946
        %v951 = vmul.f32 %v768, %v946
        %953 = vset.pattern.permute.xlu0 6
        %954 = vperm.xlu0 %953, %v936
        %v955 = vpop.permute.xlu0 %954
        %958 = vset.pattern.permute.xlu0 6
        %959 = vperm.xlu0 %958, %v937
        %v960 = vpop.permute.xlu0 %959
        %v962 = vadd.f32 %v948, %v955
        %v963 = vadd.f32 %v949, %v955
        %v964 = vadd.f32 %v950, %v960
        %v965 = vadd.f32 %v951, %v960
        %v966 = vmul.f32 %v962, 0.5
        %v967 = vmul.f32 %v963, 0.5
        %v968 = vmul.f32 %v964, 0.5
        %v969 = vmul.f32 %v965, 0.5
        %v970 = vtanh.pop %v966
        %v971 = vtanh.pop %v967
        %v972 = vtanh.pop %v968
        %v973 = vtanh.pop %v969
        %v974 = vadd.f32 %v970, 1.0
        %v975 = vadd.f32 %v971, 1.0
        %v976 = vadd.f32 %v972, 1.0
        %v977 = vadd.f32 %v973, 1.0
        %v978 = vmul.f32 %v974, 0.5
        %v979 = vmul.f32 %v975, 0.5
        %v980 = vmul.f32 %v976, 0.5
        %v981 = vmul.f32 %v977, 0.5
        %v982 = vmul.f32 %v962, %v978
        %v983 = vmul.f32 %v963, %v979
        %v984 = vmul.f32 %v964, %v980
        %v985 = vmul.f32 %v965, %v981
        %v986 = vld [vmem:[%s3] sm:$0xff]
        %v987 = vld [vmem:[%s3 + $0x8] sm:$0xff]
        %988 = vrot.lane.b32.xlu0 %v982, 15
        %v989 = vpop.permute.xlu0 %988
        %990 = vrot.lane.b32.xlu0 %v984, 15
        %v991 = vpop.permute.xlu0 %990
        %992 = vrot.lane.b32.xlu0 %v983, 15
        %v993 = vpop.permute.xlu0 %992
        %994 = vrot.lane.b32.xlu0 %v985, 15
        %v995 = vpop.permute.xlu0 %994
        %v996 = vsel %vm373, %v989, %v993
        %v997 = vsel %vm373, %v991, %v995
        %v998 = vsel %vm373, %v993, %v989
        %v999 = vsel %vm373, %v995, %v991
        %1000 = vrot.lane.b32.xlu0 %v982, 127
        %v1001 = vpop.permute.xlu0 %1000
        %1002 = vrot.lane.b32.xlu0 %v984, 127
        %v1003 = vpop.permute.xlu0 %1002
        %1004 = vrot.lane.b32.xlu0 %v983, 127
        %v1005 = vpop.permute.xlu0 %1004
        %1006 = vrot.lane.b32.xlu0 %v985, 127
        %v1007 = vpop.permute.xlu0 %1006
        %v1008 = vsel %vm380, %v1001, %v1005
        %v1009 = vsel %vm380, %v1003, %v1007
        %v1010 = vsel %vm380, %v1005, %v1001
        %v1011 = vsel %vm380, %v1007, %v1003
        %v1012 = vsel %vm385, %v1008, %v998
        %v1013 = vsel %vm386, %v1010, %v996
        %v1014 = vsel %vm385, %v1009, %v999
        %v1015 = vsel %vm386, %v1011, %v997
        %1016 = vrot.lane.b32.xlu0 %v982, 1
        %v1017 = vpop.permute.xlu0 %1016
        %1018 = vrot.lane.b32.xlu0 %v984, 1
        %v1019 = vpop.permute.xlu0 %1018
        %1020 = vrot.lane.b32.xlu0 %v983, 1
        %v1021 = vpop.permute.xlu0 %1020
        %1022 = vrot.lane.b32.xlu0 %v985, 1
        %v1023 = vpop.permute.xlu0 %1022
        %v1024 = vsel %vm393, %v1017, %v1021
        %v1025 = vsel %vm393, %v1019, %v1023
        %v1026 = vsel %vm393, %v1021, %v1017
        %v1027 = vsel %vm393, %v1023, %v1019
        %1028 = vrot.lane.b32.xlu0 %v982, 113
        %v1029 = vpop.permute.xlu0 %1028
        %1030 = vrot.lane.b32.xlu0 %v984, 113
        %v1031 = vpop.permute.xlu0 %1030
        %1032 = vrot.lane.b32.xlu0 %v983, 113
        %v1033 = vpop.permute.xlu0 %1032
        %1034 = vrot.lane.b32.xlu0 %v985, 113
        %v1035 = vpop.permute.xlu0 %1034
        %v1036 = vsel %vm400, %v1029, %v1033
        %v1037 = vsel %vm400, %v1031, %v1035
        %v1038 = vsel %vm400, %v1033, %v1029
        %v1039 = vsel %vm400, %v1035, %v1031
        %v1040 = vsel %vm405, %v1036, %v1026
        %v1041 = vsel %vm406, %v1038, %v1024
        %v1042 = vsel %vm405, %v1037, %v1027
        %v1043 = vsel %vm406, %v1039, %v1025
        %1044 = vrot.lane.b32.xlu0 %v1040, 16
        %v1045 = vpop.permute.xlu0 %1044
        %1046 = vrot.lane.b32.xlu0 %v1042, 16
        %v1047 = vpop.permute.xlu0 %1046
        %1048 = vrot.lane.b32.xlu0 %v1041, 16
        %v1049 = vpop.permute.xlu0 %1048
        %1050 = vrot.lane.b32.xlu0 %v1043, 16
        %v1051 = vpop.permute.xlu0 %1050
        %v1052 = vsel %vm413, %v1045, %v1049
        %v1053 = vsel %vm413, %v1047, %v1051
        %v1054 = vsel %vm413, %v1049, %v1045
        %v1055 = vsel %vm413, %v1051, %v1047
        %v1056 = vpack.c.bf16 %v1055, %v1054
        %v1057 = vpack.c.bf16 %v1053, %v1052
        %1058 = vrot.lane.b32.xlu0 %v982, 16
        %v1059 = vpop.permute.xlu0 %1058
        %1060 = vrot.lane.b32.xlu0 %v984, 16
        %v1061 = vpop.permute.xlu0 %1060
        %1062 = vrot.lane.b32.xlu0 %v983, 16
        %v1063 = vpop.permute.xlu0 %1062
        %1064 = vrot.lane.b32.xlu0 %v985, 16
        %v1065 = vpop.permute.xlu0 %1064
        %v1066 = vsel %vm413, %v1059, %v1063
        %v1067 = vsel %vm413, %v1061, %v1065
        %v1068 = vsel %vm413, %v1063, %v1059
        %v1069 = vsel %vm413, %v1065, %v1061
        %v1070 = vpack.c.bf16 %v1069, %v1068
        %v1071 = vpack.c.bf16 %v1067, %v1066
        %1072 = vrot.lane.b32.xlu0 %v1012, 16
        %v1073 = vpop.permute.xlu0 %1072
        %1074 = vrot.lane.b32.xlu0 %v1014, 16
        %v1075 = vpop.permute.xlu0 %1074
        %1076 = vrot.lane.b32.xlu0 %v1013, 16
        %v1077 = vpop.permute.xlu0 %1076
        %1078 = vrot.lane.b32.xlu0 %v1015, 16
        %v1079 = vpop.permute.xlu0 %1078
        %v1080 = vsel %vm413, %v1073, %v1077
        %v1081 = vsel %vm413, %v1075, %v1079
        %v1082 = vsel %vm413, %v1077, %v1073
        %v1083 = vsel %vm413, %v1079, %v1075
        %v1084 = vpack.c.bf16 %v1083, %v1082
        %v1085 = vpack.c.bf16 %v1081, %v1080
        %v1086 = vpack.c.bf16 %v1042, %v1040
        %v1087 = vpack.c.bf16 %v1043, %v1041
        %v1088 = vpack.c.bf16 %v984, %v982
        %v1089 = vpack.c.bf16 %v985, %v983
        %v1090 = vpack.c.bf16 %v1014, %v1012
        %v1091 = vpack.c.bf16 %v1015, %v1013
        %1092 = vrot.lane.b32.xlu0 %v1040, 112
        %v1093 = vpop.permute.xlu0 %1092
        %1094 = vrot.lane.b32.xlu0 %v1042, 112
        %v1095 = vpop.permute.xlu0 %1094
        %1096 = vrot.lane.b32.xlu0 %v1041, 112
        %v1097 = vpop.permute.xlu0 %1096
        %1098 = vrot.lane.b32.xlu0 %v1043, 112
        %v1099 = vpop.permute.xlu0 %1098
        %v1100 = vsel %vm432, %v1093, %v1097
        %v1101 = vsel %vm432, %v1095, %v1099
        %v1102 = vsel %vm432, %v1097, %v1093
        %v1103 = vsel %vm432, %v1099, %v1095
        %v1104 = vpack.c.bf16 %v1101, %v1100
        %v1105 = vpack.c.bf16 %v1103, %v1102
        %1106 = vrot.lane.b32.xlu0 %v982, 112
        %v1107 = vpop.permute.xlu0 %1106
        %1108 = vrot.lane.b32.xlu0 %v984, 112
        %v1109 = vpop.permute.xlu0 %1108
        %1110 = vrot.lane.b32.xlu0 %v983, 112
        %v1111 = vpop.permute.xlu0 %1110
        %1112 = vrot.lane.b32.xlu0 %v985, 112
        %v1113 = vpop.permute.xlu0 %1112
        %v1114 = vsel %vm432, %v1107, %v1111
        %v1115 = vsel %vm432, %v1109, %v1113
        %v1116 = vsel %vm432, %v1111, %v1107
        %v1117 = vsel %vm432, %v1113, %v1109
        %v1118 = vpack.c.bf16 %v1115, %v1114
        %v1119 = vpack.c.bf16 %v1117, %v1116
        %1120 = vrot.lane.b32.xlu0 %v1012, 112
        %v1121 = vpop.permute.xlu0 %1120
        %1122 = vrot.lane.b32.xlu0 %v1014, 112
        %v1123 = vpop.permute.xlu0 %1122
        %1124 = vrot.lane.b32.xlu0 %v1013, 112
        %v1125 = vpop.permute.xlu0 %1124
        %1126 = vrot.lane.b32.xlu0 %v1015, 112
        %v1127 = vpop.permute.xlu0 %1126
        %v1128 = vsel %vm432, %v1121, %v1125
        %v1129 = vsel %vm432, %v1123, %v1127
        %v1130 = vsel %vm432, %v1125, %v1121
        %v1131 = vsel %vm432, %v1127, %v1123
        %v1132 = vpack.c.bf16 %v1129, %v1128
        %v1133 = vpack.c.bf16 %v1131, %v1130
        %1134 = vset.pattern.permute.xlu0 11
        %1135 = vperm.xlu0 %1134, %v363
        %v1136 = vpop.permute.xlu0 %1135
        %1138 = vset.pattern.permute.xlu0 11
        %1139 = vperm.xlu0 %1138, %v364
        %v1140 = vpop.permute.xlu0 %1139
        %v1144 = vunpack.c.l.b16 %v986
        %v1145 = vunpack.c.h.b16 %v986
        %v1146 = vunpack.c.l.b16 %v987
        %v1147 = vunpack.c.h.b16 %v987
        %v1148 = vpack.c.b16 %v1146, %v1144
        %v1149 = vpack.c.b16 %v1147, %v1145
        %vm1151 = vcmask 130048
        %v1153 = vsel %vm1151, %v1149, 0
        %1155 = vmatprep.subr.bf16.mxu0 %v1057
        %1156 = vmatpush1.bf16.msra.mxu0 %v1056
        %1157 = vmatprep.subr.bf16.mxu0 %v1071
        %1158 = vmatpush1.bf16.msra.mxu0 %v1070
        %1159 = vmatprep.subr.bf16.mxu0 %v1085
        %1160 = vmatpush1.bf16.msra.mxu0 %v1084
        %1161 = vmatprep.subr.bf16.mxu0 %v1087
        %1162 = vmatpush1.bf16.msra.mxu0 %v1086
        %1163 = vmatprep.subr.bf16.mxu0 %v1089
        %1164 = vmatpush1.bf16.msra.mxu0 %v1088
        %1165 = vmatprep.subr.bf16.mxu0 %v1091
        %1166 = vmatpush1.bf16.msra.mxu0 %v1090
        %1167 = vmatprep.subr.bf16.mxu0 %v1105
        %1168 = vmatpush1.bf16.msra.mxu0 %v1104
        %1169 = vmatprep.subr.bf16.mxu0 %v1119
        %1170 = vmatpush1.bf16.msra.mxu0 %v1118
        %1171 = vmatprep.subr.bf16.mxu0 %v1133
        %1172 = vmatpush1.bf16.msra.mxu0 %v1132
        %1173 = vmatprep.subr.bf16.mxu0 0
        %1174 = vmatpush1.bf16.msra.mxu0 0
        %1175 = vmatprep.subr.bf16.mxu0 0
        %1176 = vmatpush1.bf16.msra.mxu0 0
        %1177 = vmatprep.subr.bf16.mxu0 0
        %1178 = vmatpush1.bf16.msra.mxu0 0
        %1179 = vmatprep.subr.bf16.mxu0 0
        %1180 = vmatpush1.bf16.msra.mxu0 0
        %1181 = vmatprep.subr.bf16.mxu0 0
        %1182 = vmatpush1.bf16.msra.mxu0 0
        %1183 = vmatprep.subr.bf16.mxu0 0
        %1184 = vmatpush1.bf16.msra.mxu0 0
        %1185 = vmatprep.subr.bf16.mxu0 0
        %1186 = vmatpush1.bf16.msra.mxu0 0
        %1187 = vmatprep.mubr.bf16.mxu0 %v1153
        %1188 = vmatmul.mubr.bf16.gmra.mrb[0].mxu0 %v1148
        %v1189 = vpop.f32.mrb[0].mxu0
        %v1190 = vadd.f32 %v1136, %v1189
        %v1191 = vpop.f32.mrb[0].mxu0
        %v1192 = vadd.f32 %v1136, %v1191
        %v1193 = vpop.f32.mrb[0].mxu0
        %v1194 = vadd.f32 %v1140, %v1193
        %v1195 = vpop.f32.mrb[0].mxu0
        %v1196 = vadd.f32 %v1140, %v1195
        %1197 = vdwg.mxu0
        %v1198 = vmul.f32 %v1190, %v1190
        %v1199 = vmul.f32 %v1192, %v1192
        %v1200 = vmul.f32 %v1194, %v1194
        %v1201 = vmul.f32 %v1196, %v1196
        %1202 = vmatprep.subr.mxu0 0.0
        %1203 = vmatpush1.msra.mxu0 %v331
        %1204 = vmatprep.subr.mxu0 0.0
        %1205 = vmatpush1.msra.mxu0 %v332
        %1206 = vmatprep.subr.mxu0 0.0
        %1207 = vmatpush1.msra.mxu0 %v333
        %1208 = vmatprep.subr.mxu0 0.0
        %1209 = vmatpush1.msra.mxu0 %v334
        %1210 = vmatprep.subr.mxu0 0.0
        %1211 = vmatpush1.msra.mxu0 %v335
        %1212 = vmatprep.subr.mxu0 0.0
        %1213 = vmatpush1.msra.mxu0 %v336
        %1214 = vmatprep.subr.mxu0 0.0
        %1215 = vmatpush1.msra.mxu0 %v337
        %1216 = vmatprep.subr.mxu0 0.0
        %1217 = vmatpush1.msra.mxu0 %v338
        %1218 = vmatprep.subr.mxu0 0.0
        %1219 = vmatpush1.msra.mxu0 %v339
        %1220 = vmatprep.subr.mxu0 0.0
        %1221 = vmatpush1.msra.mxu0 %v340
        %1222 = vmatprep.subr.mxu0 0.0
        %1223 = vmatpush1.msra.mxu0 %v341
        %1224 = vmatprep.subr.mxu0 0.0
        %1225 = vmatpush1.msra.mxu0 %v342
        %1226 = vmatprep.subr.mxu0 0.0
        %1227 = vmatpush1.msra.mxu0 %v343
        %1228 = vmatprep.subr.mxu0 0.0
        %1229 = vmatpush1.msra.mxu0 %v344
        %1230 = vmatprep.subr.mxu0 0.0
        %1231 = vmatpush1.msra.mxu0 %v345
        %1232 = vmatprep.subr.mxu0 0.0
        %1233 = vmatpush1.msra.mxu0 %v346
        %1234 = vmatprep.subr.mxu0 0.0
        %1235 = vmatpush1.msra.mxu0 %v347
        %1236 = vmatprep.subr.mxu0 0.0
        %1237 = vmatpush1.msra.mxu0 %v348
        %1238 = vmatprep.subr.mxu0 0.0
        %1239 = vmatpush1.msra.mxu0 %v349
        %1240 = vmatprep.subr.mxu0 0.0
        %1241 = vmatpush1.msra.mxu0 %v350
        %1242 = vmatprep.subr.mxu0 0.0
        %1243 = vmatpush1.msra.mxu0 %v351
        %1244 = vmatprep.subr.mxu0 0.0
        %1245 = vmatpush1.msra.mxu0 %v352
        %1246 = vmatprep.subr.mxu0 0.0
        %1247 = vmatpush1.msra.mxu0 %v353
        %1248 = vmatprep.subr.mxu0 0.0
        %1249 = vmatpush1.msra.mxu0 %v354
        %1250 = vmatprep.subr.mxu0 0.0
        %1251 = vmatpush1.msra.mxu0 %v355
        %1252 = vmatprep.subr.mxu0 0.0
        %1253 = vmatpush1.msra.mxu0 %v356
        %1254 = vmatprep.subr.mxu0 0.0
        %1255 = vmatpush1.msra.mxu0 %v357
        %1256 = vmatprep.subr.mxu0 0.0
        %1257 = vmatpush1.msra.mxu0 %v358
        %1258 = vmatprep.subr.mxu0 0.0
        %1259 = vmatpush1.msra.mxu0 %v359
        %1260 = vmatprep.subr.mxu0 0.0
        %1261 = vmatpush1.msra.mxu0 %v360
        %1262 = vmatprep.subr.mxu0 0.0
        %1263 = vmatpush1.msra.mxu0 %v361
        %1264 = vmatprep.subr.mxu0 0.0
        %1265 = vmatpush1.msra.mxu0 %v362
        %1266 = vmatprep.mubr.f32.mxu0 %v1192
        %1267 = vmatmul.mubr.f32.gmra.mrb[0].mxu0 %v1190
        %v1268 = vpop.f32.mrb[0].mxu0
        %v1269 = vadd.f32 0.0, %v1268
        %v1270 = vpop.f32.mrb[0].mxu0
        %1271 = vmatprep.mubr.f32.mxu0 %v1196
        %1272 = vmatmul.mubr.f32.gmra.mrb[0].mxu0 %v1194
        %v1273 = vpop.f32.mrb[0].mxu0
        %v1274 = vadd.f32 0.0, %v1273
        %v1275 = vpop.f32.mrb[0].mxu0
        %1276 = vmatprep.mubr.f32.mxu0 %v1199
        %1277 = vmatmul.mubr.f32.gmra.mrb[0].mxu0 %v1198
        %v1278 = vpop.f32.mrb[0].mxu0
        %v1279 = vadd.f32 0.0, %v1278
        %v1280 = vpop.f32.mrb[0].mxu0
        %1281 = vmatprep.mubr.f32.mxu0 %v1201
        %1282 = vmatmul.mubr.f32.gmra.mrb[0].mxu0 %v1200
        %v1283 = vpop.f32.mrb[0].mxu0
        %v1284 = vadd.f32 0.0, %v1283
        %v1285 = vpop.f32.mrb[0].mxu0
        %1286 = vdwg.mxu0
        %v1287 = vsel %vm329, %v1269, 0.0
        %v1288 = vsel %vm330, %v1274, 0.0
        %v1289 = vsel %vm632, %v1287, 0.0
        %v1290 = vsel %vm632, %v1288, 0.0
        %v1291 = vadd.f32 %v1289, %v1290
        %v1292 = vrot.slane %v1291, 4
        %v1293 = vadd.f32 %v1291, %v1292
        %v1294 = vrot.slane %v1293, 2
        %v1295 = vadd.f32 %v1293, %v1294
        %v1296 = vrot.slane %v1295, 1
        %v1297 = vadd.f32 %v1295, %v1296
        %v1298 = vsel %vm329, %v1279, 0.0
        %v1299 = vsel %vm330, %v1284, 0.0
        %v1300 = vsel %vm632, %v1298, 0.0
        %v1301 = vsel %vm632, %v1299, 0.0
        %v1302 = vadd.f32 %v1300, %v1301
        %v1303 = vrot.slane %v1302, 4
        %v1304 = vadd.f32 %v1302, %v1303
        %v1305 = vrot.slane %v1304, 2
        %v1306 = vadd.f32 %v1304, %v1305
        %v1307 = vrot.slane %v1306, 1
        %v1308 = vadd.f32 %v1306, %v1307
        %v1309 = vsel %vm632, %v1269, 0.0
        %v1310 = vsel %vm632, %v1274, 0.0
        %v1311 = vadd.f32 %v1309, %v1310
        %v1312 = vrot.slane %v1311, 4
        %v1313 = vadd.f32 %v1311, %v1312
        %v1314 = vrot.slane %v1313, 2
        %v1315 = vadd.f32 %v1313, %v1314
        %v1316 = vrot.slane %v1315, 1
        %v1317 = vadd.f32 %v1315, %v1316
        %v1318 = vsub.f32 %v1317, %v1297
        %v1319 = vsel %vm632, %v1279, 0.0
        %v1320 = vsel %vm632, %v1284, 0.0
        %v1321 = vadd.f32 %v1319, %v1320
        %v1322 = vrot.slane %v1321, 4
        %v1323 = vadd.f32 %v1321, %v1322
        %v1324 = vrot.slane %v1323, 2
        %v1325 = vadd.f32 %v1323, %v1324
        %v1326 = vrot.slane %v1325, 1
        %v1327 = vadd.f32 %v1325, %v1326
        %v1328 = vsub.f32 %v1327, %v1308
        %v1329 = vmul.f32 %v1297, 0.00055803574
        %v1330 = vmul.f32 %v1318, 0.00055803574
        %v1331 = vmul.f32 %v1308, 0.00055803574
        %v1332 = vmul.f32 %v1329, %v1329
        %v1333 = vsub.f32 %v1331, %v1332
        %v1334 = vmax.f32 %v1333, 0.0
        %v1335 = vadd.f32 %v1334, 1e-05
        %v1336 = vrsqrt.pop %v1335
        %v1337 = vmul.f32 %v1328, 0.00055803574
        %v1338 = vmul.f32 %v1330, %v1330
        %v1339 = vsub.f32 %v1337, %v1338
        %v1340 = vmax.f32 %v1339, 0.0
        %v1341 = vadd.f32 %v1340, 1e-05
        %v1342 = vrsqrt.pop %v1341
        %v1343 = vsel %vm329, %v1329, %v1330
        %v1344 = vsel %vm330, %v1329, %v1330
        %v1345 = vsel %vm329, %v1336, %v1342
        %v1346 = vsel %vm330, %v1336, %v1342
        %1347 = vrot.lane.b32.xlu0 %v363, 126
        %v1348 = vpop.permute.xlu0 %1347
        %1349 = vrot.lane.b32.xlu0 %v364, 126
        %v1350 = vpop.permute.xlu0 %1349
        %v1353 = vmul.f32 %v1345, %v1348
        %v1354 = vmul.f32 %v1346, %v1350
        %v1355 = vmul.f32 %v1343, %v1353
        %v1356 = vmul.f32 %v1344, %v1354
        %1359 = vrot.lane.b32.xlu0 %v1355, 7
        %v1360 = vpop.permute.xlu0 %1359
        %1361 = vrot.lane.b32.xlu0 %v1356, 7
        %v1362 = vpop.permute.xlu0 %1361
        %v1365 = vsub.f32 %v363, %v1360
        %v1366 = vsub.f32 %v364, %v1362
        %1368 = vset.pattern.permute.xlu0 0
        %1369 = vperm.xlu0 %1368, %v1353
        %v1370 = vpop.permute.xlu0 %1369
        %1373 = vset.pattern.permute.xlu0 0
        %1374 = vperm.xlu0 %1373, %v1354
        %v1375 = vpop.permute.xlu0 %1374
        %v1377 = vmul.f32 %v1190, %v1370
        %v1378 = vmul.f32 %v1192, %v1370
        %v1379 = vmul.f32 %v1194, %v1375
        %v1380 = vmul.f32 %v1196, %v1375
        %1382 = vset.pattern.permute.xlu0 7
        %1383 = vperm.xlu0 %1382, %v1365
        %v1384 = vpop.permute.xlu0 %1383
        %1387 = vset.pattern.permute.xlu0 7
        %1388 = vperm.xlu0 %1387, %v1366
        %v1389 = vpop.permute.xlu0 %1388
        %v1391 = vadd.f32 %v1377, %v1384
        %v1392 = vadd.f32 %v1378, %v1384
        %v1393 = vadd.f32 %v1379, %v1389
        %v1394 = vadd.f32 %v1380, %v1389
        %v1395 = vmul.f32 %v1391, 0.5
        %v1396 = vmul.f32 %v1392, 0.5
        %v1397 = vmul.f32 %v1393, 0.5
        %v1398 = vmul.f32 %v1394, 0.5
        %v1399 = vtanh.pop %v1395
        %v1400 = vtanh.pop %v1396
        %v1401 = vtanh.pop %v1397
        %v1402 = vtanh.pop %v1398
        %v1403 = vadd.f32 %v1399, 1.0
        %v1404 = vadd.f32 %v1400, 1.0
        %v1405 = vadd.f32 %v1401, 1.0
        %v1406 = vadd.f32 %v1402, 1.0
        %v1407 = vmul.f32 %v1403, 0.5
        %v1408 = vmul.f32 %v1404, 0.5
        %v1409 = vmul.f32 %v1405, 0.5
        %v1410 = vmul.f32 %v1406, 0.5
        %v1411 = vmul.f32 %v1391, %v1407
        %v1412 = vmul.f32 %v1392, %v1408
        %v1413 = vmul.f32 %v1393, %v1409
        %v1414 = vmul.f32 %v1394, %v1410
        %s1415 = scalar_lea.vmem %s3, 16
        %v1416 = vld [vmem:[%s1415] sm:$0xff]
        %v1417 = vld [vmem:[%s1415 + $0x8] sm:$0xff]
        %1418 = vrot.lane.b32.xlu0 %v1411, 15
        %v1419 = vpop.permute.xlu0 %1418
        %1420 = vrot.lane.b32.xlu0 %v1413, 15
        %v1421 = vpop.permute.xlu0 %1420
        %1422 = vrot.lane.b32.xlu0 %v1412, 15
        %v1423 = vpop.permute.xlu0 %1422
        %1424 = vrot.lane.b32.xlu0 %v1414, 15
        %v1425 = vpop.permute.xlu0 %1424
        %v1426 = vsel %vm373, %v1419, %v1423
        %v1427 = vsel %vm373, %v1421, %v1425
        %v1428 = vsel %vm373, %v1423, %v1419
        %v1429 = vsel %vm373, %v1425, %v1421
        %1430 = vrot.lane.b32.xlu0 %v1411, 127
        %v1431 = vpop.permute.xlu0 %1430
        %1432 = vrot.lane.b32.xlu0 %v1413, 127
        %v1433 = vpop.permute.xlu0 %1432
        %1434 = vrot.lane.b32.xlu0 %v1412, 127
        %v1435 = vpop.permute.xlu0 %1434
        %1436 = vrot.lane.b32.xlu0 %v1414, 127
        %v1437 = vpop.permute.xlu0 %1436
        %v1438 = vsel %vm380, %v1431, %v1435
        %v1439 = vsel %vm380, %v1433, %v1437
        %v1440 = vsel %vm380, %v1435, %v1431
        %v1441 = vsel %vm380, %v1437, %v1433
        %v1442 = vsel %vm385, %v1438, %v1428
        %v1443 = vsel %vm386, %v1440, %v1426
        %v1444 = vsel %vm385, %v1439, %v1429
        %v1445 = vsel %vm386, %v1441, %v1427
        %1446 = vrot.lane.b32.xlu0 %v1411, 1
        %v1447 = vpop.permute.xlu0 %1446
        %1448 = vrot.lane.b32.xlu0 %v1413, 1
        %v1449 = vpop.permute.xlu0 %1448
        %1450 = vrot.lane.b32.xlu0 %v1412, 1
        %v1451 = vpop.permute.xlu0 %1450
        %1452 = vrot.lane.b32.xlu0 %v1414, 1
        %v1453 = vpop.permute.xlu0 %1452
        %v1454 = vsel %vm393, %v1447, %v1451
        %v1455 = vsel %vm393, %v1449, %v1453
        %v1456 = vsel %vm393, %v1451, %v1447
        %v1457 = vsel %vm393, %v1453, %v1449
        %1458 = vrot.lane.b32.xlu0 %v1411, 113
        %v1459 = vpop.permute.xlu0 %1458
        %1460 = vrot.lane.b32.xlu0 %v1413, 113
        %v1461 = vpop.permute.xlu0 %1460
        %1462 = vrot.lane.b32.xlu0 %v1412, 113
        %v1463 = vpop.permute.xlu0 %1462
        %1464 = vrot.lane.b32.xlu0 %v1414, 113
        %v1465 = vpop.permute.xlu0 %1464
        %v1466 = vsel %vm400, %v1459, %v1463
        %v1467 = vsel %vm400, %v1461, %v1465
        %v1468 = vsel %vm400, %v1463, %v1459
        %v1469 = vsel %vm400, %v1465, %v1461
        %v1470 = vsel %vm405, %v1466, %v1456
        %v1471 = vsel %vm406, %v1468, %v1454
        %v1472 = vsel %vm405, %v1467, %v1457
        %v1473 = vsel %vm406, %v1469, %v1455
        %1474 = vrot.lane.b32.xlu0 %v1470, 16
        %v1475 = vpop.permute.xlu0 %1474
        %1476 = vrot.lane.b32.xlu0 %v1472, 16
        %v1477 = vpop.permute.xlu0 %1476
        %1478 = vrot.lane.b32.xlu0 %v1471, 16
        %v1479 = vpop.permute.xlu0 %1478
        %1480 = vrot.lane.b32.xlu0 %v1473, 16
        %v1481 = vpop.permute.xlu0 %1480
        %v1482 = vsel %vm413, %v1475, %v1479
        %v1483 = vsel %vm413, %v1477, %v1481
        %v1484 = vsel %vm413, %v1479, %v1475
        %v1485 = vsel %vm413, %v1481, %v1477
        %v1486 = vpack.c.bf16 %v1485, %v1484
        %v1487 = vpack.c.bf16 %v1483, %v1482
        %1488 = vrot.lane.b32.xlu0 %v1411, 16
        %v1489 = vpop.permute.xlu0 %1488
        %1490 = vrot.lane.b32.xlu0 %v1413, 16
        %v1491 = vpop.permute.xlu0 %1490
        %1492 = vrot.lane.b32.xlu0 %v1412, 16
        %v1493 = vpop.permute.xlu0 %1492
        %1494 = vrot.lane.b32.xlu0 %v1414, 16
        %v1495 = vpop.permute.xlu0 %1494
        %v1496 = vsel %vm413, %v1489, %v1493
        %v1497 = vsel %vm413, %v1491, %v1495
        %v1498 = vsel %vm413, %v1493, %v1489
        %v1499 = vsel %vm413, %v1495, %v1491
        %v1500 = vpack.c.bf16 %v1499, %v1498
        %v1501 = vpack.c.bf16 %v1497, %v1496
        %1502 = vrot.lane.b32.xlu0 %v1442, 16
        %v1503 = vpop.permute.xlu0 %1502
        %1504 = vrot.lane.b32.xlu0 %v1444, 16
        %v1505 = vpop.permute.xlu0 %1504
        %1506 = vrot.lane.b32.xlu0 %v1443, 16
        %v1507 = vpop.permute.xlu0 %1506
        %1508 = vrot.lane.b32.xlu0 %v1445, 16
        %v1509 = vpop.permute.xlu0 %1508
        %v1510 = vsel %vm413, %v1503, %v1507
        %v1511 = vsel %vm413, %v1505, %v1509
        %v1512 = vsel %vm413, %v1507, %v1503
        %v1513 = vsel %vm413, %v1509, %v1505
        %v1514 = vpack.c.bf16 %v1513, %v1512
        %v1515 = vpack.c.bf16 %v1511, %v1510
        %v1516 = vpack.c.bf16 %v1472, %v1470
        %v1517 = vpack.c.bf16 %v1473, %v1471
        %v1518 = vpack.c.bf16 %v1413, %v1411
        %v1519 = vpack.c.bf16 %v1414, %v1412
        %v1520 = vpack.c.bf16 %v1444, %v1442
        %v1521 = vpack.c.bf16 %v1445, %v1443
        %1522 = vrot.lane.b32.xlu0 %v1470, 112
        %v1523 = vpop.permute.xlu0 %1522
        %1524 = vrot.lane.b32.xlu0 %v1472, 112
        %v1525 = vpop.permute.xlu0 %1524
        %1526 = vrot.lane.b32.xlu0 %v1471, 112
        %v1527 = vpop.permute.xlu0 %1526
        %1528 = vrot.lane.b32.xlu0 %v1473, 112
        %v1529 = vpop.permute.xlu0 %1528
        %v1530 = vsel %vm432, %v1523, %v1527
        %v1531 = vsel %vm432, %v1525, %v1529
        %v1532 = vsel %vm432, %v1527, %v1523
        %v1533 = vsel %vm432, %v1529, %v1525
        %v1534 = vpack.c.bf16 %v1531, %v1530
        %v1535 = vpack.c.bf16 %v1533, %v1532
        %1536 = vrot.lane.b32.xlu0 %v1411, 112
        %v1537 = vpop.permute.xlu0 %1536
        %1538 = vrot.lane.b32.xlu0 %v1413, 112
        %v1539 = vpop.permute.xlu0 %1538
        %1540 = vrot.lane.b32.xlu0 %v1412, 112
        %v1541 = vpop.permute.xlu0 %1540
        %1542 = vrot.lane.b32.xlu0 %v1414, 112
        %v1543 = vpop.permute.xlu0 %1542
        %v1544 = vsel %vm432, %v1537, %v1541
        %v1545 = vsel %vm432, %v1539, %v1543
        %v1546 = vsel %vm432, %v1541, %v1537
        %v1547 = vsel %vm432, %v1543, %v1539
        %v1548 = vpack.c.bf16 %v1545, %v1544
        %v1549 = vpack.c.bf16 %v1547, %v1546
        %1550 = vrot.lane.b32.xlu0 %v1442, 112
        %v1551 = vpop.permute.xlu0 %1550
        %1552 = vrot.lane.b32.xlu0 %v1444, 112
        %v1553 = vpop.permute.xlu0 %1552
        %1554 = vrot.lane.b32.xlu0 %v1443, 112
        %v1555 = vpop.permute.xlu0 %1554
        %1556 = vrot.lane.b32.xlu0 %v1445, 112
        %v1557 = vpop.permute.xlu0 %1556
        %v1558 = vsel %vm432, %v1551, %v1555
        %v1559 = vsel %vm432, %v1553, %v1557
        %v1560 = vsel %vm432, %v1555, %v1551
        %v1561 = vsel %vm432, %v1557, %v1553
        %v1562 = vpack.c.bf16 %v1559, %v1558
        %v1563 = vpack.c.bf16 %v1561, %v1560
        %1564 = vset.pattern.permute.xlu0 12
        %1565 = vperm.xlu0 %1564, %v363
        %v1566 = vpop.permute.xlu0 %1565
        %1568 = vset.pattern.permute.xlu0 12
        %1569 = vperm.xlu0 %1568, %v364
        %v1570 = vpop.permute.xlu0 %1569
        %v1574 = vunpack.c.l.b16 %v1416
        %v1575 = vunpack.c.h.b16 %v1416
        %v1576 = vunpack.c.l.b16 %v1417
        %v1577 = vunpack.c.h.b16 %v1417
        %v1578 = vpack.c.b16 %v1576, %v1574
        %v1579 = vpack.c.b16 %v1577, %v1575
        %v1582 = vsel %vm1151, %v1579, 0
        %1584 = vmatprep.subr.bf16.mxu0 %v1487
        %1585 = vmatpush1.bf16.msra.mxu0 %v1486
        %1586 = vmatprep.subr.bf16.mxu0 %v1501
        %1587 = vmatpush1.bf16.msra.mxu0 %v1500
        %1588 = vmatprep.subr.bf16.mxu0 %v1515
        %1589 = vmatpush1.bf16.msra.mxu0 %v1514
        %1590 = vmatprep.subr.bf16.mxu0 %v1517
        %1591 = vmatpush1.bf16.msra.mxu0 %v1516
        %1592 = vmatprep.subr.bf16.mxu0 %v1519
        %1593 = vmatpush1.bf16.msra.mxu0 %v1518
        %1594 = vmatprep.subr.bf16.mxu0 %v1521
        %1595 = vmatpush1.bf16.msra.mxu0 %v1520
        %1596 = vmatprep.subr.bf16.mxu0 %v1535
        %1597 = vmatpush1.bf16.msra.mxu0 %v1534
        %1598 = vmatprep.subr.bf16.mxu0 %v1549
        %1599 = vmatpush1.bf16.msra.mxu0 %v1548
        %1600 = vmatprep.subr.bf16.mxu0 %v1563
        %1601 = vmatpush1.bf16.msra.mxu0 %v1562
        %1602 = vmatprep.subr.bf16.mxu0 0
        %1603 = vmatpush1.bf16.msra.mxu0 0
        %1604 = vmatprep.subr.bf16.mxu0 0
        %1605 = vmatpush1.bf16.msra.mxu0 0
        %1606 = vmatprep.subr.bf16.mxu0 0
        %1607 = vmatpush1.bf16.msra.mxu0 0
        %1608 = vmatprep.subr.bf16.mxu0 0
        %1609 = vmatpush1.bf16.msra.mxu0 0
        %1610 = vmatprep.subr.bf16.mxu0 0
        %1611 = vmatpush1.bf16.msra.mxu0 0
        %1612 = vmatprep.subr.bf16.mxu0 0
        %1613 = vmatpush1.bf16.msra.mxu0 0
        %1614 = vmatprep.subr.bf16.mxu0 0
        %1615 = vmatpush1.bf16.msra.mxu0 0
        %1616 = vmatprep.mubr.bf16.mxu0 %v1582
        %1617 = vmatmul.mubr.bf16.gmra.mrb[0].mxu0 %v1578
        %v1618 = vpop.f32.mrb[0].mxu0
        %v1619 = vadd.f32 %v1566, %v1618
        %v1620 = vpop.f32.mrb[0].mxu0
        %v1621 = vadd.f32 %v1566, %v1620
        %v1622 = vpop.f32.mrb[0].mxu0
        %v1623 = vadd.f32 %v1570, %v1622
        %v1624 = vpop.f32.mrb[0].mxu0
        %v1625 = vadd.f32 %v1570, %v1624
        %1626 = vdwg.mxu0
        %s1627 = sld [smem:[#allocation2]]
        %v1628 = vstv %s1627
        %v1629 = vmul.f32 %v1628, %v1619
        %v1630 = vmul.f32 %v1628, %v1621
        %v1631 = vmul.f32 %v1628, %v1623
        %v1632 = vmul.f32 %v1628, %v1625
        %v1633 = vadd.f32 %v765, %v1629
        %v1634 = vadd.f32 %v766, %v1630
        %v1635 = vadd.f32 %v767, %v1631
        %v1636 = vadd.f32 %v768, %v1632
        %v1637 = vmul.f32 %v1633, 0.3
        %v1638 = vmul.f32 %v1634, 0.3
        %v1639 = vmul.f32 %v1635, 0.3
        %v1640 = vmul.f32 %v1636, 0.3
        %v1641 = vadd.f32 %v1637, %v765
        %v1642 = vadd.f32 %v1638, %v766
        %v1643 = vadd.f32 %v1639, %v767
        %v1644 = vadd.f32 %v1640, %v768
        %v1645 = vmul.f32 %v1641, %v1641
        %v1646 = vmul.f32 %v1642, %v1642
        %v1647 = vmul.f32 %v1643, %v1643
        %v1648 = vmul.f32 %v1644, %v1644
        %1649 = vmatprep.subr.mxu0 0.0
        %1650 = vmatpush1.msra.mxu0 %v331
        %1651 = vmatprep.subr.mxu0 0.0
        %1652 = vmatpush1.msra.mxu0 %v332
        %1653 = vmatprep.subr.mxu0 0.0
        %1654 = vmatpush1.msra.mxu0 %v333
        %1655 = vmatprep.subr.mxu0 0.0
        %1656 = vmatpush1.msra.mxu0 %v334
        %1657 = vmatprep.subr.mxu0 0.0
        %1658 = vmatpush1.msra.mxu0 %v335
        %1659 = vmatprep.subr.mxu0 0.0
        %1660 = vmatpush1.msra.mxu0 %v336
        %1661 = vmatprep.subr.mxu0 0.0
        %1662 = vmatpush1.msra.mxu0 %v337
        %1663 = vmatprep.subr.mxu0 0.0
        %1664 = vmatpush1.msra.mxu0 %v338
        %1665 = vmatprep.subr.mxu0 0.0
        %1666 = vmatpush1.msra.mxu0 %v339
        %1667 = vmatprep.subr.mxu0 0.0
        %1668 = vmatpush1.msra.mxu0 %v340
        %1669 = vmatprep.subr.mxu0 0.0
        %1670 = vmatpush1.msra.mxu0 %v341
        %1671 = vmatprep.subr.mxu0 0.0
        %1672 = vmatpush1.msra.mxu0 %v342
        %1673 = vmatprep.subr.mxu0 0.0
        %1674 = vmatpush1.msra.mxu0 %v343
        %1675 = vmatprep.subr.mxu0 0.0
        %1676 = vmatpush1.msra.mxu0 %v344
        %1677 = vmatprep.subr.mxu0 0.0
        %1678 = vmatpush1.msra.mxu0 %v345
        %1679 = vmatprep.subr.mxu0 0.0
        %1680 = vmatpush1.msra.mxu0 %v346
        %1681 = vmatprep.subr.mxu0 0.0
        %1682 = vmatpush1.msra.mxu0 %v347
        %1683 = vmatprep.subr.mxu0 0.0
        %1684 = vmatpush1.msra.mxu0 %v348
        %1685 = vmatprep.subr.mxu0 0.0
        %1686 = vmatpush1.msra.mxu0 %v349
        %1687 = vmatprep.subr.mxu0 0.0
        %1688 = vmatpush1.msra.mxu0 %v350
        %1689 = vmatprep.subr.mxu0 0.0
        %1690 = vmatpush1.msra.mxu0 %v351
        %1691 = vmatprep.subr.mxu0 0.0
        %1692 = vmatpush1.msra.mxu0 %v352
        %1693 = vmatprep.subr.mxu0 0.0
        %1694 = vmatpush1.msra.mxu0 %v353
        %1695 = vmatprep.subr.mxu0 0.0
        %1696 = vmatpush1.msra.mxu0 %v354
        %1697 = vmatprep.subr.mxu0 0.0
        %1698 = vmatpush1.msra.mxu0 %v355
        %1699 = vmatprep.subr.mxu0 0.0
        %1700 = vmatpush1.msra.mxu0 %v356
        %1701 = vmatprep.subr.mxu0 0.0
        %1702 = vmatpush1.msra.mxu0 %v357
        %1703 = vmatprep.subr.mxu0 0.0
        %1704 = vmatpush1.msra.mxu0 %v358
        %1705 = vmatprep.subr.mxu0 0.0
        %1706 = vmatpush1.msra.mxu0 %v359
        %1707 = vmatprep.subr.mxu0 0.0
        %1708 = vmatpush1.msra.mxu0 %v360
        %1709 = vmatprep.subr.mxu0 0.0
        %1710 = vmatpush1.msra.mxu0 %v361
        %1711 = vmatprep.subr.mxu0 0.0
        %1712 = vmatpush1.msra.mxu0 %v362
        %1713 = vmatprep.mubr.f32.mxu0 %v1642
        %1714 = vmatmul.mubr.f32.gmra.mrb[0].mxu0 %v1641
        %v1715 = vpop.f32.mrb[0].mxu0
        %v1716 = vadd.f32 0.0, %v1715
        %v1717 = vpop.f32.mrb[0].mxu0
        %1718 = vmatprep.mubr.f32.mxu0 %v1644
        %1719 = vmatmul.mubr.f32.gmra.mrb[0].mxu0 %v1643
        %v1720 = vpop.f32.mrb[0].mxu0
        %v1721 = vadd.f32 0.0, %v1720
        %v1722 = vpop.f32.mrb[0].mxu0
        %1723 = vmatprep.mubr.f32.mxu0 %v1646
        %1724 = vmatmul.mubr.f32.gmra.mrb[0].mxu0 %v1645
        %v1725 = vpop.f32.mrb[0].mxu0
        %v1726 = vadd.f32 0.0, %v1725
        %v1727 = vpop.f32.mrb[0].mxu0
        %1728 = vmatprep.mubr.f32.mxu0 %v1648
        %1729 = vmatmul.mubr.f32.gmra.mrb[0].mxu0 %v1647
        %v1730 = vpop.f32.mrb[0].mxu0
        %v1731 = vadd.f32 0.0, %v1730
        %v1732 = vpop.f32.mrb[0].mxu0
        %1733 = vdwg.mxu0
        %v1734 = vsel %vm329, %v1716, 0.0
        %v1735 = vsel %vm330, %v1721, 0.0
        %v1736 = vsel %vm632, %v1734, 0.0
        %v1737 = vsel %vm632, %v1735, 0.0
        %v1738 = vadd.f32 %v1736, %v1737
        %v1739 = vrot.slane %v1738, 4
        %v1740 = vadd.f32 %v1738, %v1739
        %v1741 = vrot.slane %v1740, 2
        %v1742 = vadd.f32 %v1740, %v1741
        %v1743 = vrot.slane %v1742, 1
        %v1744 = vadd.f32 %v1742, %v1743
        %v1745 = vsel %vm329, %v1726, 0.0
        %v1746 = vsel %vm330, %v1731, 0.0
        %v1747 = vsel %vm632, %v1745, 0.0
        %v1748 = vsel %vm632, %v1746, 0.0
        %v1749 = vadd.f32 %v1747, %v1748
        %v1750 = vrot.slane %v1749, 4
        %v1751 = vadd.f32 %v1749, %v1750
        %v1752 = vrot.slane %v1751, 2
        %v1753 = vadd.f32 %v1751, %v1752
        %v1754 = vrot.slane %v1753, 1
        %v1755 = vadd.f32 %v1753, %v1754
        %v1756 = vsel %vm632, %v1716, 0.0
        %v1757 = vsel %vm632, %v1721, 0.0
        %v1758 = vadd.f32 %v1756, %v1757
        %v1759 = vrot.slane %v1758, 4
        %v1760 = vadd.f32 %v1758, %v1759
        %v1761 = vrot.slane %v1760, 2
        %v1762 = vadd.f32 %v1760, %v1761
        %v1763 = vrot.slane %v1762, 1
        %v1764 = vadd.f32 %v1762, %v1763
        %v1765 = vsub.f32 %v1764, %v1744
        %v1766 = vsel %vm632, %v1726, 0.0
        %v1767 = vsel %vm632, %v1731, 0.0
        %v1768 = vadd.f32 %v1766, %v1767
        %v1769 = vrot.slane %v1768, 4
        %v1770 = vadd.f32 %v1768, %v1769
        %v1771 = vrot.slane %v1770, 2
        %v1772 = vadd.f32 %v1770, %v1771
        %v1773 = vrot.slane %v1772, 1
        %v1774 = vadd.f32 %v1772, %v1773
        %v1775 = vsub.f32 %v1774, %v1755
        %v1776 = vmul.f32 %v1744, 0.00055803574
        %v1777 = vmul.f32 %v1765, 0.00055803574
        %v1778 = vmul.f32 %v1755, 0.00055803574
        %v1779 = vmul.f32 %v1776, %v1776
        %v1780 = vsub.f32 %v1778, %v1779
        %v1781 = vmax.f32 %v1780, 0.0
        %v1782 = vadd.f32 %v1781, 1e-05
        %v1783 = vrsqrt.pop %v1782
        %v1784 = vmul.f32 %v1775, 0.00055803574
        %v1785 = vmul.f32 %v1777, %v1777
        %v1786 = vsub.f32 %v1784, %v1785
        %v1787 = vmax.f32 %v1786, 0.0
        %v1788 = vadd.f32 %v1787, 1e-05
        %v1789 = vrsqrt.pop %v1788
        %v1790 = vsel %vm329, %v1776, %v1777
        %v1791 = vsel %vm330, %v1776, %v1777
        %v1792 = vsel %vm329, %v1783, %v1789
        %v1793 = vsel %vm330, %v1783, %v1789
        %1794 = vrot.lane.b32.xlu0 %v363, 125
        %v1795 = vpop.permute.xlu0 %1794
        %1796 = vrot.lane.b32.xlu0 %v364, 125
        %v1797 = vpop.permute.xlu0 %1796
        %v1800 = vmul.f32 %v1792, %v1795
        %v1801 = vmul.f32 %v1793, %v1797
        %v1802 = vmul.f32 %v1790, %v1800
        %v1803 = vmul.f32 %v1791, %v1801
        %1806 = vrot.lane.b32.xlu0 %v1802, 8
        %v1807 = vpop.permute.xlu0 %1806
        %1808 = vrot.lane.b32.xlu0 %v1803, 8
        %v1809 = vpop.permute.xlu0 %1808
        %v1812 = vsub.f32 %v363, %v1807
        %v1813 = vsub.f32 %v364, %v1809
        %1815 = vset.pattern.permute.xlu0 0
        %1816 = vperm.xlu0 %1815, %v1800
        %v1817 = vpop.permute.xlu0 %1816
        %1820 = vset.pattern.permute.xlu0 0
        %1821 = vperm.xlu0 %1820, %v1801
        %v1822 = vpop.permute.xlu0 %1821
        %v1824 = vmul.f32 %v1641, %v1817
        %v1825 = vmul.f32 %v1642, %v1817
        %v1826 = vmul.f32 %v1643, %v1822
        %v1827 = vmul.f32 %v1644, %v1822
        %1829 = vset.pattern.permute.xlu0 8
        %1830 = vperm.xlu0 %1829, %v1812
        %v1831 = vpop.permute.xlu0 %1830
        %1834 = vset.pattern.permute.xlu0 8
        %1835 = vperm.xlu0 %1834, %v1813
        %v1836 = vpop.permute.xlu0 %1835
        %v1838 = vadd.f32 %v1824, %v1831
        %v1839 = vadd.f32 %v1825, %v1831
        %v1840 = vadd.f32 %v1826, %v1836
        %v1841 = vadd.f32 %v1827, %v1836
        %v1842 = vmul.f32 %v1838, 0.5
        %v1843 = vmul.f32 %v1839, 0.5
        %v1844 = vmul.f32 %v1840, 0.5
        %v1845 = vmul.f32 %v1841, 0.5
        %v1846 = vtanh.pop %v1842
        %v1847 = vtanh.pop %v1843
        %v1848 = vtanh.pop %v1844
        %v1849 = vtanh.pop %v1845
        %v1850 = vadd.f32 %v1846, 1.0
        %v1851 = vadd.f32 %v1847, 1.0
        %v1852 = vadd.f32 %v1848, 1.0
        %v1853 = vadd.f32 %v1849, 1.0
        %v1854 = vmul.f32 %v1850, 0.5
        %v1855 = vmul.f32 %v1851, 0.5
        %v1856 = vmul.f32 %v1852, 0.5
        %v1857 = vmul.f32 %v1853, 0.5
        %v1858 = vmul.f32 %v1838, %v1854
        %v1859 = vmul.f32 %v1839, %v1855
        %v1860 = vmul.f32 %v1840, %v1856
        %v1861 = vmul.f32 %v1841, %v1857
        %s1862 = scalar_lea.vmem %s3, 32
        %v1863 = vld [vmem:[%s1862] sm:$0xff]
        %v1864 = vld [vmem:[%s1862 + $0x8] sm:$0xff]
        %1865 = vrot.lane.b32.xlu0 %v1858, 15
        %v1866 = vpop.permute.xlu0 %1865
        %1867 = vrot.lane.b32.xlu0 %v1860, 15
        %v1868 = vpop.permute.xlu0 %1867
        %1869 = vrot.lane.b32.xlu0 %v1859, 15
        %v1870 = vpop.permute.xlu0 %1869
        %1871 = vrot.lane.b32.xlu0 %v1861, 15
        %v1872 = vpop.permute.xlu0 %1871
        %v1873 = vsel %vm373, %v1866, %v1870
        %v1874 = vsel %vm373, %v1868, %v1872
        %v1875 = vsel %vm373, %v1870, %v1866
        %v1876 = vsel %vm373, %v1872, %v1868
        %1877 = vrot.lane.b32.xlu0 %v1858, 127
        %v1878 = vpop.permute.xlu0 %1877
        %1879 = vrot.lane.b32.xlu0 %v1860, 127
        %v1880 = vpop.permute.xlu0 %1879
        %1881 = vrot.lane.b32.xlu0 %v1859, 127
        %v1882 = vpop.permute.xlu0 %1881
        %1883 = vrot.lane.b32.xlu0 %v1861, 127
        %v1884 = vpop.permute.xlu0 %1883
        %v1885 = vsel %vm380, %v1878, %v1882
        %v1886 = vsel %vm380, %v1880, %v1884
        %v1887 = vsel %vm380, %v1882, %v1878
        %v1888 = vsel %vm380, %v1884, %v1880
        %v1889 = vsel %vm385, %v1885, %v1875
        %v1890 = vsel %vm386, %v1887, %v1873
        %v1891 = vsel %vm385, %v1886, %v1876
        %v1892 = vsel %vm386, %v1888, %v1874
        %1893 = vrot.lane.b32.xlu0 %v1858, 1
        %v1894 = vpop.permute.xlu0 %1893
        %1895 = vrot.lane.b32.xlu0 %v1860, 1
        %v1896 = vpop.permute.xlu0 %1895
        %1897 = vrot.lane.b32.xlu0 %v1859, 1
        %v1898 = vpop.permute.xlu0 %1897
        %1899 = vrot.lane.b32.xlu0 %v1861, 1
        %v1900 = vpop.permute.xlu0 %1899
        %v1901 = vsel %vm393, %v1894, %v1898
        %v1902 = vsel %vm393, %v1896, %v1900
        %v1903 = vsel %vm393, %v1898, %v1894
        %v1904 = vsel %vm393, %v1900, %v1896
        %1905 = vrot.lane.b32.xlu0 %v1858, 113
        %v1906 = vpop.permute.xlu0 %1905
        %1907 = vrot.lane.b32.xlu0 %v1860, 113
        %v1908 = vpop.permute.xlu0 %1907
        %1909 = vrot.lane.b32.xlu0 %v1859, 113
        %v1910 = vpop.permute.xlu0 %1909
        %1911 = vrot.lane.b32.xlu0 %v1861, 113
        %v1912 = vpop.permute.xlu0 %1911
        %v1913 = vsel %vm400, %v1906, %v1910
        %v1914 = vsel %vm400, %v1908, %v1912
        %v1915 = vsel %vm400, %v1910, %v1906
        %v1916 = vsel %vm400, %v1912, %v1908
        %v1917 = vsel %vm405, %v1913, %v1903
        %v1918 = vsel %vm406, %v1915, %v1901
        %v1919 = vsel %vm405, %v1914, %v1904
        %v1920 = vsel %vm406, %v1916, %v1902
        %1921 = vrot.lane.b32.xlu0 %v1917, 16
        %v1922 = vpop.permute.xlu0 %1921
        %1923 = vrot.lane.b32.xlu0 %v1919, 16
        %v1924 = vpop.permute.xlu0 %1923
        %1925 = vrot.lane.b32.xlu0 %v1918, 16
        %v1926 = vpop.permute.xlu0 %1925
        %1927 = vrot.lane.b32.xlu0 %v1920, 16
        %v1928 = vpop.permute.xlu0 %1927
        %v1929 = vsel %vm413, %v1922, %v1926
        %v1930 = vsel %vm413, %v1924, %v1928
        %v1931 = vsel %vm413, %v1926, %v1922
        %v1932 = vsel %vm413, %v1928, %v1924
        %v1933 = vpack.c.bf16 %v1932, %v1931
        %v1934 = vpack.c.bf16 %v1930, %v1929
        %1935 = vrot.lane.b32.xlu0 %v1858, 16
        %v1936 = vpop.permute.xlu0 %1935
        %1937 = vrot.lane.b32.xlu0 %v1860, 16
        %v1938 = vpop.permute.xlu0 %1937
        %1939 = vrot.lane.b32.xlu0 %v1859, 16
        %v1940 = vpop.permute.xlu0 %1939
        %1941 = vrot.lane.b32.xlu0 %v1861, 16
        %v1942 = vpop.permute.xlu0 %1941
        %v1943 = vsel %vm413, %v1936, %v1940
        %v1944 = vsel %vm413, %v1938, %v1942
        %v1945 = vsel %vm413, %v1940, %v1936
        %v1946 = vsel %vm413, %v1942, %v1938
        %v1947 = vpack.c.bf16 %v1946, %v1945
        %v1948 = vpack.c.bf16 %v1944, %v1943
        %1949 = vrot.lane.b32.xlu0 %v1889, 16
        %v1950 = vpop.permute.xlu0 %1949
        %1951 = vrot.lane.b32.xlu0 %v1891, 16
        %v1952 = vpop.permute.xlu0 %1951
        %1953 = vrot.lane.b32.xlu0 %v1890, 16
        %v1954 = vpop.permute.xlu0 %1953
        %1955 = vrot.lane.b32.xlu0 %v1892, 16
        %v1956 = vpop.permute.xlu0 %1955
        %v1957 = vsel %vm413, %v1950, %v1954
        %v1958 = vsel %vm413, %v1952, %v1956
        %v1959 = vsel %vm413, %v1954, %v1950
        %v1960 = vsel %vm413, %v1956, %v1952
        %v1961 = vpack.c.bf16 %v1960, %v1959
        %v1962 = vpack.c.bf16 %v1958, %v1957
        %v1963 = vpack.c.bf16 %v1919, %v1917
        %v1964 = vpack.c.bf16 %v1920, %v1918
        %v1965 = vpack.c.bf16 %v1860, %v1858
        %v1966 = vpack.c.bf16 %v1861, %v1859
        %v1967 = vpack.c.bf16 %v1891, %v1889
        %v1968 = vpack.c.bf16 %v1892, %v1890
        %1969 = vrot.lane.b32.xlu0 %v1917, 112
        %v1970 = vpop.permute.xlu0 %1969
        %1971 = vrot.lane.b32.xlu0 %v1919, 112
        %v1972 = vpop.permute.xlu0 %1971
        %1973 = vrot.lane.b32.xlu0 %v1918, 112
        %v1974 = vpop.permute.xlu0 %1973
        %1975 = vrot.lane.b32.xlu0 %v1920, 112
        %v1976 = vpop.permute.xlu0 %1975
        %v1977 = vsel %vm432, %v1970, %v1974
        %v1978 = vsel %vm432, %v1972, %v1976
        %v1979 = vsel %vm432, %v1974, %v1970
        %v1980 = vsel %vm432, %v1976, %v1972
        %v1981 = vpack.c.bf16 %v1978, %v1977
        %v1982 = vpack.c.bf16 %v1980, %v1979
        %1983 = vrot.lane.b32.xlu0 %v1858, 112
        %v1984 = vpop.permute.xlu0 %1983
        %1985 = vrot.lane.b32.xlu0 %v1860, 112
        %v1986 = vpop.permute.xlu0 %1985
        %1987 = vrot.lane.b32.xlu0 %v1859, 112
        %v1988 = vpop.permute.xlu0 %1987
        %1989 = vrot.lane.b32.xlu0 %v1861, 112
        %v1990 = vpop.permute.xlu0 %1989
        %v1991 = vsel %vm432, %v1984, %v1988
        %v1992 = vsel %vm432, %v1986, %v1990
        %v1993 = vsel %vm432, %v1988, %v1984
        %v1994 = vsel %vm432, %v1990, %v1986
        %v1995 = vpack.c.bf16 %v1992, %v1991
        %v1996 = vpack.c.bf16 %v1994, %v1993
        %1997 = vrot.lane.b32.xlu0 %v1889, 112
        %v1998 = vpop.permute.xlu0 %1997
        %1999 = vrot.lane.b32.xlu0 %v1891, 112
        %v2000 = vpop.permute.xlu0 %1999
        %2001 = vrot.lane.b32.xlu0 %v1890, 112
        %v2002 = vpop.permute.xlu0 %2001
        %2003 = vrot.lane.b32.xlu0 %v1892, 112
        %v2004 = vpop.permute.xlu0 %2003
        %v2005 = vsel %vm432, %v1998, %v2002
        %v2006 = vsel %vm432, %v2000, %v2004
        %v2007 = vsel %vm432, %v2002, %v1998
        %v2008 = vsel %vm432, %v2004, %v2000
        %v2009 = vpack.c.bf16 %v2006, %v2005
        %v2010 = vpack.c.bf16 %v2008, %v2007
        %2011 = vset.pattern.permute.xlu0 13
        %2012 = vperm.xlu0 %2011, %v363
        %v2013 = vpop.permute.xlu0 %2012
        %2015 = vset.pattern.permute.xlu0 13
        %2016 = vperm.xlu0 %2015, %v364
        %v2017 = vpop.permute.xlu0 %2016
        %v2021 = vunpack.c.l.b16 %v1863
        %v2022 = vunpack.c.h.b16 %v1863
        %v2023 = vunpack.c.l.b16 %v1864
        %v2024 = vunpack.c.h.b16 %v1864
        %v2025 = vpack.c.b16 %v2023, %v2021
        %v2026 = vpack.c.b16 %v2024, %v2022
        %v2029 = vsel %vm1151, %v2026, 0
        %2031 = vmatprep.subr.bf16.mxu0 %v1934
        %2032 = vmatpush1.bf16.msra.mxu0 %v1933
        %2033 = vmatprep.subr.bf16.mxu0 %v1948
        %2034 = vmatpush1.bf16.msra.mxu0 %v1947
        %2035 = vmatprep.subr.bf16.mxu0 %v1962
        %2036 = vmatpush1.bf16.msra.mxu0 %v1961
        %2037 = vmatprep.subr.bf16.mxu0 %v1964
        %2038 = vmatpush1.bf16.msra.mxu0 %v1963
        %2039 = vmatprep.subr.bf16.mxu0 %v1966
        %2040 = vmatpush1.bf16.msra.mxu0 %v1965
        %2041 = vmatprep.subr.bf16.mxu0 %v1968
        %2042 = vmatpush1.bf16.msra.mxu0 %v1967
        %2043 = vmatprep.subr.bf16.mxu0 %v1982
        %2044 = vmatpush1.bf16.msra.mxu0 %v1981
        %2045 = vmatprep.subr.bf16.mxu0 %v1996
        %2046 = vmatpush1.bf16.msra.mxu0 %v1995
        %2047 = vmatprep.subr.bf16.mxu0 %v2010
        %2048 = vmatpush1.bf16.msra.mxu0 %v2009
        %2049 = vmatprep.subr.bf16.mxu0 0
        %2050 = vmatpush1.bf16.msra.mxu0 0
        %2051 = vmatprep.subr.bf16.mxu0 0
        %2052 = vmatpush1.bf16.msra.mxu0 0
        %2053 = vmatprep.subr.bf16.mxu0 0
        %2054 = vmatpush1.bf16.msra.mxu0 0
        %2055 = vmatprep.subr.bf16.mxu0 0
        %2056 = vmatpush1.bf16.msra.mxu0 0
        %2057 = vmatprep.subr.bf16.mxu0 0
        %2058 = vmatpush1.bf16.msra.mxu0 0
        %2059 = vmatprep.subr.bf16.mxu0 0
        %2060 = vmatpush1.bf16.msra.mxu0 0
        %2061 = vmatprep.subr.bf16.mxu0 0
        %2062 = vmatpush1.bf16.msra.mxu0 0
        %2063 = vmatprep.mubr.bf16.mxu0 %v2029
        %2064 = vmatmul.mubr.bf16.gmra.mrb[0].mxu0 %v2025
        %v2065 = vpop.f32.mrb[0].mxu0
        %v2066 = vadd.f32 %v2013, %v2065
        %v2067 = vpop.f32.mrb[0].mxu0
        %v2068 = vadd.f32 %v2013, %v2067
        %v2069 = vpop.f32.mrb[0].mxu0
        %v2070 = vadd.f32 %v2017, %v2069
        %v2071 = vpop.f32.mrb[0].mxu0
        %v2072 = vadd.f32 %v2017, %v2071
        %2073 = vdwg.mxu0
        %v2074 = vmul.f32 %v2066, %v2066
        %v2075 = vmul.f32 %v2068, %v2068
        %v2076 = vmul.f32 %v2070, %v2070
        %v2077 = vmul.f32 %v2072, %v2072
        %2078 = vmatprep.subr.mxu0 0.0
        %2079 = vmatpush1.msra.mxu0 %v331
        %2080 = vmatprep.subr.mxu0 0.0
        %2081 = vmatpush1.msra.mxu0 %v332
        %2082 = vmatprep.subr.mxu0 0.0
        %2083 = vmatpush1.msra.mxu0 %v333
        %2084 = vmatprep.subr.mxu0 0.0
        %2085 = vmatpush1.msra.mxu0 %v334
        %2086 = vmatprep.subr.mxu0 0.0
        %2087 = vmatpush1.msra.mxu0 %v335
        %2088 = vmatprep.subr.mxu0 0.0
        %2089 = vmatpush1.msra.mxu0 %v336
        %2090 = vmatprep.subr.mxu0 0.0
        %2091 = vmatpush1.msra.mxu0 %v337
        %2092 = vmatprep.subr.mxu0 0.0
        %2093 = vmatpush1.msra.mxu0 %v338
        %2094 = vmatprep.subr.mxu0 0.0
        %2095 = vmatpush1.msra.mxu0 %v339
        %2096 = vmatprep.subr.mxu0 0.0
        %2097 = vmatpush1.msra.mxu0 %v340
        %2098 = vmatprep.subr.mxu0 0.0
        %2099 = vmatpush1.msra.mxu0 %v341
        %2100 = vmatprep.subr.mxu0 0.0
        %2101 = vmatpush1.msra.mxu0 %v342
        %2102 = vmatprep.subr.mxu0 0.0
        %2103 = vmatpush1.msra.mxu0 %v343
        %2104 = vmatprep.subr.mxu0 0.0
        %2105 = vmatpush1.msra.mxu0 %v344
        %2106 = vmatprep.subr.mxu0 0.0
        %2107 = vmatpush1.msra.mxu0 %v345
        %2108 = vmatprep.subr.mxu0 0.0
        %2109 = vmatpush1.msra.mxu0 %v346
        %2110 = vmatprep.subr.mxu0 0.0
        %2111 = vmatpush1.msra.mxu0 %v347
        %2112 = vmatprep.subr.mxu0 0.0
        %2113 = vmatpush1.msra.mxu0 %v348
        %2114 = vmatprep.subr.mxu0 0.0
        %2115 = vmatpush1.msra.mxu0 %v349
        %2116 = vmatprep.subr.mxu0 0.0
        %2117 = vmatpush1.msra.mxu0 %v350
        %2118 = vmatprep.subr.mxu0 0.0
        %2119 = vmatpush1.msra.mxu0 %v351
        %2120 = vmatprep.subr.mxu0 0.0
        %2121 = vmatpush1.msra.mxu0 %v352
        %2122 = vmatprep.subr.mxu0 0.0
        %2123 = vmatpush1.msra.mxu0 %v353
        %2124 = vmatprep.subr.mxu0 0.0
        %2125 = vmatpush1.msra.mxu0 %v354
        %2126 = vmatprep.subr.mxu0 0.0
        %2127 = vmatpush1.msra.mxu0 %v355
        %2128 = vmatprep.subr.mxu0 0.0
        %2129 = vmatpush1.msra.mxu0 %v356
        %2130 = vmatprep.subr.mxu0 0.0
        %2131 = vmatpush1.msra.mxu0 %v357
        %2132 = vmatprep.subr.mxu0 0.0
        %2133 = vmatpush1.msra.mxu0 %v358
        %2134 = vmatprep.subr.mxu0 0.0
        %2135 = vmatpush1.msra.mxu0 %v359
        %2136 = vmatprep.subr.mxu0 0.0
        %2137 = vmatpush1.msra.mxu0 %v360
        %2138 = vmatprep.subr.mxu0 0.0
        %2139 = vmatpush1.msra.mxu0 %v361
        %2140 = vmatprep.subr.mxu0 0.0
        %2141 = vmatpush1.msra.mxu0 %v362
        %2142 = vmatprep.mubr.f32.mxu0 %v2068
        %2143 = vmatmul.mubr.f32.gmra.mrb[0].mxu0 %v2066
        %v2144 = vpop.f32.mrb[0].mxu0
        %v2145 = vadd.f32 0.0, %v2144
        %v2146 = vpop.f32.mrb[0].mxu0
        %2147 = vmatprep.mubr.f32.mxu0 %v2072
        %2148 = vmatmul.mubr.f32.gmra.mrb[0].mxu0 %v2070
        %v2149 = vpop.f32.mrb[0].mxu0
        %v2150 = vadd.f32 0.0, %v2149
        %v2151 = vpop.f32.mrb[0].mxu0
        %2152 = vmatprep.mubr.f32.mxu0 %v2075
        %2153 = vmatmul.mubr.f32.gmra.mrb[0].mxu0 %v2074
        %v2154 = vpop.f32.mrb[0].mxu0
        %v2155 = vadd.f32 0.0, %v2154
        %v2156 = vpop.f32.mrb[0].mxu0
        %2157 = vmatprep.mubr.f32.mxu0 %v2077
        %2158 = vmatmul.mubr.f32.gmra.mrb[0].mxu0 %v2076
        %v2159 = vpop.f32.mrb[0].mxu0
        %v2160 = vadd.f32 0.0, %v2159
        %v2161 = vpop.f32.mrb[0].mxu0
        %2162 = vdwg.mxu0
        %v2163 = vsel %vm329, %v2145, 0.0
        %v2164 = vsel %vm330, %v2150, 0.0
        %v2165 = vsel %vm632, %v2163, 0.0
        %v2166 = vsel %vm632, %v2164, 0.0
        %v2167 = vadd.f32 %v2165, %v2166
        %v2168 = vrot.slane %v2167, 4
        %v2169 = vadd.f32 %v2167, %v2168
        %v2170 = vrot.slane %v2169, 2
        %v2171 = vadd.f32 %v2169, %v2170
        %v2172 = vrot.slane %v2171, 1
        %v2173 = vadd.f32 %v2171, %v2172
        %v2174 = vsel %vm329, %v2155, 0.0
        %v2175 = vsel %vm330, %v2160, 0.0
        %v2176 = vsel %vm632, %v2174, 0.0
        %v2177 = vsel %vm632, %v2175, 0.0
        %v2178 = vadd.f32 %v2176, %v2177
        %v2179 = vrot.slane %v2178, 4
        %v2180 = vadd.f32 %v2178, %v2179
        %v2181 = vrot.slane %v2180, 2
        %v2182 = vadd.f32 %v2180, %v2181
        %v2183 = vrot.slane %v2182, 1
        %v2184 = vadd.f32 %v2182, %v2183
        %v2185 = vsel %vm632, %v2145, 0.0
        %v2186 = vsel %vm632, %v2150, 0.0
        %v2187 = vadd.f32 %v2185, %v2186
        %v2188 = vrot.slane %v2187, 4
        %v2189 = vadd.f32 %v2187, %v2188
        %v2190 = vrot.slane %v2189, 2
        %v2191 = vadd.f32 %v2189, %v2190
        %v2192 = vrot.slane %v2191, 1
        %v2193 = vadd.f32 %v2191, %v2192
        %v2194 = vsub.f32 %v2193, %v2173
        %v2195 = vsel %vm632, %v2155, 0.0
        %v2196 = vsel %vm632, %v2160, 0.0
        %v2197 = vadd.f32 %v2195, %v2196
        %v2198 = vrot.slane %v2197, 4
        %v2199 = vadd.f32 %v2197, %v2198
        %v2200 = vrot.slane %v2199, 2
        %v2201 = vadd.f32 %v2199, %v2200
        %v2202 = vrot.slane %v2201, 1
        %v2203 = vadd.f32 %v2201, %v2202
        %v2204 = vsub.f32 %v2203, %v2184
        %v2205 = vmul.f32 %v2173, 0.00055803574
        %v2206 = vmul.f32 %v2194, 0.00055803574
        %v2207 = vmul.f32 %v2184, 0.00055803574
        %v2208 = vmul.f32 %v2205, %v2205
        %v2209 = vsub.f32 %v2207, %v2208
        %v2210 = vmax.f32 %v2209, 0.0
        %v2211 = vadd.f32 %v2210, 1e-05
        %v2212 = vrsqrt.pop %v2211
        %v2213 = vmul.f32 %v2204, 0.00055803574
        %v2214 = vmul.f32 %v2206, %v2206
        %v2215 = vsub.f32 %v2213, %v2214
        %v2216 = vmax.f32 %v2215, 0.0
        %v2217 = vadd.f32 %v2216, 1e-05
        %v2218 = vrsqrt.pop %v2217
        %v2219 = vsel %vm329, %v2205, %v2206
        %v2220 = vsel %vm330, %v2205, %v2206
        %v2221 = vsel %vm329, %v2212, %v2218
        %v2222 = vsel %vm330, %v2212, %v2218
        %2223 = vrot.lane.b32.xlu0 %v363, 124
        %v2224 = vpop.permute.xlu0 %2223
        %2225 = vrot.lane.b32.xlu0 %v364, 124
        %v2226 = vpop.permute.xlu0 %2225
        %v2229 = vmul.f32 %v2221, %v2224
        %v2230 = vmul.f32 %v2222, %v2226
        %v2231 = vmul.f32 %v2219, %v2229
        %v2232 = vmul.f32 %v2220, %v2230
        %2235 = vrot.lane.b32.xlu0 %v2231, 9
        %v2236 = vpop.permute.xlu0 %2235
        %2237 = vrot.lane.b32.xlu0 %v2232, 9
        %v2238 = vpop.permute.xlu0 %2237
        %v2241 = vsub.f32 %v363, %v2236
        %v2242 = vsub.f32 %v364, %v2238
        %2244 = vset.pattern.permute.xlu0 0
        %2245 = vperm.xlu0 %2244, %v2229
        %v2246 = vpop.permute.xlu0 %2245
        %2249 = vset.pattern.permute.xlu0 0
        %2250 = vperm.xlu0 %2249, %v2230
        %v2251 = vpop.permute.xlu0 %2250
        %v2253 = vmul.f32 %v2066, %v2246
        %v2254 = vmul.f32 %v2068, %v2246
        %v2255 = vmul.f32 %v2070, %v2251
        %v2256 = vmul.f32 %v2072, %v2251
        %2258 = vset.pattern.permute.xlu0 9
        %2259 = vperm.xlu0 %2258, %v2241
        %v2260 = vpop.permute.xlu0 %2259
        %2263 = vset.pattern.permute.xlu0 9
        %2264 = vperm.xlu0 %2263, %v2242
        %v2265 = vpop.permute.xlu0 %2264
        %v2267 = vadd.f32 %v2253, %v2260
        %v2268 = vadd.f32 %v2254, %v2260
        %v2269 = vadd.f32 %v2255, %v2265
        %v2270 = vadd.f32 %v2256, %v2265
        %v2271 = vmul.f32 %v2267, 0.5
        %v2272 = vmul.f32 %v2268, 0.5
        %v2273 = vmul.f32 %v2269, 0.5
        %v2274 = vmul.f32 %v2270, 0.5
        %v2275 = vtanh.pop %v2271
        %v2276 = vtanh.pop %v2272
        %v2277 = vtanh.pop %v2273
        %v2278 = vtanh.pop %v2274
        %v2279 = vadd.f32 %v2275, 1.0
        %v2280 = vadd.f32 %v2276, 1.0
        %v2281 = vadd.f32 %v2277, 1.0
        %v2282 = vadd.f32 %v2278, 1.0
        %v2283 = vmul.f32 %v2279, 0.5
        %v2284 = vmul.f32 %v2280, 0.5
        %v2285 = vmul.f32 %v2281, 0.5
        %v2286 = vmul.f32 %v2282, 0.5
        %v2287 = vmul.f32 %v2267, %v2283
        %v2288 = vmul.f32 %v2268, %v2284
        %v2289 = vmul.f32 %v2269, %v2285
        %v2290 = vmul.f32 %v2270, %v2286
        %s2291 = scalar_lea.vmem %s3, 48
        %v2292 = vld [vmem:[%s2291] sm:$0xff]
        %v2293 = vld [vmem:[%s2291 + $0x8] sm:$0xff]
        %2294 = vrot.lane.b32.xlu0 %v2287, 15
        %v2295 = vpop.permute.xlu0 %2294
        %2296 = vrot.lane.b32.xlu0 %v2289, 15
        %v2297 = vpop.permute.xlu0 %2296
        %2298 = vrot.lane.b32.xlu0 %v2288, 15
        %v2299 = vpop.permute.xlu0 %2298
        %2300 = vrot.lane.b32.xlu0 %v2290, 15
        %v2301 = vpop.permute.xlu0 %2300
        %v2302 = vsel %vm373, %v2295, %v2299
        %v2303 = vsel %vm373, %v2297, %v2301
        %v2304 = vsel %vm373, %v2299, %v2295
        %v2305 = vsel %vm373, %v2301, %v2297
        %2306 = vrot.lane.b32.xlu0 %v2287, 127
        %v2307 = vpop.permute.xlu0 %2306
        %2308 = vrot.lane.b32.xlu0 %v2289, 127
        %v2309 = vpop.permute.xlu0 %2308
        %2310 = vrot.lane.b32.xlu0 %v2288, 127
        %v2311 = vpop.permute.xlu0 %2310
        %2312 = vrot.lane.b32.xlu0 %v2290, 127
        %v2313 = vpop.permute.xlu0 %2312
        %v2314 = vsel %vm380, %v2307, %v2311
        %v2315 = vsel %vm380, %v2309, %v2313
        %v2316 = vsel %vm380, %v2311, %v2307
        %v2317 = vsel %vm380, %v2313, %v2309
        %v2318 = vsel %vm385, %v2314, %v2304
        %v2319 = vsel %vm386, %v2316, %v2302
        %v2320 = vsel %vm385, %v2315, %v2305
        %v2321 = vsel %vm386, %v2317, %v2303
        %2322 = vrot.lane.b32.xlu0 %v2287, 1
        %v2323 = vpop.permute.xlu0 %2322
        %2324 = vrot.lane.b32.xlu0 %v2289, 1
        %v2325 = vpop.permute.xlu0 %2324
        %2326 = vrot.lane.b32.xlu0 %v2288, 1
        %v2327 = vpop.permute.xlu0 %2326
        %2328 = vrot.lane.b32.xlu0 %v2290, 1
        %v2329 = vpop.permute.xlu0 %2328
        %v2330 = vsel %vm393, %v2323, %v2327
        %v2331 = vsel %vm393, %v2325, %v2329
        %v2332 = vsel %vm393, %v2327, %v2323
        %v2333 = vsel %vm393, %v2329, %v2325
        %2334 = vrot.lane.b32.xlu0 %v2287, 113
        %v2335 = vpop.permute.xlu0 %2334
        %2336 = vrot.lane.b32.xlu0 %v2289, 113
        %v2337 = vpop.permute.xlu0 %2336
        %2338 = vrot.lane.b32.xlu0 %v2288, 113
        %v2339 = vpop.permute.xlu0 %2338
        %2340 = vrot.lane.b32.xlu0 %v2290, 113
        %v2341 = vpop.permute.xlu0 %2340
        %v2342 = vsel %vm400, %v2335, %v2339
        %v2343 = vsel %vm400, %v2337, %v2341
        %v2344 = vsel %vm400, %v2339, %v2335
        %v2345 = vsel %vm400, %v2341, %v2337
        %v2346 = vsel %vm405, %v2342, %v2332
        %v2347 = vsel %vm406, %v2344, %v2330
        %v2348 = vsel %vm405, %v2343, %v2333
        %v2349 = vsel %vm406, %v2345, %v2331
        %2350 = vrot.lane.b32.xlu0 %v2346, 16
        %v2351 = vpop.permute.xlu0 %2350
        %2352 = vrot.lane.b32.xlu0 %v2348, 16
        %v2353 = vpop.permute.xlu0 %2352
        %2354 = vrot.lane.b32.xlu0 %v2347, 16
        %v2355 = vpop.permute.xlu0 %2354
        %2356 = vrot.lane.b32.xlu0 %v2349, 16
        %v2357 = vpop.permute.xlu0 %2356
        %v2358 = vsel %vm413, %v2351, %v2355
        %v2359 = vsel %vm413, %v2353, %v2357
        %v2360 = vsel %vm413, %v2355, %v2351
        %v2361 = vsel %vm413, %v2357, %v2353
        %v2362 = vpack.c.bf16 %v2361, %v2360
        %v2363 = vpack.c.bf16 %v2359, %v2358
        %2364 = vrot.lane.b32.xlu0 %v2287, 16
        %v2365 = vpop.permute.xlu0 %2364
        %2366 = vrot.lane.b32.xlu0 %v2289, 16
        %v2367 = vpop.permute.xlu0 %2366
        %2368 = vrot.lane.b32.xlu0 %v2288, 16
        %v2369 = vpop.permute.xlu0 %2368
        %2370 = vrot.lane.b32.xlu0 %v2290, 16
        %v2371 = vpop.permute.xlu0 %2370
        %v2372 = vsel %vm413, %v2365, %v2369
        %v2373 = vsel %vm413, %v2367, %v2371
        %v2374 = vsel %vm413, %v2369, %v2365
        %v2375 = vsel %vm413, %v2371, %v2367
        %v2376 = vpack.c.bf16 %v2375, %v2374
        %v2377 = vpack.c.bf16 %v2373, %v2372
        %2378 = vrot.lane.b32.xlu0 %v2318, 16
        %v2379 = vpop.permute.xlu0 %2378
        %2380 = vrot.lane.b32.xlu0 %v2320, 16
        %v2381 = vpop.permute.xlu0 %2380
        %2382 = vrot.lane.b32.xlu0 %v2319, 16
        %v2383 = vpop.permute.xlu0 %2382
        %2384 = vrot.lane.b32.xlu0 %v2321, 16
        %v2385 = vpop.permute.xlu0 %2384
        %v2386 = vsel %vm413, %v2379, %v2383
        %v2387 = vsel %vm413, %v2381, %v2385
        %v2388 = vsel %vm413, %v2383, %v2379
        %v2389 = vsel %vm413, %v2385, %v2381
        %v2390 = vpack.c.bf16 %v2389, %v2388
        %v2391 = vpack.c.bf16 %v2387, %v2386
        %v2392 = vpack.c.bf16 %v2348, %v2346
        %v2393 = vpack.c.bf16 %v2349, %v2347
        %v2394 = vpack.c.bf16 %v2289, %v2287
        %v2395 = vpack.c.bf16 %v2290, %v2288
        %v2396 = vpack.c.bf16 %v2320, %v2318
        %v2397 = vpack.c.bf16 %v2321, %v2319
        %2398 = vrot.lane.b32.xlu0 %v2346, 112
        %v2399 = vpop.permute.xlu0 %2398
        %2400 = vrot.lane.b32.xlu0 %v2348, 112
        %v2401 = vpop.permute.xlu0 %2400
        %2402 = vrot.lane.b32.xlu0 %v2347, 112
        %v2403 = vpop.permute.xlu0 %2402
        %2404 = vrot.lane.b32.xlu0 %v2349, 112
        %v2405 = vpop.permute.xlu0 %2404
        %v2406 = vsel %vm432, %v2399, %v2403
        %v2407 = vsel %vm432, %v2401, %v2405
        %v2408 = vsel %vm432, %v2403, %v2399
        %v2409 = vsel %vm432, %v2405, %v2401
        %v2410 = vpack.c.bf16 %v2407, %v2406
        %v2411 = vpack.c.bf16 %v2409, %v2408
        %2412 = vrot.lane.b32.xlu0 %v2287, 112
        %v2413 = vpop.permute.xlu0 %2412
        %2414 = vrot.lane.b32.xlu0 %v2289, 112
        %v2415 = vpop.permute.xlu0 %2414
        %2416 = vrot.lane.b32.xlu0 %v2288, 112
        %v2417 = vpop.permute.xlu0 %2416
        %2418 = vrot.lane.b32.xlu0 %v2290, 112
        %v2419 = vpop.permute.xlu0 %2418
        %v2420 = vsel %vm432, %v2413, %v2417
        %v2421 = vsel %vm432, %v2415, %v2419
        %v2422 = vsel %vm432, %v2417, %v2413
        %v2423 = vsel %vm432, %v2419, %v2415
        %v2424 = vpack.c.bf16 %v2421, %v2420
        %v2425 = vpack.c.bf16 %v2423, %v2422
        %2426 = vrot.lane.b32.xlu0 %v2318, 112
        %v2427 = vpop.permute.xlu0 %2426
        %2428 = vrot.lane.b32.xlu0 %v2320, 112
        %v2429 = vpop.permute.xlu0 %2428
        %2430 = vrot.lane.b32.xlu0 %v2319, 112
        %v2431 = vpop.permute.xlu0 %2430
        %2432 = vrot.lane.b32.xlu0 %v2321, 112
        %v2433 = vpop.permute.xlu0 %2432
        %v2434 = vsel %vm432, %v2427, %v2431
        %v2435 = vsel %vm432, %v2429, %v2433
        %v2436 = vsel %vm432, %v2431, %v2427
        %v2437 = vsel %vm432, %v2433, %v2429
        %v2438 = vpack.c.bf16 %v2435, %v2434
        %v2439 = vpack.c.bf16 %v2437, %v2436
        %2440 = vset.pattern.permute.xlu0 14
        %2441 = vperm.xlu0 %2440, %v363
        %v2442 = vpop.permute.xlu0 %2441
        %2444 = vset.pattern.permute.xlu0 14
        %2445 = vperm.xlu0 %2444, %v364
        %v2446 = vpop.permute.xlu0 %2445
        %v2450 = vunpack.c.l.b16 %v2292
        %v2451 = vunpack.c.h.b16 %v2292
        %v2452 = vunpack.c.l.b16 %v2293
        %v2453 = vunpack.c.h.b16 %v2293
        %v2454 = vpack.c.b16 %v2452, %v2450
        %v2455 = vpack.c.b16 %v2453, %v2451
        %v2458 = vsel %vm1151, %v2455, 0
        %2460 = vmatprep.subr.bf16.mxu0 %v2363
        %2461 = vmatpush1.bf16.msra.mxu0 %v2362
        %2462 = vmatprep.subr.bf16.mxu0 %v2377
        %2463 = vmatpush1.bf16.msra.mxu0 %v2376
        %2464 = vmatprep.subr.bf16.mxu0 %v2391
        %2465 = vmatpush1.bf16.msra.mxu0 %v2390
        %2466 = vmatprep.subr.bf16.mxu0 %v2393
        %2467 = vmatpush1.bf16.msra.mxu0 %v2392
        %2468 = vmatprep.subr.bf16.mxu0 %v2395
        %2469 = vmatpush1.bf16.msra.mxu0 %v2394
        %2470 = vmatprep.subr.bf16.mxu0 %v2397
        %2471 = vmatpush1.bf16.msra.mxu0 %v2396
        %2472 = vmatprep.subr.bf16.mxu0 %v2411
        %2473 = vmatpush1.bf16.msra.mxu0 %v2410
        %2474 = vmatprep.subr.bf16.mxu0 %v2425
        %2475 = vmatpush1.bf16.msra.mxu0 %v2424
        %2476 = vmatprep.subr.bf16.mxu0 %v2439
        %2477 = vmatpush1.bf16.msra.mxu0 %v2438
        %2478 = vmatprep.subr.bf16.mxu0 0
        %2479 = vmatpush1.bf16.msra.mxu0 0
        %2480 = vmatprep.subr.bf16.mxu0 0
        %2481 = vmatpush1.bf16.msra.mxu0 0
        %2482 = vmatprep.subr.bf16.mxu0 0
        %2483 = vmatpush1.bf16.msra.mxu0 0
        %2484 = vmatprep.subr.bf16.mxu0 0
        %2485 = vmatpush1.bf16.msra.mxu0 0
        %2486 = vmatprep.subr.bf16.mxu0 0
        %2487 = vmatpush1.bf16.msra.mxu0 0
        %2488 = vmatprep.subr.bf16.mxu0 0
        %2489 = vmatpush1.bf16.msra.mxu0 0
        %2490 = vmatprep.subr.bf16.mxu0 0
        %2491 = vmatpush1.bf16.msra.mxu0 0
        %2492 = vmatprep.mubr.bf16.mxu0 %v2458
        %2493 = vmatmul.mubr.bf16.gmra.mrb[0].mxu0 %v2454
        %v2494 = vpop.f32.mrb[0].mxu0
        %v2495 = vadd.f32 %v2442, %v2494
        %v2496 = vpop.f32.mrb[0].mxu0
        %v2497 = vadd.f32 %v2442, %v2496
        %v2498 = vpop.f32.mrb[0].mxu0
        %v2499 = vadd.f32 %v2446, %v2498
        %v2500 = vpop.f32.mrb[0].mxu0
        %v2501 = vadd.f32 %v2446, %v2500
        %2502 = vdwg.mxu0
        %s2503 = sld [smem:[#allocation2 + $0x80]]
        %v2504 = vstv %s2503
        %v2505 = vmul.f32 %v2504, %v2495
        %v2506 = vmul.f32 %v2504, %v2497
        %v2507 = vmul.f32 %v2504, %v2499
        %v2508 = vmul.f32 %v2504, %v2501
        %v2509 = vadd.f32 %v1641, %v2505
        %v2510 = vadd.f32 %v1642, %v2506
        %v2511 = vadd.f32 %v1643, %v2507
        %v2512 = vadd.f32 %v1644, %v2508
        %v2513 = vmul.f32 %v2509, 0.3
        %v2514 = vmul.f32 %v2510, 0.3
        %v2515 = vmul.f32 %v2511, 0.3
        %v2516 = vmul.f32 %v2512, 0.3
        %v2517 = vadd.f32 %v2513, %v1641
        %v2518 = vadd.f32 %v2514, %v1642
        %v2519 = vadd.f32 %v2515, %v1643
        %v2520 = vadd.f32 %v2516, %v1644
        %2521 = vmatprep.subr.mxu0 0.0
        %2522 = vmatpush1.msra.mxu0 %v331
        %2523 = vmatprep.subr.mxu0 0.0
        %2524 = vmatpush1.msra.mxu0 %v332
        %2525 = vmatprep.subr.mxu0 0.0
        %2526 = vmatpush1.msra.mxu0 %v333
        %2527 = vmatprep.subr.mxu0 0.0
        %2528 = vmatpush1.msra.mxu0 %v334
        %2529 = vmatprep.subr.mxu0 0.0
        %2530 = vmatpush1.msra.mxu0 %v335
        %2531 = vmatprep.subr.mxu0 0.0
        %2532 = vmatpush1.msra.mxu0 %v336
        %2533 = vmatprep.subr.mxu0 0.0
        %2534 = vmatpush1.msra.mxu0 %v337
        %2535 = vmatprep.subr.mxu0 0.0
        %2536 = vmatpush1.msra.mxu0 %v338
        %2537 = vmatprep.subr.mxu0 0.0
        %2538 = vmatpush1.msra.mxu0 %v339
        %2539 = vmatprep.subr.mxu0 0.0
        %2540 = vmatpush1.msra.mxu0 %v340
        %2541 = vmatprep.subr.mxu0 0.0
        %2542 = vmatpush1.msra.mxu0 %v341
        %2543 = vmatprep.subr.mxu0 0.0
        %2544 = vmatpush1.msra.mxu0 %v342
        %2545 = vmatprep.subr.mxu0 0.0
        %2546 = vmatpush1.msra.mxu0 %v343
        %2547 = vmatprep.subr.mxu0 0.0
        %2548 = vmatpush1.msra.mxu0 %v344
        %2549 = vmatprep.subr.mxu0 0.0
        %2550 = vmatpush1.msra.mxu0 %v345
        %2551 = vmatprep.subr.mxu0 0.0
        %2552 = vmatpush1.msra.mxu0 %v346
        %2553 = vmatprep.subr.mxu0 0.0
        %2554 = vmatpush1.msra.mxu0 %v347
        %2555 = vmatprep.subr.mxu0 0.0
        %2556 = vmatpush1.msra.mxu0 %v348
        %2557 = vmatprep.subr.mxu0 0.0
        %2558 = vmatpush1.msra.mxu0 %v349
        %2559 = vmatprep.subr.mxu0 0.0
        %2560 = vmatpush1.msra.mxu0 %v350
        %2561 = vmatprep.subr.mxu0 0.0
        %2562 = vmatpush1.msra.mxu0 %v351
        %2563 = vmatprep.subr.mxu0 0.0
        %2564 = vmatpush1.msra.mxu0 %v352
        %2565 = vmatprep.subr.mxu0 0.0
        %2566 = vmatpush1.msra.mxu0 %v353
        %2567 = vmatprep.subr.mxu0 0.0
        %2568 = vmatpush1.msra.mxu0 %v354
        %2569 = vmatprep.subr.mxu0 0.0
        %2570 = vmatpush1.msra.mxu0 %v355
        %2571 = vmatprep.subr.mxu0 0.0
        %2572 = vmatpush1.msra.mxu0 %v356
        %2573 = vmatprep.subr.mxu0 0.0
        %2574 = vmatpush1.msra.mxu0 %v357
        %2575 = vmatprep.subr.mxu0 0.0
        %2576 = vmatpush1.msra.mxu0 %v358
        %2577 = vmatprep.subr.mxu0 0.0
        %2578 = vmatpush1.msra.mxu0 %v359
        %2579 = vmatprep.subr.mxu0 0.0
        %2580 = vmatpush1.msra.mxu0 %v360
        %2581 = vmatprep.subr.mxu0 0.0
        %2582 = vmatpush1.msra.mxu0 %v361
        %2583 = vmatprep.subr.mxu0 0.0
        %2584 = vmatpush1.msra.mxu0 %v362
        %2585 = vmatprep.mubr.f32.mxu0 %v2518
        %2586 = vmatmul.mubr.f32.gmra.mrb[0].mxu0 %v2517
        %v2587 = vpop.f32.mrb[0].mxu0
        %v2588 = vadd.f32 0.0, %v2587
        %v2589 = vpop.f32.mrb[0].mxu0
        %2590 = vmatprep.mubr.f32.mxu0 %v2520
        %2591 = vmatmul.mubr.f32.gmra.mrb[0].mxu0 %v2519
        %v2592 = vpop.f32.mrb[0].mxu0
        %v2593 = vadd.f32 0.0, %v2592
        %v2594 = vpop.f32.mrb[0].mxu0
        %2595 = vdwg.mxu0
        %v2596 = vmul.f32 %v2588, 0.00390625
        %v2597 = vmul.f32 %v2593, 0.00390625
        %v2598 = vld [vmem:[%s4] sm:$0xff]
        %v2599 = vld [vmem:[%s4 + $0x8] sm:$0xff]
        %s2600 = scalar_lea.vmem %s4, 16
        %v2601 = vld [vmem:[%s2600] sm:$0xff]
        %v2602 = vld [vmem:[%s2600 + $0x8] sm:$0xff]
        %s2603 = scalar_lea.vmem %s4, 32
        %v2604 = vld [vmem:[%s2603] sm:$0xff]
        %v2605 = vld [vmem:[%s2603 + $0x8] sm:$0xff]
        %2606 = vrot.lane.b32.xlu0 %v363, 112
        %v2607 = vpop.permute.xlu0 %2606
        %2608 = vrot.lane.b32.xlu0 %v364, 112
        %v2609 = vpop.permute.xlu0 %2608
        %v2613 = vsel %vm1151, %v2601, 0
        %v2616 = vsel %vm1151, %v2602, 0
        %2618 = vmatprep.subr.mxu0 0.0
        %2619 = vmatpush1.msra.mxu0 %v2596
        %2620 = vmatprep.subr.mxu0 0.0
        %2621 = vmatpush1.msra.mxu0 %v2597
        %2622 = vmatprep.subr.mxu0 0.0
        %2623 = vmatpush1.msra.mxu0 0.0
        %2624 = vmatprep.subr.mxu0 0.0
        %2625 = vmatpush1.msra.mxu0 0.0
        %2626 = vmatprep.subr.mxu0 0.0
        %2627 = vmatpush1.msra.mxu0 0.0
        %2628 = vmatprep.subr.mxu0 0.0
        %2629 = vmatpush1.msra.mxu0 0.0
        %2630 = vmatprep.subr.mxu0 0.0
        %2631 = vmatpush1.msra.mxu0 0.0
        %2632 = vmatprep.subr.mxu0 0.0
        %2633 = vmatpush1.msra.mxu0 0.0
        %2634 = vmatprep.subr.mxu0 0.0
        %2635 = vmatpush1.msra.mxu0 0.0
        %2636 = vmatprep.subr.mxu0 0.0
        %2637 = vmatpush1.msra.mxu0 0.0
        %2638 = vmatprep.subr.mxu0 0.0
        %2639 = vmatpush1.msra.mxu0 0.0
        %2640 = vmatprep.subr.mxu0 0.0
        %2641 = vmatpush1.msra.mxu0 0.0
        %2642 = vmatprep.subr.mxu0 0.0
        %2643 = vmatpush1.msra.mxu0 0.0
        %2644 = vmatprep.subr.mxu0 0.0
        %2645 = vmatpush1.msra.mxu0 0.0
        %2646 = vmatprep.subr.mxu0 0.0
        %2647 = vmatpush1.msra.mxu0 0.0
        %2648 = vmatprep.subr.mxu0 0.0
        %2649 = vmatpush1.msra.mxu0 0.0
        %2650 = vmatprep.subr.mxu0 0.0
        %2651 = vmatpush1.msra.mxu0 0.0
        %2652 = vmatprep.subr.mxu0 0.0
        %2653 = vmatpush1.msra.mxu0 0.0
        %2654 = vmatprep.subr.mxu0 0.0
        %2655 = vmatpush1.msra.mxu0 0.0
        %2656 = vmatprep.subr.mxu0 0.0
        %2657 = vmatpush1.msra.mxu0 0.0
        %2658 = vmatprep.subr.mxu0 0.0
        %2659 = vmatpush1.msra.mxu0 0.0
        %2660 = vmatprep.subr.mxu0 0.0
        %2661 = vmatpush1.msra.mxu0 0.0
        %2662 = vmatprep.subr.mxu0 0.0
        %2663 = vmatpush1.msra.mxu0 0.0
        %2664 = vmatprep.subr.mxu0 0.0
        %2665 = vmatpush1.msra.mxu0 0.0
        %2666 = vmatprep.subr.mxu0 0.0
        %2667 = vmatpush1.msra.mxu0 0.0
        %2668 = vmatprep.subr.mxu0 0.0
        %2669 = vmatpush1.msra.mxu0 0.0
        %2670 = vmatprep.subr.mxu0 0.0
        %2671 = vmatpush1.msra.mxu0 0.0
        %2672 = vmatprep.subr.mxu0 0.0
        %2673 = vmatpush1.msra.mxu0 0.0
        %2674 = vmatprep.subr.mxu0 0.0
        %2675 = vmatpush1.msra.mxu0 0.0
        %2676 = vmatprep.subr.mxu0 0.0
        %2677 = vmatpush1.msra.mxu0 0.0
        %2678 = vmatprep.subr.mxu0 0.0
        %2679 = vmatpush1.msra.mxu0 0.0
        %2680 = vmatprep.subr.mxu0 0.0
        %2681 = vmatpush1.msra.mxu0 0.0
        %2682 = vmatprep.mubr.f32.mxu0 0.0
        %2683 = vmatmul.mubr.f32.gmra.mrb[0].mxu0 %v2613
        %v2684 = vpop.f32.mrb[0].mxu0
        %v2685 = vadd.f32 %v2607, %v2684
        %v2686 = vpop.f32.mrb[0].mxu0
        %2687 = vmatprep.mubr.f32.mxu0 0.0
        %2688 = vmatmul.mubr.f32.gmra.mrb[0].mxu0 %v2616
        %v2689 = vpop.f32.mrb[0].mxu0
        %v2690 = vadd.f32 %v2609, %v2689
        %v2691 = vpop.f32.mrb[0].mxu0
        %2692 = vdwg.mxu0
        %v2693 = vmax.f32 %v2685, 0.0
        %v2694 = vmax.f32 %v2690, 0.0
        %2695 = vrot.lane.b32.xlu0 %v363, 111
        %v2696 = vpop.permute.xlu0 %2695
        %2697 = vrot.lane.b32.xlu0 %v364, 111
        %v2698 = vpop.permute.xlu0 %2697
        %v2702 = vsel %vm1151, %v2604, 0
        %v2705 = vsel %vm1151, %v2605, 0
        %2707 = vmatprep.subr.mxu0 0.0
        %2708 = vmatpush1.msra.mxu0 %v2693
        %2709 = vmatprep.subr.mxu0 0.0
        %2710 = vmatpush1.msra.mxu0 %v2694
        %2711 = vmatprep.subr.mxu0 0.0
        %2712 = vmatpush1.msra.mxu0 0.0
        %2713 = vmatprep.subr.mxu0 0.0
        %2714 = vmatpush1.msra.mxu0 0.0
        %2715 = vmatprep.subr.mxu0 0.0
        %2716 = vmatpush1.msra.mxu0 0.0
        %2717 = vmatprep.subr.mxu0 0.0
        %2718 = vmatpush1.msra.mxu0 0.0
        %2719 = vmatprep.subr.mxu0 0.0
        %2720 = vmatpush1.msra.mxu0 0.0
        %2721 = vmatprep.subr.mxu0 0.0
        %2722 = vmatpush1.msra.mxu0 0.0
        %2723 = vmatprep.subr.mxu0 0.0
        %2724 = vmatpush1.msra.mxu0 0.0
        %2725 = vmatprep.subr.mxu0 0.0
        %2726 = vmatpush1.msra.mxu0 0.0
        %2727 = vmatprep.subr.mxu0 0.0
        %2728 = vmatpush1.msra.mxu0 0.0
        %2729 = vmatprep.subr.mxu0 0.0
        %2730 = vmatpush1.msra.mxu0 0.0
        %2731 = vmatprep.subr.mxu0 0.0
        %2732 = vmatpush1.msra.mxu0 0.0
        %2733 = vmatprep.subr.mxu0 0.0
        %2734 = vmatpush1.msra.mxu0 0.0
        %2735 = vmatprep.subr.mxu0 0.0
        %2736 = vmatpush1.msra.mxu0 0.0
        %2737 = vmatprep.subr.mxu0 0.0
        %2738 = vmatpush1.msra.mxu0 0.0
        %2739 = vmatprep.subr.mxu0 0.0
        %2740 = vmatpush1.msra.mxu0 0.0
        %2741 = vmatprep.subr.mxu0 0.0
        %2742 = vmatpush1.msra.mxu0 0.0
        %2743 = vmatprep.subr.mxu0 0.0
        %2744 = vmatpush1.msra.mxu0 0.0
        %2745 = vmatprep.subr.mxu0 0.0
        %2746 = vmatpush1.msra.mxu0 0.0
        %2747 = vmatprep.subr.mxu0 0.0
        %2748 = vmatpush1.msra.mxu0 0.0
        %2749 = vmatprep.subr.mxu0 0.0
        %2750 = vmatpush1.msra.mxu0 0.0
        %2751 = vmatprep.subr.mxu0 0.0
        %2752 = vmatpush1.msra.mxu0 0.0
        %2753 = vmatprep.subr.mxu0 0.0
        %2754 = vmatpush1.msra.mxu0 0.0
        %2755 = vmatprep.subr.mxu0 0.0
        %2756 = vmatpush1.msra.mxu0 0.0
        %2757 = vmatprep.subr.mxu0 0.0
        %2758 = vmatpush1.msra.mxu0 0.0
        %2759 = vmatprep.subr.mxu0 0.0
        %2760 = vmatpush1.msra.mxu0 0.0
        %2761 = vmatprep.subr.mxu0 0.0
        %2762 = vmatpush1.msra.mxu0 0.0
        %2763 = vmatprep.subr.mxu0 0.0
        %2764 = vmatpush1.msra.mxu0 0.0
        %2765 = vmatprep.subr.mxu0 0.0
        %2766 = vmatpush1.msra.mxu0 0.0
        %2767 = vmatprep.subr.mxu0 0.0
        %2768 = vmatpush1.msra.mxu0 0.0
        %2769 = vmatprep.subr.mxu0 0.0
        %2770 = vmatpush1.msra.mxu0 0.0
        %2771 = vmatprep.mubr.f32.mxu0 0.0
        %2772 = vmatmul.mubr.f32.gmra.mrb[0].mxu0 %v2702
        %v2773 = vpop.f32.mrb[0].mxu0
        %v2774 = vadd.f32 %v2696, %v2773
        %v2775 = vpop.f32.mrb[0].mxu0
        %2776 = vmatprep.mubr.f32.mxu0 0.0
        %2777 = vmatmul.mubr.f32.gmra.mrb[0].mxu0 %v2705
        %v2778 = vpop.f32.mrb[0].mxu0
        %v2779 = vadd.f32 %v2698, %v2778
        %v2780 = vpop.f32.mrb[0].mxu0
        %2781 = vdwg.mxu0
        %v2782 = vmul.f32 %v2774, 0.5
        %v2783 = vmul.f32 %v2779, 0.5
        %v2784 = vtanh.pop %v2782
        %v2785 = vtanh.pop %v2783
        %v2786 = vadd.f32 %v2784, 1.0
        %v2787 = vadd.f32 %v2785, 1.0
        %v2788 = vmul.f32 %v2786, 0.5
        %v2789 = vmul.f32 %v2787, 0.5
        %2791 = vset.pattern.permute.xlu0 0
        %2792 = vperm.xlu0 %2791, %v2788
        %v2793 = vpop.permute.xlu0 %2792
        %2796 = vset.pattern.permute.xlu0 0
        %2797 = vperm.xlu0 %2796, %v2789
        %v2798 = vpop.permute.xlu0 %2797
        %v2800 = vmul.f32 %v2517, %v2793
        %v2801 = vmul.f32 %v2518, %v2793
        %v2802 = vmul.f32 %v2519, %v2798
        %v2803 = vmul.f32 %v2520, %v2798
        %2804 = vset.pattern.permute.xlu0 15
        %2805 = vperm.xlu0 %2804, %v363
        %v2806 = vpop.permute.xlu0 %2805
        %2808 = vset.pattern.permute.xlu0 15
        %2809 = vperm.xlu0 %2808, %v364
        %v2810 = vpop.permute.xlu0 %2809
        %v2813 = vsel %vm1151, %v2598, 0
        %v2816 = vsel %vm1151, %v2599, 0
        %2818 = vmatprep.subr.mxu0 %v2801
        %2819 = vmatpush1.msra.mxu0 %v2800
        %2820 = vmatprep.subr.mxu0 %v2803
        %2821 = vmatpush1.msra.mxu0 %v2802
        %2822 = vmatprep.subr.mxu0 0.0
        %2823 = vmatpush1.msra.mxu0 0.0
        %2824 = vmatprep.subr.mxu0 0.0
        %2825 = vmatpush1.msra.mxu0 0.0
        %2826 = vmatprep.subr.mxu0 0.0
        %2827 = vmatpush1.msra.mxu0 0.0
        %2828 = vmatprep.subr.mxu0 0.0
        %2829 = vmatpush1.msra.mxu0 0.0
        %2830 = vmatprep.subr.mxu0 0.0
        %2831 = vmatpush1.msra.mxu0 0.0
        %2832 = vmatprep.subr.mxu0 0.0
        %2833 = vmatpush1.msra.mxu0 0.0
        %2834 = vmatprep.subr.mxu0 0.0
        %2835 = vmatpush1.msra.mxu0 0.0
        %2836 = vmatprep.subr.mxu0 0.0
        %2837 = vmatpush1.msra.mxu0 0.0
        %2838 = vmatprep.subr.mxu0 0.0
        %2839 = vmatpush1.msra.mxu0 0.0
        %2840 = vmatprep.subr.mxu0 0.0
        %2841 = vmatpush1.msra.mxu0 0.0
        %2842 = vmatprep.subr.mxu0 0.0
        %2843 = vmatpush1.msra.mxu0 0.0
        %2844 = vmatprep.subr.mxu0 0.0
        %2845 = vmatpush1.msra.mxu0 0.0
        %2846 = vmatprep.subr.mxu0 0.0
        %2847 = vmatpush1.msra.mxu0 0.0
        %2848 = vmatprep.subr.mxu0 0.0
        %2849 = vmatpush1.msra.mxu0 0.0
        %2850 = vmatprep.subr.mxu0 0.0
        %2851 = vmatpush1.msra.mxu0 0.0
        %2852 = vmatprep.subr.mxu0 0.0
        %2853 = vmatpush1.msra.mxu0 0.0
        %2854 = vmatprep.subr.mxu0 0.0
        %2855 = vmatpush1.msra.mxu0 0.0
        %2856 = vmatprep.subr.mxu0 0.0
        %2857 = vmatpush1.msra.mxu0 0.0
        %2858 = vmatprep.subr.mxu0 0.0
        %2859 = vmatpush1.msra.mxu0 0.0
        %2860 = vmatprep.subr.mxu0 0.0
        %2861 = vmatpush1.msra.mxu0 0.0
        %2862 = vmatprep.subr.mxu0 0.0
        %2863 = vmatpush1.msra.mxu0 0.0
        %2864 = vmatprep.subr.mxu0 0.0
        %2865 = vmatpush1.msra.mxu0 0.0
        %2866 = vmatprep.subr.mxu0 0.0
        %2867 = vmatpush1.msra.mxu0 0.0
        %2868 = vmatprep.subr.mxu0 0.0
        %2869 = vmatpush1.msra.mxu0 0.0
        %2870 = vmatprep.subr.mxu0 0.0
        %2871 = vmatpush1.msra.mxu0 0.0
        %2872 = vmatprep.subr.mxu0 0.0
        %2873 = vmatpush1.msra.mxu0 0.0
        %2874 = vmatprep.subr.mxu0 0.0
        %2875 = vmatpush1.msra.mxu0 0.0
        %2876 = vmatprep.subr.mxu0 0.0
        %2877 = vmatpush1.msra.mxu0 0.0
        %2878 = vmatprep.subr.mxu0 0.0
        %2879 = vmatpush1.msra.mxu0 0.0
        %2880 = vmatprep.subr.mxu0 0.0
        %2881 = vmatpush1.msra.mxu0 0.0
        %2882 = vmatprep.mubr.f32.mxu0 0.0
        %2883 = vmatmul.mubr.f32.gmra.mrb[0].mxu0 %v2813
        %v2884 = vpop.f32.mrb[0].mxu0
        %v2885 = vadd.f32 %v2806, %v2884
        %v2886 = vpop.f32.mrb[0].mxu0
        %v2887 = vadd.f32 %v2806, %v2886
        %2888 = vmatprep.mubr.f32.mxu0 0.0
        %2889 = vmatmul.mubr.f32.gmra.mrb[0].mxu0 %v2816
        %v2890 = vpop.f32.mrb[0].mxu0
        %v2891 = vadd.f32 %v2810, %v2890
        %v2892 = vpop.f32.mrb[0].mxu0
        %v2893 = vadd.f32 %v2810, %v2892
        %2894 = vdwg.mxu0
        %v2895 = vtanh.pop %v2885
        %v2896 = vtanh.pop %v2887
        %v2897 = vtanh.pop %v2891
        %v2898 = vtanh.pop %v2893
        %s2899 = sld [smem:[#allocation2 + $0x100]]
        %v2900 = vstv %s2899
        %v2901 = vmul.f32 %v2895, %v2900
        %v2902 = vmul.f32 %v2896, %v2900
        %v2903 = vmul.f32 %v2897, %v2900
        %v2904 = vmul.f32 %v2898, %v2900
        %2905 = vst [vmem:[%s286] sm:$0xff] %v2901
        %2906 = vst [vmem:[%s286 + $0x8] sm:$0xff] %v2902
        %2907 = vst [vmem:[%s286 + $0x10] sm:$0xff] %v2903
        %2908 = vst [vmem:[%s286 + $0x18] sm:$0xff] %v2904
        %s2909 = sand.u32 %s182, 1
        %s2910 = scalar_lea.sflag [#allocation3], %s2909
        %s2911 = sand.u32 %s182, 1
        %s2912 = smul.addr %s2911, 32
        %s2913 = scalar_lea.vmem [#allocation5], %s2912
        // Predicated region
        $region53: #{tpu_custom_call.1} parent=47 // pred_check
          %p2914 = pneg %p192
        $region54: #{tpu_custom_call.1} parent=47 // pred_check_branch
          %2916 = sbr.rel (%p2914) target = $region56
        $region55: #{tpu_custom_call.1} parent=47 // pred_region
          %s2917 = smul.u32 2, %s22
          %s2919 = ssub.s32 512, 512
          %2920 = vsyncadd %s2910, %s2919
          %s2921 = smul.addr %s2917, 128
          %s2922 = scalar_lea.hbm %s7, %s2921
          %s2923 = sshll.u32 %s2913, 4
          %s2924 = int_to_ptr.vmem [resolvable:$true] %s2923
          %2929 = dma.vmem_to_hbm [thread:$0]  %s2924, 512, %s2922, %s2910, 256, 512, 16
        $region56: #{tpu_custom_call.1} parent=47 // pred_fallthru
          _
      $region48: #{tpu_custom_call.1} parent=5 // pred_fallthru
        _
      %p2930 = scmp.le.s32.totalorder 2, %s17
      // Predicated region
      $region57: #{tpu_custom_call.1} parent=5 // pred_check
        %p2931 = pneg %p2930
      $region58: #{tpu_custom_call.1} parent=5 // pred_check_branch
        %2933 = sbr.rel (%p2931) target = $region60
      $region59: #{tpu_custom_call.1} parent=5 // pred_region
        %s2934 = ssub.s32 %s17, 2
        // Predicated region
        $region61: #{tpu_custom_call.1} parent=59 // pred_check
          %p2935 = pneg %p198
        $region62: #{tpu_custom_call.1} parent=59 // pred_check_branch
          %2937 = sbr.rel (%p2935) target = $region64
        $region63: #{tpu_custom_call.1} parent=59 // pred_region
          %s2938 = sand.u32 %s183, 1
          %s2939 = scalar_lea.sflag [#allocation3], %s2938
          %s2940 = sand.u32 %s183, 1
          %s2941 = smul.addr %s2940, 32
          %s2942 = scalar_lea.vmem [#allocation5], %s2941
          %2943 = dma.done %s2939, 512
        $region64: #{tpu_custom_call.1} parent=59 // pred_fallthru
          _
      $region60: #{tpu_custom_call.1} parent=5 // pred_fallthru
        _
    $region6: #{tpu_custom_call.1} parent=1 // loop_footer
      %s21 = sadd.s32 1, %s17
    $region7: #{tpu_custom_call.1} parent=1 // loop_footer_branch
      %16 = sbr.rel target = $region3
    $region8: #{tpu_custom_call.1} parent=1 // loop_exit
      _
    %2944 = vsyncpa [#allocation3], 1
    %s2945 = scalar_lea.sflag [#allocation3], 1
    %2946 = vsyncpa %s2945, 1
    %2947 = vsyncpa [#allocation4], 1
    %s2948 = scalar_lea.sflag [#allocation4], 1
    %2949 = vsyncpa %s2948, 1

</llo_original>
